<compile_context>
chip_gen: v7x
topology: tpu7x:2x2x1
jax: 0.10.0
libtpu: 0.0.40
codegen_flags: <defaults>
</compile_context>

<pallas_src>
import functools

import numpy as np
import jax
import jax.numpy as jnp
from jax import lax
from jax.experimental import pallas as pl
from jax.experimental.pallas import tpu as pltpu

BN_EPS = 1e-5


# ------------------------------------------------------------------------------- kernel
def _module_kernel(x_ref, w_ref, shift2_ref, o_ref, *scratch,
                   n_shifts, wu, m_eff, cout, acc_in_scratch):
    """One EmbedNet module: 3x3 conv + BN(eval) + ReLU + 2x2 max-pool (fused).

    x_ref:      [M_blk, K]              parity-packed (layers 2-4) or window-gathered
                                        (layer 1) activation rows for this batch tile
    w_ref:      [n_shifts, K, 4*Cout]   combined (taps x pool-offsets x BN-scale) weights
    shift2_ref: [1, 2*Cout]             folded BN shift (+ conv bias), tiled x2
    o_ref:      [m_eff, 2*Cout]         128-lane-dense output: pool max over the row
                                        offset done here, column offset in the wrapper
    scratch:    optional [m_eff, 4*Cout] f32 accumulator (large layers only)
    """
    shifts = (0, 1, wu, wu + 1)   # row offsets of the (dH, dW) packed 2x2 window

    def window(s):
        return x_ref[pl.ds(shifts[s], m_eff), :]

    if acc_in_scratch:
        acc_ref = scratch[0]
        acc_ref[...] = jnp.dot(window(0), w_ref[0], preferred_element_type=jnp.float32)
        for s in range(1, n_shifts):
            acc_ref[...] += jnp.dot(window(s), w_ref[s],
                                    preferred_element_type=jnp.float32)
        z = acc_ref[...]
    else:
        z = jnp.dot(window(0), w_ref[0], preferred_element_type=jnp.float32)
        for s in range(1, n_shifts):
            z = z + jnp.dot(window(s), w_ref[s], preferred_element_type=jnp.float32)

    # columns of z = 4 pool offsets (o = 2*p + q) x Cout.  Max over p here so the store
    # stays 2*Cout = 128 lanes wide; max over q happens in the wrapper.  relu(x + shift)
    # is monotone in x, so pool-max / ReLU / +shift commute as written.
    t = jnp.maximum(z[:, :2 * cout], z[:, 2 * cout:])
    o_ref[...] = jnp.maximum(t + shift2_ref[...], 0.0).astype(o_ref.dtype)


# --------------------------------------------------------------------- wrapper helpers
def _space_to_depth_pad(x):
    """[N,H,W,C] -> zero-pad 1px (conv pad) then 2x2 space-to-depth -> [N,Hu,Wu,4C]."""
    N, H, W, C = x.shape
    Hp, Wp = H + 2, W + 2
    Hu, Wu = (Hp + 1) // 2, (Wp + 1) // 2
    xp = jnp.pad(x, ((0, 0), (1, 2 * Hu - Hp + 1), (1, 2 * Wu - Wp + 1), (0, 0)))
    xp = xp.reshape(N, Hu, 2, Wu, 2, C)
    xp = jnp.transpose(xp, (0, 1, 3, 2, 4, 5))        # (n, a, b, hb, wb, c)
    return xp.reshape(N, Hu, Wu, 4 * C)


def _gather_2x2_window(x2):
    """[N,Hu,Wu,C] -> [N,Hu,Wu,4C]: concat of the (dH,dW) in {0,1}^2 shifted reads so a
    single K-wide matmul replaces four shifted K/4-wide matmuls (layer 1 only)."""
    N, Hu, Wu, C = x2.shape
    xp = jnp.pad(x2, ((0, 0), (0, 1), (0, 1), (0, 0)))
    parts = [xp[:, dh:dh + Hu, dw:dw + Wu, :] for dh in (0, 1) for dw in (0, 1)]
    return jnp.concatenate(parts, axis=-1)


def _fold_module_params(p):
    """Fold conv weights + BN(eval) scale into 4 combined [4*Cin, 4*Cout] matrices.

    Matrix s=(dH,dW) maps the packed input block (hb, wb, cin) read at packed position
    (i+dH, j+dW) to all 4 pool offsets (o = 2*p + q) of the conv at pooled (i, j).
    """
    w = np.asarray(p["w"], np.float32)                       # [3,3,Cin,Cout] (HWIO)
    Cin, Cout = w.shape[2], w.shape[3]
    gamma = np.asarray(p["gamma"], np.float32)
    beta = np.asarray(p["beta"], np.float32)
    run_mean = np.asarray(p["run_mean"], np.float32)
    run_var = np.asarray(p["run_var"], np.float32)
    conv_bias = np.asarray(p["conv_bias"], np.float32)
    scale = gamma / np.sqrt(run_var + BN_EPS)                       # [Cout]
    shift = beta + (conv_bias - run_mean) * scale                   # [Cout]
    ws = w * scale                                                  # BN scale folded
    K = np.zeros((4, 4 * Cin, 4 * Cout), np.float32)
    for dH in (0, 1):
        for dW in (0, 1):
            s_idx = 2 * dH + dW
            for po in (0, 1):
                for qo in (0, 1):
                    o = 2 * po + qo
                    for hb in (0, 1):
                        ky = 2 * dH + hb - po
                        if not 0 <= ky <= 2:
                            continue
                        for wb in (0, 1):
                            kx = 2 * dW + wb - qo
                            if not 0 <= kx <= 2:
                                continue
                            r0 = (2 * hb + wb) * Cin
                            c0 = o * Cout
                            K[s_idx, r0:r0 + Cin, c0:c0 + Cout] = ws[ky, kx]
    return K, shift


def fold_params(params, compute_dtype=jnp.bfloat16):
    """Done once; folds BN scale/shift + pool offsets into the conv weights, concatenates
    layer 1's four matrices along K (single K=16*Cin matmul) and pre-casts the weights."""
    folded = []
    for li, p in enumerate(params):
        K, shift = _fold_module_params(p)                    # [4, 4*Cin, 4*Cout], [Cout]
        if li == 0 and K.shape[1] * 4 <= 64:                 # small-Cin first layer
            K = K.reshape(1, 4 * K.shape[1], K.shape[2])     # -> [1, 16*Cin, 4*Cout]
        cout = shift.shape[0]
        shift2 = np.tile(shift.reshape(1, cout), (1, 2))     # [1, 2*Cout] epilogue shift
        folded.append((jnp.asarray(K, compute_dtype), jnp.asarray(shift2, jnp.float32)))
    return folded


def _images_per_tile(n):
    # Batch is padded to a multiple of nt (no nt=N fallback).  nt <= 8 keeps the worst
    # per-step VMEM footprint at ~5-6 MiB f32 (fits every generation, incl. v7x's 64 MiB
    # physical VMEM), and nt = ceil(n/4) gives >= 2 grid steps whenever n >= 2 so the
    # "parallel" batch axis feeds both v7x TensorCores.  On 1-TC v5e/v6e the extra grid
    # steps cost only ~0.35 us each.
    return max(1, min(8, -(-n // 4)))


def _embed_module_fused(x, K, shift2, *, nt, compute_dtype):
    """One module: Conv3x3(pad=1) + BN(eval) + ReLU + MaxPool2x2 as one pallas_call.
    x: [N, H, W, Cin] NHWC (N % nt == 0)  ->  [N, H//2, W//2, Cout]."""
    N, H, W, Cin = x.shape
    Cout = shift2.shape[-1] // 2
    Ho, Wo = H // 2, W // 2
    n_shifts = K.shape[0]

    x2 = _space_to_depth_pad(x)                              # [N, Hu, Wu, 4*Cin]
    if n_shifts == 1:                                        # layer-1 style: K=16*Cin
        x2 = _gather_2x2_window(x2)                          # [N, Hu, Wu, 16*Cin]
    _, Hu, Wu, Kdim = x2.shape

    G = N // nt
    M_blk = nt * Hu * Wu
    # rows whose shifted window reads stay inside the block (gathered case: all rows)
    m_eff = M_blk if n_shifts == 1 else M_blk - (Wu + 1)
    x_blk = x2.reshape(G, M_blk, Kdim).astype(compute_dtype)

    # Big layers accumulate in a VMEM scratch; small ones in registers (no += RMW).
    acc_in_scratch = m_eff * 4 * Cout * 4 > 128 * 1024
    scratch = [pltpu.VMEM((m_eff, 4 * Cout), jnp.float32)] if acc_in_scratch else []

    kernel = functools.partial(_module_kernel, n_shifts=n_shifts, wu=Wu, m_eff=m_eff,
                               cout=Cout, acc_in_scratch=acc_in_scratch)
    out = pl.pallas_call(
        kernel,
        out_shape=jax.ShapeDtypeStruct((G, m_eff, 2 * Cout), compute_dtype),
        grid=(G,),
        in_specs=[
            pl.BlockSpec((None, M_blk, Kdim), lambda g: (g, 0, 0)),
            pl.BlockSpec((n_shifts, Kdim, 4 * Cout), lambda g: (0, 0, 0)),
            pl.BlockSpec((1, 2 * Cout), lambda g: (0, 0)),
        ],
        out_specs=pl.BlockSpec((None, m_eff, 2 * Cout), lambda g: (g, 0, 0)),
        scratch_shapes=scratch,
        compiler_params=pltpu.CompilerParams(dimension_semantics=("parallel",)),
    )(x_blk, K, shift2)

    # Strip window-padding rows, finish the pool (max over the column offset q) and
    # recover [N, Ho, Wo, Cout]; cheap XLA layout glue on a small tensor.
    out = jnp.pad(out, ((0, 0), (0, M_blk - m_eff), (0, 0)))
    out = out.reshape(N, Hu, Wu, 2, Cout).max(axis=3)
    return out[:, :Ho, :Wo, :]


# -------------------------------------------------------------------- full forward pass
def embed_net_forward(images_nchw, folded_params, *, compute_dtype=jnp.bfloat16):
    x = jnp.transpose(images_nchw, (0, 2, 3, 1)).astype(compute_dtype)   # NCHW -> NHWC
    N = x.shape[0]
    nt = _images_per_tile(N)
    pad_n = (-N) % nt
    if pad_n:                                                # pad batch to a tile multiple
        x = jnp.pad(x, ((0, pad_n), (0, 0), (0, 0), (0, 0)))
    for K, shift2 in folded_params:
        x = _embed_module_fused(x, K, shift2, nt=nt, compute_dtype=compute_dtype)
    x = x[:N]
    n, h, w, c = x.shape
    x_nchw = jnp.transpose(x, (0, 3, 1, 2))                  # match torch .view on NCHW
    return x_nchw.reshape(n, 1, c * h * w).astype(jnp.float32)


# ----------------------------------------------------------------------- init & reference
def _glorot_normal_conv(key, cin, cout, gain):
    # xavier_normal_ on a [Cout, Cin, 3, 3] weight: fan_in = Cin*9, fan_out = Cout*9
    fan_in, fan_out = cin * 9, cout * 9
    std = gain * (2.0 / (fan_in + fan_out)) ** 0.5
    return std * jax.random.normal(key, (3, 3, cin, cout), dtype=jnp.float32)


def init_params(key, input_channels):
    params = []
    gain = 2.0 ** 0.5   # nn.init.calculate_gain('relu')
    cin = input_channels
    for _ in range(4):
        key, sub = jax.random.split(key)
        params.append(dict(
            w=_glorot_normal_conv(sub, cin, 64, gain),
            conv_bias=jnp.zeros((64,), jnp.float32),
            gamma=jnp.ones((64,), jnp.float32),
            beta=jnp.zeros((64,), jnp.float32),
            run_mean=jnp.zeros((64,), jnp.float32),
            run_var=jnp.ones((64,), jnp.float32),
        ))
        cin = 64
    return params


def reference_forward(images_nchw, params):
    """Pure-JAX reference (XLA conv / reduce_window) for correctness checking."""
    x = images_nchw
    for p in params:
        w_oihw = jnp.transpose(p["w"], (3, 2, 0, 1))
        y = lax.conv_general_dilated(x, w_oihw, (1, 1), ((1, 1), (1, 1)),
                                     dimension_numbers=("NCHW", "OIHW", "NCHW"))
        y = y + p["conv_bias"][None, :, None, None]
        scale = p["gamma"] / jnp.sqrt(p["run_var"] + BN_EPS)
        shift = p["beta"] - p["run_mean"] * scale
        y = y * scale[None, :, None, None] + shift[None, :, None, None]
        y = jnp.maximum(y, 0.0)
        x = lax.reduce_window(y, -jnp.inf, lax.max,
                              (1, 1, 2, 2), (1, 1, 2, 2), "VALID")
    n = x.shape[0]
    return x.reshape(n, 1, -1)


if __name__ == "__main__":
    key = jax.random.PRNGKey(0)
    pkey, xkey = jax.random.split(key)
    params = init_params(pkey, input_channels=1)
    # 1x28x28 images (as in the module docstring), batch of 2, NCHW like PyTorch.
    images = jax.random.normal(xkey, (2, 1, 28, 28), dtype=jnp.float32)

    ref = reference_forward(images, params)

    # f32 path: strict parity with the PyTorch/XLA reference.
    folded_f32 = fold_params(params, jnp.float32)
    fwd_f32 = jax.jit(functools.partial(embed_net_forward, compute_dtype=jnp.float32))
    out = jax.block_until_ready(fwd_f32(images, folded_f32))
    assert out.shape == (2, 1, 64), out.shape
    assert jnp.allclose(out, ref, atol=1e-4, rtol=1e-4), \
        float(jnp.max(jnp.abs(out - ref)))

    # Default bf16 MXU path (half the activation/weight bytes, f32 accumulation).
    folded_bf16 = fold_params(params)                # weights pre-cast to bf16 once
    fwd_bf16 = jax.jit(embed_net_forward)
    out_bf16 = jax.block_until_ready(fwd_bf16(images, folded_bf16))
    assert jnp.allclose(out_bf16, ref, atol=1e-1, rtol=1e-1), \
        float(jnp.max(jnp.abs(out_bf16 - ref)))

    print("KERNEL_OK")
</pallas_src>

<mosaic_0001>
module attributes {stable_mosaic.version = 11 : i64} {
  func.func @_module_kernel(%arg0: i32, %arg1: memref<1x225x16xf32, #tpu.memory_space<vmem>>, %arg2: memref<1x16x256xf32, #tpu.memory_space<vmem>>, %arg3: memref<1x128xf32, #tpu.memory_space<vmem>>, %arg4: memref<1x225x128xf32, #tpu.memory_space<vmem>>, %arg5: memref<225x256xf32, #tpu.memory_space<vmem>>) attributes {dimension_semantics = [#tpu.dimension_semantics<parallel>], iteration_bounds = array<i64: 2>, scalar_prefetch = 0 : i64, scratch_operands = 1 : i64, tpu.core_type = #tpu.core_type<tc>, window_params = [{transform_indices = @transform_0, window_bounds = array<i64: 1, 225, 16>}, {pipeline_mode = #tpu.pipeline_mode<synchronous>, transform_indices = @transform_1, window_bounds = array<i64: 1, 16, 256>}, {pipeline_mode = #tpu.pipeline_mode<synchronous>, transform_indices = @transform_2, window_bounds = array<i64: 1, 128>}, {transform_indices = @transform_3, window_bounds = array<i64: 1, 225, 128>}]} {
    %c0 = arith.constant 0 : index
    %c0_0 = arith.constant 0 : index
    %c0_1 = arith.constant 0 : index
    %0 = vector.load %arg1[%c0, %c0_0, %c0_1] : memref<1x225x16xf32, #tpu.memory_space<vmem>>, vector<1x225x16xf32>
    %1 = vector.shape_cast %0 : vector<1x225x16xf32> to vector<225x16xf32>
    %c0_2 = arith.constant 0 : index
    %c0_3 = arith.constant 0 : index
    %c0_4 = arith.constant 0 : index
    %2 = vector.load %arg2[%c0_2, %c0_3, %c0_4] : memref<1x16x256xf32, #tpu.memory_space<vmem>>, vector<1x16x256xf32>
    %3 = vector.shape_cast %2 : vector<1x16x256xf32> to vector<16x256xf32>
    %cst = arith.constant dense<0.000000e+00> : vector<225x256xf32>
    %4 = tpu.matmul %1, %3, %cst {dimension_numbers = #tpu.dot_dimension_numbers<[1], [0], [0], [1], [0, 0, 1, 1], [], []>} : vector<225x16xf32>, vector<16x256xf32>, vector<225x256xf32> -> vector<225x256xf32>
    %c0_5 = arith.constant 0 : index
    %c0_6 = arith.constant 0 : index
    %5 = vector.load %arg5[%c0_5, %c0_6] : memref<225x256xf32, #tpu.memory_space<vmem>>, vector<225x256xf32>
    tpu.vector_store %arg5[%c0_5, %c0_6], %4 {strides = array<i32>} : memref<225x256xf32, #tpu.memory_space<vmem>>, vector<225x256xf32>,
    %c0_7 = arith.constant 0 : index
    %c0_8 = arith.constant 0 : index
    %6 = vector.load %arg5[%c0_7, %c0_8] : memref<225x256xf32, #tpu.memory_space<vmem>>, vector<225x256xf32>
    %7 = vector.extract_strided_slice %6 {offsets = [0, 0], sizes = [225, 128], strides = [1, 1]} : vector<225x256xf32> to vector<225x128xf32>
    %8 = vector.extract_strided_slice %6 {offsets = [0, 128], sizes = [225, 128], strides = [1, 1]} : vector<225x256xf32> to vector<225x128xf32>
    %9 = arith.maximumf %7, %8 : vector<225x128xf32>
    %c0_9 = arith.constant 0 : index
    %c0_10 = arith.constant 0 : index
    %10 = vector.load %arg3[%c0_9, %c0_10] : memref<1x128xf32, #tpu.memory_space<vmem>>, vector<1x128xf32>
    %11 = vector.broadcast %10 : vector<1x128xf32> to vector<225x128xf32>
    %12 = arith.addf %9, %11 : vector<225x128xf32>
    %cst_11 = arith.constant 0.000000e+00 : f32
    %13 = vector.broadcast %cst_11 : f32 to vector<225x128xf32>
    %14 = arith.maximumf %12, %13 : vector<225x128xf32>
    %c0_12 = arith.constant 0 : index
    %c0_13 = arith.constant 0 : index
    %c0_14 = arith.constant 0 : index
    %15 = vector.load %arg4[%c0_12, %c0_13, %c0_14] : memref<1x225x128xf32, #tpu.memory_space<vmem>>, vector<1x225x128xf32>
    %16 = vector.shape_cast %15 : vector<1x225x128xf32> to vector<225x128xf32>
    %17 = vector.shape_cast %14 : vector<225x128xf32> to vector<1x225x128xf32>
    tpu.vector_store %arg4[%c0_12, %c0_13, %c0_14], %17 {strides = array<i32>} : memref<1x225x128xf32, #tpu.memory_space<vmem>>, vector<1x225x128xf32>,
    return
  }
  func.func @transform_0(%arg0: i32) -> (i32, i32, i32) {
    %c0_i32 = arith.constant 0 : i32
    %c0_i32_0 = arith.constant 0 : i32
    %c0_i32_1 = arith.constant 0 : i32
    return %arg0, %c0_i32, %c0_i32_0 : i32, i32, i32
  }
  func.func @transform_1(%arg0: i32) -> (i32, i32, i32) {
    %c0_i32 = arith.constant 0 : i32
    %c0_i32_0 = arith.constant 0 : i32
    %c0_i32_1 = arith.constant 0 : i32
    %c0_i32_2 = arith.constant 0 : i32
    return %c0_i32, %c0_i32_0, %c0_i32_1 : i32, i32, i32
  }
  func.func @transform_2(%arg0: i32) -> (i32, i32) {
    %c0_i32 = arith.constant 0 : i32
    %c0_i32_0 = arith.constant 0 : i32
    %c0_i32_1 = arith.constant 0 : i32
    return %c0_i32, %c0_i32_0 : i32, i32
  }
  func.func @transform_3(%arg0: i32) -> (i32, i32, i32) {
    %c0_i32 = arith.constant 0 : i32
    %c0_i32_0 = arith.constant 0 : i32
    %c0_i32_1 = arith.constant 0 : i32
    return %arg0, %c0_i32, %c0_i32_0 : i32, i32, i32
  }
}

module attributes {stable_mosaic.version = 11 : i64} {
  func.func @_module_kernel(%arg0: i32, %arg1: memref<1x64x256xf32, #tpu.memory_space<vmem>>, %arg2: memref<4x256x256xf32, #tpu.memory_space<vmem>>, %arg3: memref<1x128xf32, #tpu.memory_space<vmem>>, %arg4: memref<1x55x128xf32, #tpu.memory_space<vmem>>) attributes {dimension_semantics = [#tpu.dimension_semantics<parallel>], iteration_bounds = array<i64: 2>, scalar_prefetch = 0 : i64, scratch_operands = 0 : i64, tpu.core_type = #tpu.core_type<tc>, window_params = [{transform_indices = @transform_0, window_bounds = array<i64: 1, 64, 256>}, {pipeline_mode = #tpu.pipeline_mode<synchronous>, transform_indices = @transform_1, window_bounds = array<i64: 4, 256, 256>}, {pipeline_mode = #tpu.pipeline_mode<synchronous>, transform_indices = @transform_2, window_bounds = array<i64: 1, 128>}, {transform_indices = @transform_3, window_bounds = array<i64: 1, 55, 128>}]} {
    %c0 = arith.constant 0 : index
    %c0_0 = arith.constant 0 : index
    %c0_1 = arith.constant 0 : index
    %0 = vector.load %arg1[%c0, %c0_0, %c0_1] : memref<1x64x256xf32, #tpu.memory_space<vmem>>, vector<1x55x256xf32>
    %1 = vector.shape_cast %0 : vector<1x55x256xf32> to vector<55x256xf32>
    %c0_2 = arith.constant 0 : index
    %c0_3 = arith.constant 0 : index
    %c0_4 = arith.constant 0 : index
    %2 = vector.load %arg2[%c0_2, %c0_3, %c0_4] : memref<4x256x256xf32, #tpu.memory_space<vmem>>, vector<1x256x256xf32>
    %3 = vector.shape_cast %2 : vector<1x256x256xf32> to vector<256x256xf32>
    %cst = arith.constant dense<0.000000e+00> : vector<55x256xf32>
    %4 = tpu.matmul %1, %3, %cst {dimension_numbers = #tpu.dot_dimension_numbers<[1], [0], [0], [1], [0, 0, 1, 1], [], []>} : vector<55x256xf32>, vector<256x256xf32>, vector<55x256xf32> -> vector<55x256xf32>
    %c0_5 = arith.constant 0 : index
    %c1 = arith.constant 1 : index
    %c0_6 = arith.constant 0 : index
    %5 = vector.load %arg1[%c0_5, %c1, %c0_6] : memref<1x64x256xf32, #tpu.memory_space<vmem>>, vector<1x55x256xf32>
    %6 = vector.shape_cast %5 : vector<1x55x256xf32> to vector<55x256xf32>
    %c1_7 = arith.constant 1 : index
    %c0_8 = arith.constant 0 : index
    %c0_9 = arith.constant 0 : index
    %7 = vector.load %arg2[%c1_7, %c0_8, %c0_9] : memref<4x256x256xf32, #tpu.memory_space<vmem>>, vector<1x256x256xf32>
    %8 = vector.shape_cast %7 : vector<1x256x256xf32> to vector<256x256xf32>
    %cst_10 = arith.constant dense<0.000000e+00> : vector<55x256xf32>
    %9 = tpu.matmul %6, %8, %cst_10 {dimension_numbers = #tpu.dot_dimension_numbers<[1], [0], [0], [1], [0, 0, 1, 1], [], []>} : vector<55x256xf32>, vector<256x256xf32>, vector<55x256xf32> -> vector<55x256xf32>
    %10 = arith.addf %4, %9 : vector<55x256xf32>
    %c0_11 = arith.constant 0 : index
    %c8 = arith.constant 8 : index
    %c0_12 = arith.constant 0 : index
    %11 = vector.load %arg1[%c0_11, %c8, %c0_12] : memref<1x64x256xf32, #tpu.memory_space<vmem>>, vector<1x55x256xf32>
    %12 = vector.shape_cast %11 : vector<1x55x256xf32> to vector<55x256xf32>
    %c2 = arith.constant 2 : index
    %c0_13 = arith.constant 0 : index
    %c0_14 = arith.constant 0 : index
    %13 = vector.load %arg2[%c2, %c0_13, %c0_14] : memref<4x256x256xf32, #tpu.memory_space<vmem>>, vector<1x256x256xf32>
    %14 = vector.shape_cast %13 : vector<1x256x256xf32> to vector<256x256xf32>
    %cst_15 = arith.constant dense<0.000000e+00> : vector<55x256xf32>
    %15 = tpu.matmul %12, %14, %cst_15 {dimension_numbers = #tpu.dot_dimension_numbers<[1], [0], [0], [1], [0, 0, 1, 1], [], []>} : vector<55x256xf32>, vector<256x256xf32>, vector<55x256xf32> -> vector<55x256xf32>
    %16 = arith.addf %10, %15 : vector<55x256xf32>
    %c0_16 = arith.constant 0 : index
    %c9 = arith.constant 9 : index
    %c0_17 = arith.constant 0 : index
    %17 = vector.load %arg1[%c0_16, %c9, %c0_17] : memref<1x64x256xf32, #tpu.memory_space<vmem>>, vector<1x55x256xf32>
    %18 = vector.shape_cast %17 : vector<1x55x256xf32> to vector<55x256xf32>
    %c3 = arith.constant 3 : index
    %c0_18 = arith.constant 0 : index
    %c0_19 = arith.constant 0 : index
    %19 = vector.load %arg2[%c3, %c0_18, %c0_19] : memref<4x256x256xf32, #tpu.memory_space<vmem>>, vector<1x256x256xf32>
    %20 = vector.shape_cast %19 : vector<1x256x256xf32> to vector<256x256xf32>
    %cst_20 = arith.constant dense<0.000000e+00> : vector<55x256xf32>
    %21 = tpu.matmul %18, %20, %cst_20 {dimension_numbers = #tpu.dot_dimension_numbers<[1], [0], [0], [1], [0, 0, 1, 1], [], []>} : vector<55x256xf32>, vector<256x256xf32>, vector<55x256xf32> -> vector<55x256xf32>
    %22 = arith.addf %16, %21 : vector<55x256xf32>
    %23 = vector.extract_strided_slice %22 {offsets = [0, 0], sizes = [55, 128], strides = [1, 1]} : vector<55x256xf32> to vector<55x128xf32>
    %24 = vector.extract_strided_slice %22 {offsets = [0, 128], sizes = [55, 128], strides = [1, 1]} : vector<55x256xf32> to vector<55x128xf32>
    %25 = arith.maximumf %23, %24 : vector<55x128xf32>
    %c0_21 = arith.constant 0 : index
    %c0_22 = arith.constant 0 : index
    %26 = vector.load %arg3[%c0_21, %c0_22] : memref<1x128xf32, #tpu.memory_space<vmem>>, vector<1x128xf32>
    %27 = vector.broadcast %26 : vector<1x128xf32> to vector<55x128xf32>
    %28 = arith.addf %25, %27 : vector<55x128xf32>
    %cst_23 = arith.constant 0.000000e+00 : f32
    %29 = vector.broadcast %cst_23 : f32 to vector<55x128xf32>
    %30 = arith.maximumf %28, %29 : vector<55x128xf32>
    %c0_24 = arith.constant 0 : index
    %c0_25 = arith.constant 0 : index
    %c0_26 = arith.constant 0 : index
    %31 = vector.load %arg4[%c0_24, %c0_25, %c0_26] : memref<1x55x128xf32, #tpu.memory_space<vmem>>, vector<1x55x128xf32>
    %32 = vector.shape_cast %31 : vector<1x55x128xf32> to vector<55x128xf32>
    %33 = vector.shape_cast %30 : vector<55x128xf32> to vector<1x55x128xf32>
    tpu.vector_store %arg4[%c0_24, %c0_25, %c0_26], %33 {strides = array<i32>} : memref<1x55x128xf32, #tpu.memory_space<vmem>>, vector<1x55x128xf32>,
    return
  }
  func.func @transform_0(%arg0: i32) -> (i32, i32, i32) {
    %c0_i32 = arith.constant 0 : i32
    %c0_i32_0 = arith.constant 0 : i32
    %c0_i32_1 = arith.constant 0 : i32
    return %arg0, %c0_i32, %c0_i32_0 : i32, i32, i32
  }
  func.func @transform_1(%arg0: i32) -> (i32, i32, i32) {
    %c0_i32 = arith.constant 0 : i32
    %c0_i32_0 = arith.constant 0 : i32
    %c0_i32_1 = arith.constant 0 : i32
    %c0_i32_2 = arith.constant 0 : i32
    return %c0_i32, %c0_i32_0, %c0_i32_1 : i32, i32, i32
  }
  func.func @transform_2(%arg0: i32) -> (i32, i32) {
    %c0_i32 = arith.constant 0 : i32
    %c0_i32_0 = arith.constant 0 : i32
    %c0_i32_1 = arith.constant 0 : i32
    return %c0_i32, %c0_i32_0 : i32, i32
  }
  func.func @transform_3(%arg0: i32) -> (i32, i32, i32) {
    %c0_i32 = arith.constant 0 : i32
    %c0_i32_0 = arith.constant 0 : i32
    %c0_i32_1 = arith.constant 0 : i32
    return %arg0, %c0_i32, %c0_i32_0 : i32, i32, i32
  }
}

module attributes {stable_mosaic.version = 11 : i64} {
  func.func @_module_kernel(%arg0: i32, %arg1: memref<1x25x256xf32, #tpu.memory_space<vmem>>, %arg2: memref<4x256x256xf32, #tpu.memory_space<vmem>>, %arg3: memref<1x128xf32, #tpu.memory_space<vmem>>, %arg4: memref<1x19x128xf32, #tpu.memory_space<vmem>>) attributes {dimension_semantics = [#tpu.dimension_semantics<parallel>], iteration_bounds = array<i64: 2>, scalar_prefetch = 0 : i64, scratch_operands = 0 : i64, tpu.core_type = #tpu.core_type<tc>, window_params = [{transform_indices = @transform_0, window_bounds = array<i64: 1, 25, 256>}, {pipeline_mode = #tpu.pipeline_mode<synchronous>, transform_indices = @transform_1, window_bounds = array<i64: 4, 256, 256>}, {pipeline_mode = #tpu.pipeline_mode<synchronous>, transform_indices = @transform_2, window_bounds = array<i64: 1, 128>}, {transform_indices = @transform_3, window_bounds = array<i64: 1, 19, 128>}]} {
    %c0 = arith.constant 0 : index
    %c0_0 = arith.constant 0 : index
    %c0_1 = arith.constant 0 : index
    %0 = vector.load %arg1[%c0, %c0_0, %c0_1] : memref<1x25x256xf32, #tpu.memory_space<vmem>>, vector<1x19x256xf32>
    %1 = vector.shape_cast %0 : vector<1x19x256xf32> to vector<19x256xf32>
    %c0_2 = arith.constant 0 : index
    %c0_3 = arith.constant 0 : index
    %c0_4 = arith.constant 0 : index
    %2 = vector.load %arg2[%c0_2, %c0_3, %c0_4] : memref<4x256x256xf32, #tpu.memory_space<vmem>>, vector<1x256x256xf32>
    %3 = vector.shape_cast %2 : vector<1x256x256xf32> to vector<256x256xf32>
    %cst = arith.constant dense<0.000000e+00> : vector<19x256xf32>
    %4 = tpu.matmul %1, %3, %cst {dimension_numbers = #tpu.dot_dimension_numbers<[1], [0], [0], [1], [0, 0, 1, 1], [], []>} : vector<19x256xf32>, vector<256x256xf32>, vector<19x256xf32> -> vector<19x256xf32>
    %c0_5 = arith.constant 0 : index
    %c1 = arith.constant 1 : index
    %c0_6 = arith.constant 0 : index
    %5 = vector.load %arg1[%c0_5, %c1, %c0_6] : memref<1x25x256xf32, #tpu.memory_space<vmem>>, vector<1x19x256xf32>
    %6 = vector.shape_cast %5 : vector<1x19x256xf32> to vector<19x256xf32>
    %c1_7 = arith.constant 1 : index
    %c0_8 = arith.constant 0 : index
    %c0_9 = arith.constant 0 : index
    %7 = vector.load %arg2[%c1_7, %c0_8, %c0_9] : memref<4x256x256xf32, #tpu.memory_space<vmem>>, vector<1x256x256xf32>
    %8 = vector.shape_cast %7 : vector<1x256x256xf32> to vector<256x256xf32>
    %cst_10 = arith.constant dense<0.000000e+00> : vector<19x256xf32>
    %9 = tpu.matmul %6, %8, %cst_10 {dimension_numbers = #tpu.dot_dimension_numbers<[1], [0], [0], [1], [0, 0, 1, 1], [], []>} : vector<19x256xf32>, vector<256x256xf32>, vector<19x256xf32> -> vector<19x256xf32>
    %10 = arith.addf %4, %9 : vector<19x256xf32>
    %c0_11 = arith.constant 0 : index
    %c5 = arith.constant 5 : index
    %c0_12 = arith.constant 0 : index
    %11 = vector.load %arg1[%c0_11, %c5, %c0_12] : memref<1x25x256xf32, #tpu.memory_space<vmem>>, vector<1x19x256xf32>
    %12 = vector.shape_cast %11 : vector<1x19x256xf32> to vector<19x256xf32>
    %c2 = arith.constant 2 : index
    %c0_13 = arith.constant 0 : index
    %c0_14 = arith.constant 0 : index
    %13 = vector.load %arg2[%c2, %c0_13, %c0_14] : memref<4x256x256xf32, #tpu.memory_space<vmem>>, vector<1x256x256xf32>
    %14 = vector.shape_cast %13 : vector<1x256x256xf32> to vector<256x256xf32>
    %cst_15 = arith.constant dense<0.000000e+00> : vector<19x256xf32>
    %15 = tpu.matmul %12, %14, %cst_15 {dimension_numbers = #tpu.dot_dimension_numbers<[1], [0], [0], [1], [0, 0, 1, 1], [], []>} : vector<19x256xf32>, vector<256x256xf32>, vector<19x256xf32> -> vector<19x256xf32>
    %16 = arith.addf %10, %15 : vector<19x256xf32>
    %c0_16 = arith.constant 0 : index
    %c6 = arith.constant 6 : index
    %c0_17 = arith.constant 0 : index
    %17 = vector.load %arg1[%c0_16, %c6, %c0_17] : memref<1x25x256xf32, #tpu.memory_space<vmem>>, vector<1x19x256xf32>
    %18 = vector.shape_cast %17 : vector<1x19x256xf32> to vector<19x256xf32>
    %c3 = arith.constant 3 : index
    %c0_18 = arith.constant 0 : index
    %c0_19 = arith.constant 0 : index
    %19 = vector.load %arg2[%c3, %c0_18, %c0_19] : memref<4x256x256xf32, #tpu.memory_space<vmem>>, vector<1x256x256xf32>
    %20 = vector.shape_cast %19 : vector<1x256x256xf32> to vector<256x256xf32>
    %cst_20 = arith.constant dense<0.000000e+00> : vector<19x256xf32>
    %21 = tpu.matmul %18, %20, %cst_20 {dimension_numbers = #tpu.dot_dimension_numbers<[1], [0], [0], [1], [0, 0, 1, 1], [], []>} : vector<19x256xf32>, vector<256x256xf32>, vector<19x256xf32> -> vector<19x256xf32>
    %22 = arith.addf %16, %21 : vector<19x256xf32>
    %23 = vector.extract_strided_slice %22 {offsets = [0, 0], sizes = [19, 128], strides = [1, 1]} : vector<19x256xf32> to vector<19x128xf32>
    %24 = vector.extract_strided_slice %22 {offsets = [0, 128], sizes = [19, 128], strides = [1, 1]} : vector<19x256xf32> to vector<19x128xf32>
    %25 = arith.maximumf %23, %24 : vector<19x128xf32>
    %c0_21 = arith.constant 0 : index
    %c0_22 = arith.constant 0 : index
    %26 = vector.load %arg3[%c0_21, %c0_22] : memref<1x128xf32, #tpu.memory_space<vmem>>, vector<1x128xf32>
    %27 = vector.broadcast %26 : vector<1x128xf32> to vector<19x128xf32>
    %28 = arith.addf %25, %27 : vector<19x128xf32>
    %cst_23 = arith.constant 0.000000e+00 : f32
    %29 = vector.broadcast %cst_23 : f32 to vector<19x128xf32>
    %30 = arith.maximumf %28, %29 : vector<19x128xf32>
    %c0_24 = arith.constant 0 : index
    %c0_25 = arith.constant 0 : index
    %c0_26 = arith.constant 0 : index
    %31 = vector.load %arg4[%c0_24, %c0_25, %c0_26] : memref<1x19x128xf32, #tpu.memory_space<vmem>>, vector<1x19x128xf32>
    %32 = vector.shape_cast %31 : vector<1x19x128xf32> to vector<19x128xf32>
    %33 = vector.shape_cast %30 : vector<19x128xf32> to vector<1x19x128xf32>
    tpu.vector_store %arg4[%c0_24, %c0_25, %c0_26], %33 {strides = array<i32>} : memref<1x19x128xf32, #tpu.memory_space<vmem>>, vector<1x19x128xf32>,
    return
  }
  func.func @transform_0(%arg0: i32) -> (i32, i32, i32) {
    %c0_i32 = arith.constant 0 : i32
    %c0_i32_0 = arith.constant 0 : i32
    %c0_i32_1 = arith.constant 0 : i32
    return %arg0, %c0_i32, %c0_i32_0 : i32, i32, i32
  }
  func.func @transform_1(%arg0: i32) -> (i32, i32, i32) {
    %c0_i32 = arith.constant 0 : i32
    %c0_i32_0 = arith.constant 0 : i32
    %c0_i32_1 = arith.constant 0 : i32
    %c0_i32_2 = arith.constant 0 : i32
    return %c0_i32, %c0_i32_0, %c0_i32_1 : i32, i32, i32
  }
  func.func @transform_2(%arg0: i32) -> (i32, i32) {
    %c0_i32 = arith.constant 0 : i32
    %c0_i32_0 = arith.constant 0 : i32
    %c0_i32_1 = arith.constant 0 : i32
    return %c0_i32, %c0_i32_0 : i32, i32
  }
  func.func @transform_3(%arg0: i32) -> (i32, i32, i32) {
    %c0_i32 = arith.constant 0 : i32
    %c0_i32_0 = arith.constant 0 : i32
    %c0_i32_1 = arith.constant 0 : i32
    return %arg0, %c0_i32, %c0_i32_0 : i32, i32, i32
  }
}

module attributes {stable_mosaic.version = 11 : i64} {
  func.func @_module_kernel(%arg0: i32, %arg1: memref<1x9x256xf32, #tpu.memory_space<vmem>>, %arg2: memref<4x256x256xf32, #tpu.memory_space<vmem>>, %arg3: memref<1x128xf32, #tpu.memory_space<vmem>>, %arg4: memref<1x5x128xf32, #tpu.memory_space<vmem>>) attributes {dimension_semantics = [#tpu.dimension_semantics<parallel>], iteration_bounds = array<i64: 2>, scalar_prefetch = 0 : i64, scratch_operands = 0 : i64, tpu.core_type = #tpu.core_type<tc>, window_params = [{transform_indices = @transform_0, window_bounds = array<i64: 1, 9, 256>}, {pipeline_mode = #tpu.pipeline_mode<synchronous>, transform_indices = @transform_1, window_bounds = array<i64: 4, 256, 256>}, {pipeline_mode = #tpu.pipeline_mode<synchronous>, transform_indices = @transform_2, window_bounds = array<i64: 1, 128>}, {transform_indices = @transform_3, window_bounds = array<i64: 1, 5, 128>}]} {
    %c0 = arith.constant 0 : index
    %c0_0 = arith.constant 0 : index
    %c0_1 = arith.constant 0 : index
    %0 = vector.load %arg1[%c0, %c0_0, %c0_1] : memref<1x9x256xf32, #tpu.memory_space<vmem>>, vector<1x5x256xf32>
    %1 = vector.shape_cast %0 : vector<1x5x256xf32> to vector<5x256xf32>
    %c0_2 = arith.constant 0 : index
    %c0_3 = arith.constant 0 : index
    %c0_4 = arith.constant 0 : index
    %2 = vector.load %arg2[%c0_2, %c0_3, %c0_4] : memref<4x256x256xf32, #tpu.memory_space<vmem>>, vector<1x256x256xf32>
    %3 = vector.shape_cast %2 : vector<1x256x256xf32> to vector<256x256xf32>
    %cst = arith.constant dense<0.000000e+00> : vector<5x256xf32>
    %4 = tpu.matmul %1, %3, %cst {dimension_numbers = #tpu.dot_dimension_numbers<[1], [0], [0], [1], [0, 0, 1, 1], [], []>} : vector<5x256xf32>, vector<256x256xf32>, vector<5x256xf32> -> vector<5x256xf32>
    %c0_5 = arith.constant 0 : index
    %c1 = arith.constant 1 : index
    %c0_6 = arith.constant 0 : index
    %5 = vector.load %arg1[%c0_5, %c1, %c0_6] : memref<1x9x256xf32, #tpu.memory_space<vmem>>, vector<1x5x256xf32>
    %6 = vector.shape_cast %5 : vector<1x5x256xf32> to vector<5x256xf32>
    %c1_7 = arith.constant 1 : index
    %c0_8 = arith.constant 0 : index
    %c0_9 = arith.constant 0 : index
    %7 = vector.load %arg2[%c1_7, %c0_8, %c0_9] : memref<4x256x256xf32, #tpu.memory_space<vmem>>, vector<1x256x256xf32>
    %8 = vector.shape_cast %7 : vector<1x256x256xf32> to vector<256x256xf32>
    %cst_10 = arith.constant dense<0.000000e+00> : vector<5x256xf32>
    %9 = tpu.matmul %6, %8, %cst_10 {dimension_numbers = #tpu.dot_dimension_numbers<[1], [0], [0], [1], [0, 0, 1, 1], [], []>} : vector<5x256xf32>, vector<256x256xf32>, vector<5x256xf32> -> vector<5x256xf32>
    %10 = arith.addf %4, %9 : vector<5x256xf32>
    %c0_11 = arith.constant 0 : index
    %c3 = arith.constant 3 : index
    %c0_12 = arith.constant 0 : index
    %11 = vector.load %arg1[%c0_11, %c3, %c0_12] : memref<1x9x256xf32, #tpu.memory_space<vmem>>, vector<1x5x256xf32>
    %12 = vector.shape_cast %11 : vector<1x5x256xf32> to vector<5x256xf32>
    %c2 = arith.constant 2 : index
    %c0_13 = arith.constant 0 : index
    %c0_14 = arith.constant 0 : index
    %13 = vector.load %arg2[%c2, %c0_13, %c0_14] : memref<4x256x256xf32, #tpu.memory_space<vmem>>, vector<1x256x256xf32>
    %14 = vector.shape_cast %13 : vector<1x256x256xf32> to vector<256x256xf32>
    %cst_15 = arith.constant dense<0.000000e+00> : vector<5x256xf32>
    %15 = tpu.matmul %12, %14, %cst_15 {dimension_numbers = #tpu.dot_dimension_numbers<[1], [0], [0], [1], [0, 0, 1, 1], [], []>} : vector<5x256xf32>, vector<256x256xf32>, vector<5x256xf32> -> vector<5x256xf32>
    %16 = arith.addf %10, %15 : vector<5x256xf32>
    %c0_16 = arith.constant 0 : index
    %c4 = arith.constant 4 : index
    %c0_17 = arith.constant 0 : index
    %17 = vector.load %arg1[%c0_16, %c4, %c0_17] : memref<1x9x256xf32, #tpu.memory_space<vmem>>, vector<1x5x256xf32>
    %18 = vector.shape_cast %17 : vector<1x5x256xf32> to vector<5x256xf32>
    %c3_18 = arith.constant 3 : index
    %c0_19 = arith.constant 0 : index
    %c0_20 = arith.constant 0 : index
    %19 = vector.load %arg2[%c3_18, %c0_19, %c0_20] : memref<4x256x256xf32, #tpu.memory_space<vmem>>, vector<1x256x256xf32>
    %20 = vector.shape_cast %19 : vector<1x256x256xf32> to vector<256x256xf32>
    %cst_21 = arith.constant dense<0.000000e+00> : vector<5x256xf32>
    %21 = tpu.matmul %18, %20, %cst_21 {dimension_numbers = #tpu.dot_dimension_numbers<[1], [0], [0], [1], [0, 0, 1, 1], [], []>} : vector<5x256xf32>, vector<256x256xf32>, vector<5x256xf32> -> vector<5x256xf32>
    %22 = arith.addf %16, %21 : vector<5x256xf32>
    %23 = vector.extract_strided_slice %22 {offsets = [0, 0], sizes = [5, 128], strides = [1, 1]} : vector<5x256xf32> to vector<5x128xf32>
    %24 = vector.extract_strided_slice %22 {offsets = [0, 128], sizes = [5, 128], strides = [1, 1]} : vector<5x256xf32> to vector<5x128xf32>
    %25 = arith.maximumf %23, %24 : vector<5x128xf32>
    %c0_22 = arith.constant 0 : index
    %c0_23 = arith.constant 0 : index
    %26 = vector.load %arg3[%c0_22, %c0_23] : memref<1x128xf32, #tpu.memory_space<vmem>>, vector<1x128xf32>
    %27 = vector.broadcast %26 : vector<1x128xf32> to vector<5x128xf32>
    %28 = arith.addf %25, %27 : vector<5x128xf32>
    %cst_24 = arith.constant 0.000000e+00 : f32
    %29 = vector.broadcast %cst_24 : f32 to vector<5x128xf32>
    %30 = arith.maximumf %28, %29 : vector<5x128xf32>
    %c0_25 = arith.constant 0 : index
    %c0_26 = arith.constant 0 : index
    %c0_27 = arith.constant 0 : index
    %31 = vector.load %arg4[%c0_25, %c0_26, %c0_27] : memref<1x5x128xf32, #tpu.memory_space<vmem>>, vector<1x5x128xf32>
    %32 = vector.shape_cast %31 : vector<1x5x128xf32> to vector<5x128xf32>
    %33 = vector.shape_cast %30 : vector<5x128xf32> to vector<1x5x128xf32>
    tpu.vector_store %arg4[%c0_25, %c0_26, %c0_27], %33 {strides = array<i32>} : memref<1x5x128xf32, #tpu.memory_space<vmem>>, vector<1x5x128xf32>,
    return
  }
  func.func @transform_0(%arg0: i32) -> (i32, i32, i32) {
    %c0_i32 = arith.constant 0 : i32
    %c0_i32_0 = arith.constant 0 : i32
    %c0_i32_1 = arith.constant 0 : i32
    return %arg0, %c0_i32, %c0_i32_0 : i32, i32, i32
  }
  func.func @transform_1(%arg0: i32) -> (i32, i32, i32) {
    %c0_i32 = arith.constant 0 : i32
    %c0_i32_0 = arith.constant 0 : i32
    %c0_i32_1 = arith.constant 0 : i32
    %c0_i32_2 = arith.constant 0 : i32
    return %c0_i32, %c0_i32_0, %c0_i32_1 : i32, i32, i32
  }
  func.func @transform_2(%arg0: i32) -> (i32, i32) {
    %c0_i32 = arith.constant 0 : i32
    %c0_i32_0 = arith.constant 0 : i32
    %c0_i32_1 = arith.constant 0 : i32
    return %c0_i32, %c0_i32_0 : i32, i32
  }
  func.func @transform_3(%arg0: i32) -> (i32, i32, i32) {
    %c0_i32 = arith.constant 0 : i32
    %c0_i32_0 = arith.constant 0 : i32
    %c0_i32_1 = arith.constant 0 : i32
    return %arg0, %c0_i32, %c0_i32_0 : i32, i32, i32
  }
}

</mosaic_0001>

<llo_original>
// kernel: embed_net_forward.4
$region0: #{embed_net_forward.4}
  #allocation0 [shape = 'u32[]', space=smem, size = 0x4, offset = 0x4, fixed_abs, tag = 'smem constant byte address 0x4 - core index']
  #allocation1 [shape = 'u32[144,128]{1,0:T(1,128)}', space=vmem, size = 0x12000, scoped, tag = 'internal scratch']
  #allocation2 [shape = 'f32[225,256]{1,0:T(8,128)}', space=vmem, size = 0x3a000, scoped, tag = 'scratch operand']
  %s0 = inlined_call_operand.vmem [shape: f32[2,225,16], index: 0, kind: input, shape index: {}]
  %s1 = inlined_call_operand.vmem [shape: f32[1,16,256], index: 1, kind: input, shape index: {}]
  %s2 = inlined_call_operand.vmem [shape: f32[1,128], index: 2, kind: input, shape index: {}]
  %s3 = inlined_call_operand.vmem [shape: f32[2,225,128], index: 3, kind: output, shape index: {}]
  %s4 = sld [smem:[#allocation0]]
  $region45: #{embed_net_forward.4} parent=0
    _
  %s6 = ssub.s32 1, %s4
  %s7 = scalar_select 0, %s6, %s4
  loop: start=0, step=1, limit=4
  $region2: #{embed_net_forward.4} parent=0 // loop_pre_header
    _
  $region3: #{embed_net_forward.4} parent=0 // loop_header
    %s9 = sphi 0, %s13
    %p10 = scmp.ge.s32.totalorder %s9, 4
    %s19 = sphi 0, %s21
    %s22 = sphi 0, %s19
    %s23 = sphi 0, %s22
    %s39 = sphi 0, %s23
    %s43 = sphi 0, %s43
    %s45 = sphi 0, %s43
    %s46 = sphi 0, %s45
    %s60 = sphi 0, %s46
    %s64 = sphi 0, %s64
    %s66 = sphi 0, %s64
    %s67 = sphi 0, %s66
    %s81 = sphi 0, %s67
    %s87 = sphi 0, %s89
    %s90 = sphi 0, %s87
    %s91 = sphi 0, %s90
    %s107 = sphi 0, %s91
  $region4: #{embed_net_forward.4} parent=0 // loop_header_branch
    %12 = sbr.rel (%p10) target = $region8
  $region5: #{embed_net_forward.4} parent=0 // loop_body
    %s14 = ssub.s32 %s9, 1
    %s15 = ssub.s32 %s9, 2
    %s16 = sadd.s32 %s9, 1
    %s17 = ssub.s32 %s9, %s16
    %p18 = scmp.eq.s32.totalorder %s17, 0
    %s20 = sadd.s32 %s19, 1
    %s21 = scalar_select %p18, %s19, %s20
    %p24 = pneg %p18
    %p25 = scmp.eq.s32.totalorder %s9, 1
    %p26 = por %p24, %p25
    %p27 = scmp.ne.s32.totalorder %s19, %s22
    %p28 = scmp.eq.s32.totalorder %s9, 0
    %p29 = por %p27, %p28
    %p30 = scmp.ne.s32.totalorder %s19, %s22
    %p31 = scmp.eq.s32.totalorder %s14, 1
    %p32 = por %p30, %p31
    %p33 = scmp.ne.s32.totalorder %s22, %s23
    %p34 = scmp.eq.s32.totalorder %s14, 0
    %p35 = por %p33, %p34
    %p36 = scmp.ne.s32.totalorder %s22, %s23
    %p37 = scmp.eq.s32.totalorder %s15, 1
    %p38 = por %p36, %p37
    %p40 = scmp.ne.s32.totalorder %s23, %s39
    %p41 = scmp.eq.s32.totalorder %s15, 0
    %p42 = por %p40, %p41
    %s44 = sadd.s32 %s43, 1
    %p47 = scmp.eq.s32.totalorder %s9, 1
    %p48 = scmp.ne.s32.totalorder %s43, %s45
    %p49 = scmp.eq.s32.totalorder %s9, 0
    %p50 = por %p48, %p49
    %p51 = scmp.ne.s32.totalorder %s43, %s45
    %p52 = scmp.eq.s32.totalorder %s14, 1
    %p53 = por %p51, %p52
    %p54 = scmp.ne.s32.totalorder %s45, %s46
    %p55 = scmp.eq.s32.totalorder %s14, 0
    %p56 = por %p54, %p55
    %p57 = scmp.ne.s32.totalorder %s45, %s46
    %p58 = scmp.eq.s32.totalorder %s15, 1
    %p59 = por %p57, %p58
    %p61 = scmp.ne.s32.totalorder %s46, %s60
    %p62 = scmp.eq.s32.totalorder %s15, 0
    %p63 = por %p61, %p62
    %s65 = sadd.s32 %s64, 1
    %p68 = scmp.eq.s32.totalorder %s9, 1
    %p69 = scmp.ne.s32.totalorder %s64, %s66
    %p70 = scmp.eq.s32.totalorder %s9, 0
    %p71 = por %p69, %p70
    %p72 = scmp.ne.s32.totalorder %s64, %s66
    %p73 = scmp.eq.s32.totalorder %s14, 1
    %p74 = por %p72, %p73
    %p75 = scmp.ne.s32.totalorder %s66, %s67
    %p76 = scmp.eq.s32.totalorder %s14, 0
    %p77 = por %p75, %p76
    %p78 = scmp.ne.s32.totalorder %s66, %s67
    %p79 = scmp.eq.s32.totalorder %s15, 1
    %p80 = por %p78, %p79
    %p82 = scmp.ne.s32.totalorder %s67, %s81
    %p83 = scmp.eq.s32.totalorder %s15, 0
    %p84 = por %p82, %p83
    %s85 = ssub.s32 %s9, %s16
    %p86 = scmp.eq.s32.totalorder %s85, 0
    %s88 = sadd.s32 %s87, 1
    %s89 = scalar_select %p86, %s87, %s88
    %p92 = pneg %p86
    %p93 = scmp.eq.s32.totalorder %s9, 1
    %p94 = por %p92, %p93
    %p95 = scmp.ne.s32.totalorder %s87, %s90
    %p96 = scmp.eq.s32.totalorder %s9, 0
    %p97 = por %p95, %p96
    %p98 = scmp.ne.s32.totalorder %s87, %s90
    %p99 = scmp.eq.s32.totalorder %s14, 1
    %p100 = por %p98, %p99
    %p101 = scmp.ne.s32.totalorder %s90, %s91
    %p102 = scmp.eq.s32.totalorder %s14, 0
    %p103 = por %p101, %p102
    %p104 = scmp.ne.s32.totalorder %s90, %s91
    %p105 = scmp.eq.s32.totalorder %s15, 1
    %p106 = por %p104, %p105
    %p108 = scmp.ne.s32.totalorder %s91, %s107
    %p109 = scmp.eq.s32.totalorder %s15, 0
    %p110 = por %p108, %p109
    %p111 = scmp.le.s32.totalorder 1, %s9
    %p112 = scmp.lt.s32.totalorder %s9, 3
    %p113 = pnand %p111, %p112
    %p114 = pneg %p113
    // Predicated region
    $region9: #{embed_net_forward.4} parent=5 // pred_check
      _
    $region10: #{embed_net_forward.4} parent=5 // pred_check_branch
      %116 = sbr.rel (%p113) target = $region12
    $region11: #{embed_net_forward.4} parent=5 // pred_region
      %s117 = ssub.s32 %s9, 1
      // Predicated region
      $region13: #{embed_net_forward.4} parent=11 // pred_check
        %p118 = pneg %p56
      $region14: #{embed_net_forward.4} parent=11 // pred_check_branch
        %120 = sbr.rel (%p118) target = $region16
      $region15: #{embed_net_forward.4} parent=11 // pred_region
        _
      $region16: #{embed_net_forward.4} parent=11 // pred_fallthru
        _
      // Predicated region
      $region17: #{embed_net_forward.4} parent=11 // pred_check
        %p121 = pneg %p77
      $region18: #{embed_net_forward.4} parent=11 // pred_check_branch
        %123 = sbr.rel (%p121) target = $region20
      $region19: #{embed_net_forward.4} parent=11 // pred_region
        _
      $region20: #{embed_net_forward.4} parent=11 // pred_fallthru
        _
    $region12: #{embed_net_forward.4} parent=5 // pred_fallthru
      _
    %p124 = scmp.lt.s32.totalorder %s9, 2
    // Predicated region
    $region21: #{embed_net_forward.4} parent=5 // pred_check
      %p125 = pneg %p124
    $region22: #{embed_net_forward.4} parent=5 // pred_check_branch
      %127 = sbr.rel (%p125) target = $region24
    $region23: #{embed_net_forward.4} parent=5 // pred_region
      // Predicated region
      $region25: #{embed_net_forward.4} parent=23 // pred_check
        %p128 = pneg %p29
      $region26: #{embed_net_forward.4} parent=23 // pred_check_branch
        %130 = sbr.rel (%p128) target = $region28
      $region27: #{embed_net_forward.4} parent=23 // pred_region
        %p131 = scmp.lt.s32.totalorder %s9, 1
        %s132 = scalar_select %p131, %s9, 1
        %s133 = smul.addr %s132, 29
        %s134 = smul.addr %s133, 8
        %s135 = scalar_lea.vmem %s0, %s134
      $region28: #{embed_net_forward.4} parent=23 // pred_fallthru
        _
    $region24: #{embed_net_forward.4} parent=5 // pred_fallthru
      _
    %p136 = scmp.le.s32.totalorder 1, %s9
    %p137 = scmp.lt.s32.totalorder %s9, 3
    %p138 = pnand %p136, %p137
    %p139 = pneg %p138
    // Predicated region
    $region29: #{embed_net_forward.4} parent=5 // pred_check
      _
    $region30: #{embed_net_forward.4} parent=5 // pred_check_branch
      %141 = sbr.rel (%p138) target = $region32
    $region31: #{embed_net_forward.4} parent=5 // pred_region
      %s142 = ssub.s32 %s9, 1
      %p143 = scmp.lt.s32.totalorder %s14, 1
      %s144 = scalar_select %p143, %s14, 1
      %s145 = smul.addr %s144, 29
      %s146 = smul.addr %s145, 8
      %s147 = scalar_lea.vmem %s0, %s146
      %p148 = pneg %p35
      %p149 = pneg %p32
      %p150 = pneg %p56
      %p151 = pneg %p53
      %p152 = pneg %p77
      %p153 = pneg %p74
      %p154 = pneg %p103
      %p155 = pneg %p100
      %p156 = scmp.lt.s32.totalorder %s14, 1
      %s157 = scalar_select %p156, %s14, 1
      %s158 = smul.addr %s157, 29
      %s159 = smul.addr %s158, 8
      %s160 = scalar_lea.vmem %s3, %s159
      %p161 = scmp.lt.s32.totalorder %s14, 1
      %s162 = scalar_select %p161, %s14, 1
      %s163 = smul.addr %s162, 29
      %s164 = smul.addr %s163, 8
      %s165 = scalar_lea.vmem %s0, %s164
      %p166 = scmp.lt.s32.totalorder %s14, 1
      %s167 = scalar_select %p166, %s14, 1
      %s168 = smul.addr %s167, 29
      %s169 = smul.addr %s168, 8
      %s170 = scalar_lea.vmem %s3, %s169
      %v171 = vld [vmem:[%s165] sm:$0xff]
      %v172 = vld [vmem:[%s165 + $0x8] sm:$0xff]
      %v173 = vld [vmem:[%s165 + $0x10] sm:$0xff]
      %v174 = vld [vmem:[%s165 + $0x18] sm:$0xff]
      %v175 = vld [vmem:[%s165 + $0x20] sm:$0xff]
      %v176 = vld [vmem:[%s165 + $0x28] sm:$0xff]
      %v177 = vld [vmem:[%s165 + $0x30] sm:$0xff]
      %v178 = vld [vmem:[%s165 + $0x38] sm:$0xff]
      %v179 = vld [vmem:[%s165 + $0x40] sm:$0xff]
      %v180 = vld [vmem:[%s165 + $0x48] sm:$0xff]
      %v181 = vld [vmem:[%s165 + $0x50] sm:$0xff]
      %v182 = vld [vmem:[%s165 + $0x58] sm:$0xff]
      %v183 = vld [vmem:[%s165 + $0x60] sm:$0xff]
      %v184 = vld [vmem:[%s165 + $0x68] sm:$0xff]
      %v185 = vld [vmem:[%s165 + $0x70] sm:$0xff]
      %v186 = vld [vmem:[%s165 + $0x78] sm:$0xff]
      %v187 = vld [vmem:[%s165 + $0x80] sm:$0xff]
      %v188 = vld [vmem:[%s165 + $0x88] sm:$0xff]
      %v189 = vld [vmem:[%s165 + $0x90] sm:$0xff]
      %v190 = vld [vmem:[%s165 + $0x98] sm:$0xff]
      %v191 = vld [vmem:[%s165 + $0xa0] sm:$0xff]
      %v192 = vld [vmem:[%s165 + $0xa8] sm:$0xff]
      %v193 = vld [vmem:[%s165 + $0xb0] sm:$0xff]
      %v194 = vld [vmem:[%s165 + $0xb8] sm:$0xff]
      %v195 = vld [vmem:[%s165 + $0xc0] sm:$0xff]
      %v196 = vld [vmem:[%s165 + $0xc8] sm:$0xff]
      %v197 = vld [vmem:[%s165 + $0xd0] sm:$0xff]
      %v198 = vld [vmem:[%s165 + $0xd8] sm:$0xff]
      %v199 = vld [vmem:[%s165 + $0xe0] sm:$0x1]
      %v200 = vld [vmem:[%s1] sm:$0xff]
      %v201 = vld [vmem:[%s1 + $0x8] sm:$0xff]
      %v202 = vld [vmem:[%s1 + $0x10] sm:$0xff]
      %v203 = vld [vmem:[%s1 + $0x18] sm:$0xff]
      %vm204 = vcmask 130048
      %v206 = vsel %vm204, %v171, 0
      %v209 = vsel %vm204, %v172, 0
      %v212 = vsel %vm204, %v173, 0
      %v215 = vsel %vm204, %v174, 0
      %v218 = vsel %vm204, %v175, 0
      %v221 = vsel %vm204, %v176, 0
      %v224 = vsel %vm204, %v177, 0
      %v227 = vsel %vm204, %v178, 0
      %v230 = vsel %vm204, %v179, 0
      %v233 = vsel %vm204, %v180, 0
      %v236 = vsel %vm204, %v181, 0
      %v239 = vsel %vm204, %v182, 0
      %v242 = vsel %vm204, %v183, 0
      %v245 = vsel %vm204, %v184, 0
      %v248 = vsel %vm204, %v185, 0
      %v251 = vsel %vm204, %v186, 0
      %v254 = vsel %vm204, %v187, 0
      %v257 = vsel %vm204, %v188, 0
      %v260 = vsel %vm204, %v189, 0
      %v263 = vsel %vm204, %v190, 0
      %v266 = vsel %vm204, %v191, 0
      %v269 = vsel %vm204, %v192, 0
      %v272 = vsel %vm204, %v193, 0
      %v275 = vsel %vm204, %v194, 0
      %v278 = vsel %vm204, %v195, 0
      %v281 = vsel %vm204, %v196, 0
      %v284 = vsel %vm204, %v197, 0
      %v287 = vsel %vm204, %v198, 0
      %v290 = vsel %vm204, %v199, 0
      %292 = vmatprep.subr.mxu0 %v201
      %293 = vmatpush1.msra.mxu0 %v200
      %294 = vmatprep.subr.mxu0 %v203
      %295 = vmatpush1.msra.mxu0 %v202
      %296 = vmatprep.subr.mxu0 0.0
      %297 = vmatpush1.msra.mxu0 0.0
      %298 = vmatprep.subr.mxu0 0.0
      %299 = vmatpush1.msra.mxu0 0.0
      %300 = vmatprep.subr.mxu0 0.0
      %301 = vmatpush1.msra.mxu0 0.0
      %302 = vmatprep.subr.mxu0 0.0
      %303 = vmatpush1.msra.mxu0 0.0
      %304 = vmatprep.subr.mxu0 0.0
      %305 = vmatpush1.msra.mxu0 0.0
      %306 = vmatprep.subr.mxu0 0.0
      %307 = vmatpush1.msra.mxu0 0.0
      %308 = vmatprep.subr.mxu0 0.0
      %309 = vmatpush1.msra.mxu0 0.0
      %310 = vmatprep.subr.mxu0 0.0
      %311 = vmatpush1.msra.mxu0 0.0
      %312 = vmatprep.subr.mxu0 0.0
      %313 = vmatpush1.msra.mxu0 0.0
      %314 = vmatprep.subr.mxu0 0.0
      %315 = vmatpush1.msra.mxu0 0.0
      %316 = vmatprep.subr.mxu0 0.0
      %317 = vmatpush1.msra.mxu0 0.0
      %318 = vmatprep.subr.mxu0 0.0
      %319 = vmatpush1.msra.mxu0 0.0
      %320 = vmatprep.subr.mxu0 0.0
      %321 = vmatpush1.msra.mxu0 0.0
      %322 = vmatprep.subr.mxu0 0.0
      %323 = vmatpush1.msra.mxu0 0.0
      %324 = vmatprep.subr.mxu0 0.0
      %325 = vmatpush1.msra.mxu0 0.0
      %326 = vmatprep.subr.mxu0 0.0
      %327 = vmatpush1.msra.mxu0 0.0
      %328 = vmatprep.subr.mxu0 0.0
      %329 = vmatpush1.msra.mxu0 0.0
      %330 = vmatprep.subr.mxu0 0.0
      %331 = vmatpush1.msra.mxu0 0.0
      %332 = vmatprep.subr.mxu0 0.0
      %333 = vmatpush1.msra.mxu0 0.0
      %334 = vmatprep.subr.mxu0 0.0
      %335 = vmatpush1.msra.mxu0 0.0
      %336 = vmatprep.subr.mxu0 0.0
      %337 = vmatpush1.msra.mxu0 0.0
      %338 = vmatprep.subr.mxu0 0.0
      %339 = vmatpush1.msra.mxu0 0.0
      %340 = vmatprep.subr.mxu0 0.0
      %341 = vmatpush1.msra.mxu0 0.0
      %342 = vmatprep.subr.mxu0 0.0
      %343 = vmatpush1.msra.mxu0 0.0
      %344 = vmatprep.subr.mxu0 0.0
      %345 = vmatpush1.msra.mxu0 0.0
      %346 = vmatprep.subr.mxu0 0.0
      %347 = vmatpush1.msra.mxu0 0.0
      %348 = vmatprep.subr.mxu0 0.0
      %349 = vmatpush1.msra.mxu0 0.0
      %350 = vmatprep.subr.mxu0 0.0
      %351 = vmatpush1.msra.mxu0 0.0
      %352 = vmatprep.subr.mxu0 0.0
      %353 = vmatpush1.msra.mxu0 0.0
      %354 = vmatprep.subr.mxu0 0.0
      %355 = vmatpush1.msra.mxu0 0.0
      %356 = vmatprep.mubr.f32.mxu0 0.0
      %357 = vmatmul.mubr.f32.gmra.mrb[0].mxu0 %v206
      %v358 = vpop.f32.mrb[0].mxu0
      %v359 = vadd.f32 0.0, %v358
      %v360 = vpop.f32.mrb[0].mxu0
      %v361 = vadd.f32 0.0, %v360
      %362 = vmatprep.mubr.f32.mxu0 0.0
      %363 = vmatmul.mubr.f32.gmra.mrb[0].mxu0 %v209
      %v364 = vpop.f32.mrb[0].mxu0
      %v365 = vadd.f32 0.0, %v364
      %v366 = vpop.f32.mrb[0].mxu0
      %v367 = vadd.f32 0.0, %v366
      %368 = vmatprep.mubr.f32.mxu0 0.0
      %369 = vmatmul.mubr.f32.gmra.mrb[0].mxu0 %v212
      %v370 = vpop.f32.mrb[0].mxu0
      %v371 = vadd.f32 0.0, %v370
      %v372 = vpop.f32.mrb[0].mxu0
      %v373 = vadd.f32 0.0, %v372
      %374 = vmatprep.mubr.f32.mxu0 0.0
      %375 = vmatmul.mubr.f32.gmra.mrb[0].mxu0 %v215
      %v376 = vpop.f32.mrb[0].mxu0
      %v377 = vadd.f32 0.0, %v376
      %v378 = vpop.f32.mrb[0].mxu0
      %v379 = vadd.f32 0.0, %v378
      %380 = vmatprep.mubr.f32.mxu0 0.0
      %381 = vmatmul.mubr.f32.gmra.mrb[0].mxu0 %v218
      %v382 = vpop.f32.mrb[0].mxu0
      %v383 = vadd.f32 0.0, %v382
      %v384 = vpop.f32.mrb[0].mxu0
      %v385 = vadd.f32 0.0, %v384
      %386 = vmatprep.mubr.f32.mxu0 0.0
      %387 = vmatmul.mubr.f32.gmra.mrb[0].mxu0 %v221
      %v388 = vpop.f32.mrb[0].mxu0
      %v389 = vadd.f32 0.0, %v388
      %v390 = vpop.f32.mrb[0].mxu0
      %v391 = vadd.f32 0.0, %v390
      %392 = vmatprep.mubr.f32.mxu0 0.0
      %393 = vmatmul.mubr.f32.gmra.mrb[0].mxu0 %v224
      %v394 = vpop.f32.mrb[0].mxu0
      %v395 = vadd.f32 0.0, %v394
      %v396 = vpop.f32.mrb[0].mxu0
      %v397 = vadd.f32 0.0, %v396
      %398 = vmatprep.mubr.f32.mxu0 0.0
      %399 = vmatmul.mubr.f32.gmra.mrb[0].mxu0 %v227
      %v400 = vpop.f32.mrb[0].mxu0
      %v401 = vadd.f32 0.0, %v400
      %v402 = vpop.f32.mrb[0].mxu0
      %v403 = vadd.f32 0.0, %v402
      %404 = vmatprep.mubr.f32.mxu0 0.0
      %405 = vmatmul.mubr.f32.gmra.mrb[0].mxu0 %v230
      %v406 = vpop.f32.mrb[0].mxu0
      %v407 = vadd.f32 0.0, %v406
      %v408 = vpop.f32.mrb[0].mxu0
      %v409 = vadd.f32 0.0, %v408
      %410 = vmatprep.mubr.f32.mxu0 0.0
      %411 = vmatmul.mubr.f32.gmra.mrb[0].mxu0 %v233
      %v412 = vpop.f32.mrb[0].mxu0
      %v413 = vadd.f32 0.0, %v412
      %v414 = vpop.f32.mrb[0].mxu0
      %v415 = vadd.f32 0.0, %v414
      %416 = vmatprep.mubr.f32.mxu0 0.0
      %417 = vmatmul.mubr.f32.gmra.mrb[0].mxu0 %v236
      %v418 = vpop.f32.mrb[0].mxu0
      %v419 = vadd.f32 0.0, %v418
      %v420 = vpop.f32.mrb[0].mxu0
      %v421 = vadd.f32 0.0, %v420
      %422 = vmatprep.mubr.f32.mxu0 0.0
      %423 = vmatmul.mubr.f32.gmra.mrb[0].mxu0 %v239
      %v424 = vpop.f32.mrb[0].mxu0
      %v425 = vadd.f32 0.0, %v424
      %v426 = vpop.f32.mrb[0].mxu0
      %v427 = vadd.f32 0.0, %v426
      %428 = vmatprep.mubr.f32.mxu0 0.0
      %429 = vmatmul.mubr.f32.gmra.mrb[0].mxu0 %v242
      %v430 = vpop.f32.mrb[0].mxu0
      %v431 = vadd.f32 0.0, %v430
      %v432 = vpop.f32.mrb[0].mxu0
      %v433 = vadd.f32 0.0, %v432
      %434 = vmatprep.mubr.f32.mxu0 0.0
      %435 = vmatmul.mubr.f32.gmra.mrb[0].mxu0 %v245
      %v436 = vpop.f32.mrb[0].mxu0
      %v437 = vadd.f32 0.0, %v436
      %v438 = vpop.f32.mrb[0].mxu0
      %v439 = vadd.f32 0.0, %v438
      %440 = vmatprep.mubr.f32.mxu0 0.0
      %441 = vmatmul.mubr.f32.gmra.mrb[0].mxu0 %v248
      %v442 = vpop.f32.mrb[0].mxu0
      %v443 = vadd.f32 0.0, %v442
      %v444 = vpop.f32.mrb[0].mxu0
      %v445 = vadd.f32 0.0, %v444
      %446 = vmatprep.mubr.f32.mxu0 0.0
      %447 = vmatmul.mubr.f32.gmra.mrb[0].mxu0 %v251
      %v448 = vpop.f32.mrb[0].mxu0
      %v449 = vadd.f32 0.0, %v448
      %v450 = vpop.f32.mrb[0].mxu0
      %v451 = vadd.f32 0.0, %v450
      %452 = vmatprep.mubr.f32.mxu0 0.0
      %453 = vmatmul.mubr.f32.gmra.mrb[0].mxu0 %v254
      %v454 = vpop.f32.mrb[0].mxu0
      %v455 = vadd.f32 0.0, %v454
      %v456 = vpop.f32.mrb[0].mxu0
      %v457 = vadd.f32 0.0, %v456
      %458 = vmatprep.mubr.f32.mxu0 0.0
      %459 = vmatmul.mubr.f32.gmra.mrb[0].mxu0 %v257
      %v460 = vpop.f32.mrb[0].mxu0
      %v461 = vadd.f32 0.0, %v460
      %v462 = vpop.f32.mrb[0].mxu0
      %v463 = vadd.f32 0.0, %v462
      %464 = vmatprep.mubr.f32.mxu0 0.0
      %465 = vmatmul.mubr.f32.gmra.mrb[0].mxu0 %v260
      %v466 = vpop.f32.mrb[0].mxu0
      %v467 = vadd.f32 0.0, %v466
      %v468 = vpop.f32.mrb[0].mxu0
      %v469 = vadd.f32 0.0, %v468
      %470 = vmatprep.mubr.f32.mxu0 0.0
      %471 = vmatmul.mubr.f32.gmra.mrb[0].mxu0 %v263
      %v472 = vpop.f32.mrb[0].mxu0
      %v473 = vadd.f32 0.0, %v472
      %v474 = vpop.f32.mrb[0].mxu0
      %v475 = vadd.f32 0.0, %v474
      %476 = vmatprep.mubr.f32.mxu0 0.0
      %477 = vmatmul.mubr.f32.gmra.mrb[0].mxu0 %v266
      %v478 = vpop.f32.mrb[0].mxu0
      %v479 = vadd.f32 0.0, %v478
      %v480 = vpop.f32.mrb[0].mxu0
      %v481 = vadd.f32 0.0, %v480
      %482 = vmatprep.mubr.f32.mxu0 0.0
      %483 = vmatmul.mubr.f32.gmra.mrb[0].mxu0 %v269
      %v484 = vpop.f32.mrb[0].mxu0
      %v485 = vadd.f32 0.0, %v484
      %v486 = vpop.f32.mrb[0].mxu0
      %v487 = vadd.f32 0.0, %v486
      %488 = vmatprep.mubr.f32.mxu0 0.0
      %489 = vmatmul.mubr.f32.gmra.mrb[0].mxu0 %v272
      %v490 = vpop.f32.mrb[0].mxu0
      %v491 = vadd.f32 0.0, %v490
      %v492 = vpop.f32.mrb[0].mxu0
      %v493 = vadd.f32 0.0, %v492
      %494 = vmatprep.mubr.f32.mxu0 0.0
      %495 = vmatmul.mubr.f32.gmra.mrb[0].mxu0 %v275
      %v496 = vpop.f32.mrb[0].mxu0
      %v497 = vadd.f32 0.0, %v496
      %v498 = vpop.f32.mrb[0].mxu0
      %v499 = vadd.f32 0.0, %v498
      %500 = vmatprep.mubr.f32.mxu0 0.0
      %501 = vmatmul.mubr.f32.gmra.mrb[0].mxu0 %v278
      %v502 = vpop.f32.mrb[0].mxu0
      %v503 = vadd.f32 0.0, %v502
      %v504 = vpop.f32.mrb[0].mxu0
      %v505 = vadd.f32 0.0, %v504
      %506 = vmatprep.mubr.f32.mxu0 0.0
      %507 = vmatmul.mubr.f32.gmra.mrb[0].mxu0 %v281
      %v508 = vpop.f32.mrb[0].mxu0
      %v509 = vadd.f32 0.0, %v508
      %v510 = vpop.f32.mrb[0].mxu0
      %v511 = vadd.f32 0.0, %v510
      %512 = vmatprep.mubr.f32.mxu0 0.0
      %513 = vmatmul.mubr.f32.gmra.mrb[0].mxu0 %v284
      %v514 = vpop.f32.mrb[0].mxu0
      %v515 = vadd.f32 0.0, %v514
      %v516 = vpop.f32.mrb[0].mxu0
      %v517 = vadd.f32 0.0, %v516
      %518 = vmatprep.mubr.f32.mxu0 0.0
      %519 = vmatmul.mubr.f32.gmra.mrb[0].mxu0 %v287
      %v520 = vpop.f32.mrb[0].mxu0
      %v521 = vadd.f32 0.0, %v520
      %v522 = vpop.f32.mrb[0].mxu0
      %v523 = vadd.f32 0.0, %v522
      %524 = vmatprep.mubr.f32.mxu0 0.0
      %525 = vmatmul.mubr.f32.gmra.mrb[0].mxu0 %v290
      %v526 = vpop.f32.mrb[0].mxu0
      %v527 = vadd.f32 0.0, %v526
      %v528 = vpop.f32.mrb[0].mxu0
      %v529 = vadd.f32 0.0, %v528
      %530 = vdwg.mxu0
      %531 = vst [vmem:[#allocation2] sm:$0xff] %v359
      %532 = vst [vmem:[#allocation2 + $0x8] sm:$0xff] %v361
      %533 = vst [vmem:[#allocation2 + $0x10] sm:$0xff] %v365
      %534 = vst [vmem:[#allocation2 + $0x18] sm:$0xff] %v367
      %535 = vst [vmem:[#allocation2 + $0x20] sm:$0xff] %v371
      %536 = vst [vmem:[#allocation2 + $0x28] sm:$0xff] %v373
      %537 = vst [vmem:[#allocation2 + $0x30] sm:$0xff] %v377
      %538 = vst [vmem:[#allocation2 + $0x38] sm:$0xff] %v379
      %539 = vst [vmem:[#allocation2 + $0x40] sm:$0xff] %v383
      %540 = vst [vmem:[#allocation2 + $0x48] sm:$0xff] %v385
      %541 = vst [vmem:[#allocation2 + $0x50] sm:$0xff] %v389
      %542 = vst [vmem:[#allocation2 + $0x58] sm:$0xff] %v391
      %543 = vst [vmem:[#allocation2 + $0x60] sm:$0xff] %v395
      %544 = vst [vmem:[#allocation2 + $0x68] sm:$0xff] %v397
      %545 = vst [vmem:[#allocation2 + $0x70] sm:$0xff] %v401
      %546 = vst [vmem:[#allocation2 + $0x78] sm:$0xff] %v403
      %547 = vst [vmem:[#allocation2 + $0x80] sm:$0xff] %v407
      %548 = vst [vmem:[#allocation2 + $0x88] sm:$0xff] %v409
      %549 = vst [vmem:[#allocation2 + $0x90] sm:$0xff] %v413
      %550 = vst [vmem:[#allocation2 + $0x98] sm:$0xff] %v415
      %551 = vst [vmem:[#allocation2 + $0xa0] sm:$0xff] %v419
      %552 = vst [vmem:[#allocation2 + $0xa8] sm:$0xff] %v421
      %553 = vst [vmem:[#allocation2 + $0xb0] sm:$0xff] %v425
      %554 = vst [vmem:[#allocation2 + $0xb8] sm:$0xff] %v427
      %555 = vst [vmem:[#allocation2 + $0xc0] sm:$0xff] %v431
      %556 = vst [vmem:[#allocation2 + $0xc8] sm:$0xff] %v433
      %557 = vst [vmem:[#allocation2 + $0xd0] sm:$0xff] %v437
      %558 = vst [vmem:[#allocation2 + $0xd8] sm:$0xff] %v439
      %559 = vst [vmem:[#allocation2 + $0xe0] sm:$0xff] %v443
      %560 = vst [vmem:[#allocation2 + $0xe8] sm:$0xff] %v445
      %561 = vst [vmem:[#allocation2 + $0xf0] sm:$0xff] %v449
      %562 = vst [vmem:[#allocation2 + $0xf8] sm:$0xff] %v451
      %563 = vst [vmem:[#allocation2 + $0x100] sm:$0xff] %v455
      %564 = vst [vmem:[#allocation2 + $0x108] sm:$0xff] %v457
      %565 = vst [vmem:[#allocation2 + $0x110] sm:$0xff] %v461
      %566 = vst [vmem:[#allocation2 + $0x118] sm:$0xff] %v463
      %567 = vst [vmem:[#allocation2 + $0x120] sm:$0xff] %v467
      %568 = vst [vmem:[#allocation2 + $0x128] sm:$0xff] %v469
      %569 = vst [vmem:[#allocation2 + $0x130] sm:$0xff] %v473
      %570 = vst [vmem:[#allocation2 + $0x138] sm:$0xff] %v475
      %571 = vst [vmem:[#allocation2 + $0x140] sm:$0xff] %v479
      %572 = vst [vmem:[#allocation2 + $0x148] sm:$0xff] %v481
      %573 = vst [vmem:[#allocation2 + $0x150] sm:$0xff] %v485
      %574 = vst [vmem:[#allocation2 + $0x158] sm:$0xff] %v487
      %575 = vst [vmem:[#allocation2 + $0x160] sm:$0xff] %v491
      %576 = vst [vmem:[#allocation2 + $0x168] sm:$0xff] %v493
      %577 = vst [vmem:[#allocation2 + $0x170] sm:$0xff] %v497
      %578 = vst [vmem:[#allocation2 + $0x178] sm:$0xff] %v499
      %579 = vst [vmem:[#allocation2 + $0x180] sm:$0xff] %v503
      %580 = vst [vmem:[#allocation2 + $0x188] sm:$0xff] %v505
      %581 = vst [vmem:[#allocation2 + $0x190] sm:$0xff] %v509
      %582 = vst [vmem:[#allocation2 + $0x198] sm:$0xff] %v511
      %583 = vst [vmem:[#allocation2 + $0x1a0] sm:$0xff] %v515
      %584 = vst [vmem:[#allocation2 + $0x1a8] sm:$0xff] %v517
      %585 = vst [vmem:[#allocation2 + $0x1b0] sm:$0xff] %v521
      %586 = vst [vmem:[#allocation2 + $0x1b8] sm:$0xff] %v523
      %587 = vst [vmem:[#allocation2 + $0x1c0] sm:$0x1] %v527
      %588 = vst [vmem:[#allocation2 + $0x1c8] sm:$0x1] %v529
      %v589 = vld [vmem:[#allocation2] sm:$0xff]
      %v590 = vld [vmem:[#allocation2 + $0x8] sm:$0xff]
      %v591 = vld [vmem:[#allocation2 + $0x10] sm:$0xff]
      %v592 = vld [vmem:[#allocation2 + $0x18] sm:$0xff]
      %v593 = vld [vmem:[#allocation2 + $0x20] sm:$0xff]
      %v594 = vld [vmem:[#allocation2 + $0x28] sm:$0xff]
      %v595 = vld [vmem:[#allocation2 + $0x30] sm:$0xff]
      %v596 = vld [vmem:[#allocation2 + $0x38] sm:$0xff]
      %v597 = vld [vmem:[#allocation2 + $0x40] sm:$0xff]
      %v598 = vld [vmem:[#allocation2 + $0x48] sm:$0xff]
      %v599 = vld [vmem:[#allocation2 + $0x50] sm:$0xff]
      %v600 = vld [vmem:[#allocation2 + $0x58] sm:$0xff]
      %v601 = vld [vmem:[#allocation2 + $0x60] sm:$0xff]
      %v602 = vld [vmem:[#allocation2 + $0x68] sm:$0xff]
      %v603 = vld [vmem:[#allocation2 + $0x70] sm:$0xff]
      %v604 = vld [vmem:[#allocation2 + $0x78] sm:$0xff]
      %v605 = vld [vmem:[#allocation2 + $0x80] sm:$0xff]
      %v606 = vld [vmem:[#allocation2 + $0x88] sm:$0xff]
      %v607 = vld [vmem:[#allocation2 + $0x90] sm:$0xff]
      %v608 = vld [vmem:[#allocation2 + $0x98] sm:$0xff]
      %v609 = vld [vmem:[#allocation2 + $0xa0] sm:$0xff]
      %v610 = vld [vmem:[#allocation2 + $0xa8] sm:$0xff]
      %v611 = vld [vmem:[#allocation2 + $0xb0] sm:$0xff]
      %v612 = vld [vmem:[#allocation2 + $0xb8] sm:$0xff]
      %v613 = vld [vmem:[#allocation2 + $0xc0] sm:$0xff]
      %v614 = vld [vmem:[#allocation2 + $0xc8] sm:$0xff]
      %v615 = vld [vmem:[#allocation2 + $0xd0] sm:$0xff]
      %v616 = vld [vmem:[#allocation2 + $0xd8] sm:$0xff]
      %v617 = vld [vmem:[#allocation2 + $0xe0] sm:$0xff]
      %v618 = vld [vmem:[#allocation2 + $0xe8] sm:$0xff]
      %v619 = vld [vmem:[#allocation2 + $0xf0] sm:$0xff]
      %v620 = vld [vmem:[#allocation2 + $0xf8] sm:$0xff]
      %v621 = vld [vmem:[#allocation2 + $0x100] sm:$0xff]
      %v622 = vld [vmem:[#allocation2 + $0x108] sm:$0xff]
      %v623 = vld [vmem:[#allocation2 + $0x110] sm:$0xff]
      %v624 = vld [vmem:[#allocation2 + $0x118] sm:$0xff]
      %v625 = vld [vmem:[#allocation2 + $0x120] sm:$0xff]
      %v626 = vld [vmem:[#allocation2 + $0x128] sm:$0xff]
      %v627 = vld [vmem:[#allocation2 + $0x130] sm:$0xff]
      %v628 = vld [vmem:[#allocation2 + $0x138] sm:$0xff]
      %v629 = vld [vmem:[#allocation2 + $0x140] sm:$0xff]
      %v630 = vld [vmem:[#allocation2 + $0x148] sm:$0xff]
      %v631 = vld [vmem:[#allocation2 + $0x150] sm:$0xff]
      %v632 = vld [vmem:[#allocation2 + $0x158] sm:$0xff]
      %v633 = vld [vmem:[#allocation2 + $0x160] sm:$0xff]
      %v634 = vld [vmem:[#allocation2 + $0x168] sm:$0xff]
      %v635 = vld [vmem:[#allocation2 + $0x170] sm:$0xff]
      %v636 = vld [vmem:[#allocation2 + $0x178] sm:$0xff]
      %v637 = vld [vmem:[#allocation2 + $0x180] sm:$0xff]
      %v638 = vld [vmem:[#allocation2 + $0x188] sm:$0xff]
      %v639 = vld [vmem:[#allocation2 + $0x190] sm:$0xff]
      %v640 = vld [vmem:[#allocation2 + $0x198] sm:$0xff]
      %v641 = vld [vmem:[#allocation2 + $0x1a0] sm:$0xff]
      %v642 = vld [vmem:[#allocation2 + $0x1a8] sm:$0xff]
      %v643 = vld [vmem:[#allocation2 + $0x1b0] sm:$0xff]
      %v644 = vld [vmem:[#allocation2 + $0x1b8] sm:$0xff]
      %v645 = vld [vmem:[#allocation2 + $0x1c0] sm:$0x1]
      %v646 = vld [vmem:[#allocation2 + $0x1c8] sm:$0x1]
      %v647 = vmax.f32 %v589, %v590
      %v648 = vmax.f32 %v591, %v592
      %v649 = vmax.f32 %v593, %v594
      %v650 = vmax.f32 %v595, %v596
      %v651 = vmax.f32 %v597, %v598
      %v652 = vmax.f32 %v599, %v600
      %v653 = vmax.f32 %v601, %v602
      %v654 = vmax.f32 %v603, %v604
      %v655 = vmax.f32 %v605, %v606
      %v656 = vmax.f32 %v607, %v608
      %v657 = vmax.f32 %v609, %v610
      %v658 = vmax.f32 %v611, %v612
      %v659 = vmax.f32 %v613, %v614
      %v660 = vmax.f32 %v615, %v616
      %v661 = vmax.f32 %v617, %v618
      %v662 = vmax.f32 %v619, %v620
      %v663 = vmax.f32 %v621, %v622
      %v664 = vmax.f32 %v623, %v624
      %v665 = vmax.f32 %v625, %v626
      %v666 = vmax.f32 %v627, %v628
      %v667 = vmax.f32 %v629, %v630
      %v668 = vmax.f32 %v631, %v632
      %v669 = vmax.f32 %v633, %v634
      %v670 = vmax.f32 %v635, %v636
      %v671 = vmax.f32 %v637, %v638
      %v672 = vmax.f32 %v639, %v640
      %v673 = vmax.f32 %v641, %v642
      %v674 = vmax.f32 %v643, %v644
      %v675 = vmax.f32 %v645, %v646
      %v676 = vld [vmem:[%s2] sm:$0x1]
      %v678 = vlaneseq
      %v679 = vshrl.u32 %v678, 7
      %v680 = vsub.s32 0, %v679
      %v681 = vrot.slane %v676, %v680
      %v683 = vadd.f32 %v647, %v681
      %v684 = vadd.f32 %v648, %v681
      %v685 = vadd.f32 %v649, %v681
      %v686 = vadd.f32 %v650, %v681
      %v687 = vadd.f32 %v651, %v681
      %v688 = vadd.f32 %v652, %v681
      %v689 = vadd.f32 %v653, %v681
      %v690 = vadd.f32 %v654, %v681
      %v691 = vadd.f32 %v655, %v681
      %v692 = vadd.f32 %v656, %v681
      %v693 = vadd.f32 %v657, %v681
      %v694 = vadd.f32 %v658, %v681
      %v695 = vadd.f32 %v659, %v681
      %v696 = vadd.f32 %v660, %v681
      %v697 = vadd.f32 %v661, %v681
      %v698 = vadd.f32 %v662, %v681
      %v699 = vadd.f32 %v663, %v681
      %v700 = vadd.f32 %v664, %v681
      %v701 = vadd.f32 %v665, %v681
      %v702 = vadd.f32 %v666, %v681
      %v703 = vadd.f32 %v667, %v681
      %v704 = vadd.f32 %v668, %v681
      %v705 = vadd.f32 %v669, %v681
      %v706 = vadd.f32 %v670, %v681
      %v707 = vadd.f32 %v671, %v681
      %v708 = vadd.f32 %v672, %v681
      %v709 = vadd.f32 %v673, %v681
      %v710 = vadd.f32 %v674, %v681
      %v711 = vadd.f32 %v675, %v681
      %v712 = vmax.f32 %v683, 0.0
      %v713 = vmax.f32 %v684, 0.0
      %v714 = vmax.f32 %v685, 0.0
      %v715 = vmax.f32 %v686, 0.0
      %v716 = vmax.f32 %v687, 0.0
      %v717 = vmax.f32 %v688, 0.0
      %v718 = vmax.f32 %v689, 0.0
      %v719 = vmax.f32 %v690, 0.0
      %v720 = vmax.f32 %v691, 0.0
      %v721 = vmax.f32 %v692, 0.0
      %v722 = vmax.f32 %v693, 0.0
      %v723 = vmax.f32 %v694, 0.0
      %v724 = vmax.f32 %v695, 0.0
      %v725 = vmax.f32 %v696, 0.0
      %v726 = vmax.f32 %v697, 0.0
      %v727 = vmax.f32 %v698, 0.0
      %v728 = vmax.f32 %v699, 0.0
      %v729 = vmax.f32 %v700, 0.0
      %v730 = vmax.f32 %v701, 0.0
      %v731 = vmax.f32 %v702, 0.0
      %v732 = vmax.f32 %v703, 0.0
      %v733 = vmax.f32 %v704, 0.0
      %v734 = vmax.f32 %v705, 0.0
      %v735 = vmax.f32 %v706, 0.0
      %v736 = vmax.f32 %v707, 0.0
      %v737 = vmax.f32 %v708, 0.0
      %v738 = vmax.f32 %v709, 0.0
      %v739 = vmax.f32 %v710, 0.0
      %v740 = vmax.f32 %v711, 0.0
      %741 = vst [vmem:[%s170] sm:$0xff] %v712
      %742 = vst [vmem:[%s170 + $0x8] sm:$0xff] %v713
      %743 = vst [vmem:[%s170 + $0x10] sm:$0xff] %v714
      %744 = vst [vmem:[%s170 + $0x18] sm:$0xff] %v715
      %745 = vst [vmem:[%s170 + $0x20] sm:$0xff] %v716
      %746 = vst [vmem:[%s170 + $0x28] sm:$0xff] %v717
      %747 = vst [vmem:[%s170 + $0x30] sm:$0xff] %v718
      %748 = vst [vmem:[%s170 + $0x38] sm:$0xff] %v719
      %749 = vst [vmem:[%s170 + $0x40] sm:$0xff] %v720
      %750 = vst [vmem:[%s170 + $0x48] sm:$0xff] %v721
      %751 = vst [vmem:[%s170 + $0x50] sm:$0xff] %v722
      %752 = vst [vmem:[%s170 + $0x58] sm:$0xff] %v723
      %753 = vst [vmem:[%s170 + $0x60] sm:$0xff] %v724
      %754 = vst [vmem:[%s170 + $0x68] sm:$0xff] %v725
      %755 = vst [vmem:[%s170 + $0x70] sm:$0xff] %v726
      %756 = vst [vmem:[%s170 + $0x78] sm:$0xff] %v727
      %757 = vst [vmem:[%s170 + $0x80] sm:$0xff] %v728
      %758 = vst [vmem:[%s170 + $0x88] sm:$0xff] %v729
      %759 = vst [vmem:[%s170 + $0x90] sm:$0xff] %v730
      %760 = vst [vmem:[%s170 + $0x98] sm:$0xff] %v731
      %761 = vst [vmem:[%s170 + $0xa0] sm:$0xff] %v732
      %762 = vst [vmem:[%s170 + $0xa8] sm:$0xff] %v733
      %763 = vst [vmem:[%s170 + $0xb0] sm:$0xff] %v734
      %764 = vst [vmem:[%s170 + $0xb8] sm:$0xff] %v735
      %765 = vst [vmem:[%s170 + $0xc0] sm:$0xff] %v736
      %766 = vst [vmem:[%s170 + $0xc8] sm:$0xff] %v737
      %767 = vst [vmem:[%s170 + $0xd0] sm:$0xff] %v738
      %768 = vst [vmem:[%s170 + $0xd8] sm:$0xff] %v739
      %769 = vst [vmem:[%s170 + $0xe0] sm:$0x1] %v740
      %p770 = scmp.lt.s32.totalorder %s14, 1
      %s771 = scalar_select %p770, %s14, 1
      %s772 = smul.addr %s771, 29
      %s773 = smul.addr %s772, 8
      %s774 = scalar_lea.vmem %s3, %s773
      // Predicated region
      $region33: #{embed_net_forward.4} parent=31 // pred_check
        %p775 = pneg %p100
      $region34: #{embed_net_forward.4} parent=31 // pred_check_branch
        %777 = sbr.rel (%p775) target = $region36
      $region35: #{embed_net_forward.4} parent=31 // pred_region
        _
      $region36: #{embed_net_forward.4} parent=31 // pred_fallthru
        _
    $region32: #{embed_net_forward.4} parent=5 // pred_fallthru
      _
    %p778 = scmp.le.s32.totalorder 2, %s9
    // Predicated region
    $region37: #{embed_net_forward.4} parent=5 // pred_check
      %p779 = pneg %p778
    $region38: #{embed_net_forward.4} parent=5 // pred_check_branch
      %781 = sbr.rel (%p779) target = $region40
    $region39: #{embed_net_forward.4} parent=5 // pred_region
      %s782 = ssub.s32 %s9, 2
      // Predicated region
      $region41: #{embed_net_forward.4} parent=39 // pred_check
        %p783 = pneg %p106
      $region42: #{embed_net_forward.4} parent=39 // pred_check_branch
        %785 = sbr.rel (%p783) target = $region44
      $region43: #{embed_net_forward.4} parent=39 // pred_region
        %p786 = scmp.lt.s32.totalorder %s15, 1
        %s787 = scalar_select %p786, %s15, 1
        %s788 = smul.addr %s787, 29
        %s789 = smul.addr %s788, 8
        %s790 = scalar_lea.vmem %s3, %s789
      $region44: #{embed_net_forward.4} parent=39 // pred_fallthru
        _
    $region40: #{embed_net_forward.4} parent=5 // pred_fallthru
      _
  $region6: #{embed_net_forward.4} parent=0 // loop_footer
    %s13 = sadd.s32 1, %s9
  $region7: #{embed_net_forward.4} parent=0 // loop_footer_branch
    %8 = sbr.rel target = $region3
  $region8: #{embed_net_forward.4} parent=0 // loop_exit
    _

// kernel: embed_net_forward.5
$region0: #{embed_net_forward.5}
  #allocation0 [shape = 'u32[]', space=smem, size = 0x4, offset = 0x4, fixed_abs, tag = 'smem constant byte address 0x4 - core index']
  #allocation1 [shape = 'u32[144,128]{1,0:T(1,128)}', space=vmem, size = 0x12000, scoped, tag = 'internal scratch']
  %s0 = inlined_call_operand.vmem [shape: f32[2,64,256], index: 0, kind: input, shape index: {}]
  %s1 = inlined_call_operand.vmem [shape: f32[4,256,256], index: 1, kind: input, shape index: {}]
  %s2 = inlined_call_operand.vmem [shape: f32[1,128], index: 2, kind: input, shape index: {}]
  %s3 = inlined_call_operand.vmem [shape: f32[2,55,128], index: 3, kind: output, shape index: {}]
  %s4 = sld [smem:[#allocation0]]
  $region45: #{embed_net_forward.5} parent=0
    _
  %s6 = ssub.s32 1, %s4
  %s7 = scalar_select 0, %s6, %s4
  loop: start=0, step=1, limit=4
  $region2: #{embed_net_forward.5} parent=0 // loop_pre_header
    _
  $region3: #{embed_net_forward.5} parent=0 // loop_header
    %s9 = sphi 0, %s13
    %p10 = scmp.ge.s32.totalorder %s9, 4
    %s19 = sphi 0, %s21
    %s22 = sphi 0, %s19
    %s23 = sphi 0, %s22
    %s39 = sphi 0, %s23
    %s43 = sphi 0, %s43
    %s45 = sphi 0, %s43
    %s46 = sphi 0, %s45
    %s60 = sphi 0, %s46
    %s64 = sphi 0, %s64
    %s66 = sphi 0, %s64
    %s67 = sphi 0, %s66
    %s81 = sphi 0, %s67
    %s87 = sphi 0, %s89
    %s90 = sphi 0, %s87
    %s91 = sphi 0, %s90
    %s107 = sphi 0, %s91
  $region4: #{embed_net_forward.5} parent=0 // loop_header_branch
    %12 = sbr.rel (%p10) target = $region8
  $region5: #{embed_net_forward.5} parent=0 // loop_body
    %s14 = ssub.s32 %s9, 1
    %s15 = ssub.s32 %s9, 2
    %s16 = sadd.s32 %s9, 1
    %s17 = ssub.s32 %s9, %s16
    %p18 = scmp.eq.s32.totalorder %s17, 0
    %s20 = sadd.s32 %s19, 1
    %s21 = scalar_select %p18, %s19, %s20
    %p24 = pneg %p18
    %p25 = scmp.eq.s32.totalorder %s9, 1
    %p26 = por %p24, %p25
    %p27 = scmp.ne.s32.totalorder %s19, %s22
    %p28 = scmp.eq.s32.totalorder %s9, 0
    %p29 = por %p27, %p28
    %p30 = scmp.ne.s32.totalorder %s19, %s22
    %p31 = scmp.eq.s32.totalorder %s14, 1
    %p32 = por %p30, %p31
    %p33 = scmp.ne.s32.totalorder %s22, %s23
    %p34 = scmp.eq.s32.totalorder %s14, 0
    %p35 = por %p33, %p34
    %p36 = scmp.ne.s32.totalorder %s22, %s23
    %p37 = scmp.eq.s32.totalorder %s15, 1
    %p38 = por %p36, %p37
    %p40 = scmp.ne.s32.totalorder %s23, %s39
    %p41 = scmp.eq.s32.totalorder %s15, 0
    %p42 = por %p40, %p41
    %s44 = sadd.s32 %s43, 1
    %p47 = scmp.eq.s32.totalorder %s9, 1
    %p48 = scmp.ne.s32.totalorder %s43, %s45
    %p49 = scmp.eq.s32.totalorder %s9, 0
    %p50 = por %p48, %p49
    %p51 = scmp.ne.s32.totalorder %s43, %s45
    %p52 = scmp.eq.s32.totalorder %s14, 1
    %p53 = por %p51, %p52
    %p54 = scmp.ne.s32.totalorder %s45, %s46
    %p55 = scmp.eq.s32.totalorder %s14, 0
    %p56 = por %p54, %p55
    %p57 = scmp.ne.s32.totalorder %s45, %s46
    %p58 = scmp.eq.s32.totalorder %s15, 1
    %p59 = por %p57, %p58
    %p61 = scmp.ne.s32.totalorder %s46, %s60
    %p62 = scmp.eq.s32.totalorder %s15, 0
    %p63 = por %p61, %p62
    %s65 = sadd.s32 %s64, 1
    %p68 = scmp.eq.s32.totalorder %s9, 1
    %p69 = scmp.ne.s32.totalorder %s64, %s66
    %p70 = scmp.eq.s32.totalorder %s9, 0
    %p71 = por %p69, %p70
    %p72 = scmp.ne.s32.totalorder %s64, %s66
    %p73 = scmp.eq.s32.totalorder %s14, 1
    %p74 = por %p72, %p73
    %p75 = scmp.ne.s32.totalorder %s66, %s67
    %p76 = scmp.eq.s32.totalorder %s14, 0
    %p77 = por %p75, %p76
    %p78 = scmp.ne.s32.totalorder %s66, %s67
    %p79 = scmp.eq.s32.totalorder %s15, 1
    %p80 = por %p78, %p79
    %p82 = scmp.ne.s32.totalorder %s67, %s81
    %p83 = scmp.eq.s32.totalorder %s15, 0
    %p84 = por %p82, %p83
    %s85 = ssub.s32 %s9, %s16
    %p86 = scmp.eq.s32.totalorder %s85, 0
    %s88 = sadd.s32 %s87, 1
    %s89 = scalar_select %p86, %s87, %s88
    %p92 = pneg %p86
    %p93 = scmp.eq.s32.totalorder %s9, 1
    %p94 = por %p92, %p93
    %p95 = scmp.ne.s32.totalorder %s87, %s90
    %p96 = scmp.eq.s32.totalorder %s9, 0
    %p97 = por %p95, %p96
    %p98 = scmp.ne.s32.totalorder %s87, %s90
    %p99 = scmp.eq.s32.totalorder %s14, 1
    %p100 = por %p98, %p99
    %p101 = scmp.ne.s32.totalorder %s90, %s91
    %p102 = scmp.eq.s32.totalorder %s14, 0
    %p103 = por %p101, %p102
    %p104 = scmp.ne.s32.totalorder %s90, %s91
    %p105 = scmp.eq.s32.totalorder %s15, 1
    %p106 = por %p104, %p105
    %p108 = scmp.ne.s32.totalorder %s91, %s107
    %p109 = scmp.eq.s32.totalorder %s15, 0
    %p110 = por %p108, %p109
    %p111 = scmp.le.s32.totalorder 1, %s9
    %p112 = scmp.lt.s32.totalorder %s9, 3
    %p113 = pnand %p111, %p112
    %p114 = pneg %p113
    // Predicated region
    $region9: #{embed_net_forward.5} parent=5 // pred_check
      _
    $region10: #{embed_net_forward.5} parent=5 // pred_check_branch
      %116 = sbr.rel (%p113) target = $region12
    $region11: #{embed_net_forward.5} parent=5 // pred_region
      %s117 = ssub.s32 %s9, 1
      // Predicated region
      $region13: #{embed_net_forward.5} parent=11 // pred_check
        %p118 = pneg %p56
      $region14: #{embed_net_forward.5} parent=11 // pred_check_branch
        %120 = sbr.rel (%p118) target = $region16
      $region15: #{embed_net_forward.5} parent=11 // pred_region
        _
      $region16: #{embed_net_forward.5} parent=11 // pred_fallthru
        _
      // Predicated region
      $region17: #{embed_net_forward.5} parent=11 // pred_check
        %p121 = pneg %p77
      $region18: #{embed_net_forward.5} parent=11 // pred_check_branch
        %123 = sbr.rel (%p121) target = $region20
      $region19: #{embed_net_forward.5} parent=11 // pred_region
        _
      $region20: #{embed_net_forward.5} parent=11 // pred_fallthru
        _
    $region12: #{embed_net_forward.5} parent=5 // pred_fallthru
      _
    %p124 = scmp.lt.s32.totalorder %s9, 2
    // Predicated region
    $region21: #{embed_net_forward.5} parent=5 // pred_check
      %p125 = pneg %p124
    $region22: #{embed_net_forward.5} parent=5 // pred_check_branch
      %127 = sbr.rel (%p125) target = $region24
    $region23: #{embed_net_forward.5} parent=5 // pred_region
      // Predicated region
      $region25: #{embed_net_forward.5} parent=23 // pred_check
        %p128 = pneg %p29
      $region26: #{embed_net_forward.5} parent=23 // pred_check_branch
        %130 = sbr.rel (%p128) target = $region28
      $region27: #{embed_net_forward.5} parent=23 // pred_region
        %p131 = scmp.lt.s32.totalorder %s9, 1
        %s132 = scalar_select %p131, %s9, 1
        %s133 = smul.addr %s132, 16
        %s134 = smul.addr %s133, 8
        %s135 = scalar_lea.vmem %s0, %s134
      $region28: #{embed_net_forward.5} parent=23 // pred_fallthru
        _
    $region24: #{embed_net_forward.5} parent=5 // pred_fallthru
      _
    %p136 = scmp.le.s32.totalorder 1, %s9
    %p137 = scmp.lt.s32.totalorder %s9, 3
    %p138 = pnand %p136, %p137
    %p139 = pneg %p138
    // Predicated region
    $region29: #{embed_net_forward.5} parent=5 // pred_check
      _
    $region30: #{embed_net_forward.5} parent=5 // pred_check_branch
      %141 = sbr.rel (%p138) target = $region32
    $region31: #{embed_net_forward.5} parent=5 // pred_region
      %s142 = ssub.s32 %s9, 1
      %p143 = scmp.lt.s32.totalorder %s14, 1
      %s144 = scalar_select %p143, %s14, 1
      %s145 = smul.addr %s144, 16
      %s146 = smul.addr %s145, 8
      %s147 = scalar_lea.vmem %s0, %s146
      %p148 = pneg %p35
      %p149 = pneg %p32
      %p150 = pneg %p56
      %p151 = pneg %p53
      %p152 = pneg %p77
      %p153 = pneg %p74
      %p154 = pneg %p103
      %p155 = pneg %p100
      %p156 = scmp.lt.s32.totalorder %s14, 1
      %s157 = scalar_select %p156, %s14, 1
      %s158 = smul.addr %s157, 7
      %s159 = smul.addr %s158, 8
      %s160 = scalar_lea.vmem %s3, %s159
      %p161 = scmp.lt.s32.totalorder %s14, 1
      %s162 = scalar_select %p161, %s14, 1
      %s163 = smul.addr %s162, 16
      %s164 = smul.addr %s163, 8
      %s165 = scalar_lea.vmem %s0, %s164
      %p166 = scmp.lt.s32.totalorder %s14, 1
      %s167 = scalar_select %p166, %s14, 1
      %s168 = smul.addr %s167, 7
      %s169 = smul.addr %s168, 8
      %s170 = scalar_lea.vmem %s3, %s169
      %v171 = vld [vmem:[%s165] sm:$0xff]
      %v172 = vld [vmem:[%s165 + $0x8] sm:$0xff]
      %v173 = vld [vmem:[%s165 + $0x10] sm:$0xff]
      %v174 = vld [vmem:[%s165 + $0x18] sm:$0xff]
      %v175 = vld [vmem:[%s165 + $0x20] sm:$0xff]
      %v176 = vld [vmem:[%s165 + $0x28] sm:$0xff]
      %v177 = vld [vmem:[%s165 + $0x30] sm:$0xff]
      %v178 = vld [vmem:[%s165 + $0x38] sm:$0xff]
      %v179 = vld [vmem:[%s165 + $0x40] sm:$0xff]
      %v180 = vld [vmem:[%s165 + $0x48] sm:$0xff]
      %v181 = vld [vmem:[%s165 + $0x50] sm:$0xff]
      %v182 = vld [vmem:[%s165 + $0x58] sm:$0xff]
      %v183 = vld [vmem:[%s165 + $0x60] sm:$0x7f]
      %v184 = vld [vmem:[%s165 + $0x68] sm:$0x7f]
      %v185 = vld [vmem:[%s1] sm:$0xff]
      %v186 = vld [vmem:[%s1 + $0x8] sm:$0xff]
      %v187 = vld [vmem:[%s1 + $0x10] sm:$0xff]
      %v188 = vld [vmem:[%s1 + $0x18] sm:$0xff]
      %v189 = vld [vmem:[%s1 + $0x20] sm:$0xff]
      %v190 = vld [vmem:[%s1 + $0x28] sm:$0xff]
      %v191 = vld [vmem:[%s1 + $0x30] sm:$0xff]
      %v192 = vld [vmem:[%s1 + $0x38] sm:$0xff]
      %v193 = vld [vmem:[%s1 + $0x40] sm:$0xff]
      %v194 = vld [vmem:[%s1 + $0x48] sm:$0xff]
      %v195 = vld [vmem:[%s1 + $0x50] sm:$0xff]
      %v196 = vld [vmem:[%s1 + $0x58] sm:$0xff]
      %v197 = vld [vmem:[%s1 + $0x60] sm:$0xff]
      %v198 = vld [vmem:[%s1 + $0x68] sm:$0xff]
      %v199 = vld [vmem:[%s1 + $0x70] sm:$0xff]
      %v200 = vld [vmem:[%s1 + $0x78] sm:$0xff]
      %v201 = vld [vmem:[%s1 + $0x80] sm:$0xff]
      %v202 = vld [vmem:[%s1 + $0x88] sm:$0xff]
      %v203 = vld [vmem:[%s1 + $0x90] sm:$0xff]
      %v204 = vld [vmem:[%s1 + $0x98] sm:$0xff]
      %v205 = vld [vmem:[%s1 + $0xa0] sm:$0xff]
      %v206 = vld [vmem:[%s1 + $0xa8] sm:$0xff]
      %v207 = vld [vmem:[%s1 + $0xb0] sm:$0xff]
      %v208 = vld [vmem:[%s1 + $0xb8] sm:$0xff]
      %v209 = vld [vmem:[%s1 + $0xc0] sm:$0xff]
      %v210 = vld [vmem:[%s1 + $0xc8] sm:$0xff]
      %v211 = vld [vmem:[%s1 + $0xd0] sm:$0xff]
      %v212 = vld [vmem:[%s1 + $0xd8] sm:$0xff]
      %v213 = vld [vmem:[%s1 + $0xe0] sm:$0xff]
      %v214 = vld [vmem:[%s1 + $0xe8] sm:$0xff]
      %v215 = vld [vmem:[%s1 + $0xf0] sm:$0xff]
      %v216 = vld [vmem:[%s1 + $0xf8] sm:$0xff]
      %v217 = vld [vmem:[%s1 + $0x100] sm:$0xff]
      %v218 = vld [vmem:[%s1 + $0x108] sm:$0xff]
      %v219 = vld [vmem:[%s1 + $0x110] sm:$0xff]
      %v220 = vld [vmem:[%s1 + $0x118] sm:$0xff]
      %v221 = vld [vmem:[%s1 + $0x120] sm:$0xff]
      %v222 = vld [vmem:[%s1 + $0x128] sm:$0xff]
      %v223 = vld [vmem:[%s1 + $0x130] sm:$0xff]
      %v224 = vld [vmem:[%s1 + $0x138] sm:$0xff]
      %v225 = vld [vmem:[%s1 + $0x140] sm:$0xff]
      %v226 = vld [vmem:[%s1 + $0x148] sm:$0xff]
      %v227 = vld [vmem:[%s1 + $0x150] sm:$0xff]
      %v228 = vld [vmem:[%s1 + $0x158] sm:$0xff]
      %v229 = vld [vmem:[%s1 + $0x160] sm:$0xff]
      %v230 = vld [vmem:[%s1 + $0x168] sm:$0xff]
      %v231 = vld [vmem:[%s1 + $0x170] sm:$0xff]
      %v232 = vld [vmem:[%s1 + $0x178] sm:$0xff]
      %v233 = vld [vmem:[%s1 + $0x180] sm:$0xff]
      %v234 = vld [vmem:[%s1 + $0x188] sm:$0xff]
      %v235 = vld [vmem:[%s1 + $0x190] sm:$0xff]
      %v236 = vld [vmem:[%s1 + $0x198] sm:$0xff]
      %v237 = vld [vmem:[%s1 + $0x1a0] sm:$0xff]
      %v238 = vld [vmem:[%s1 + $0x1a8] sm:$0xff]
      %v239 = vld [vmem:[%s1 + $0x1b0] sm:$0xff]
      %v240 = vld [vmem:[%s1 + $0x1b8] sm:$0xff]
      %v241 = vld [vmem:[%s1 + $0x1c0] sm:$0xff]
      %v242 = vld [vmem:[%s1 + $0x1c8] sm:$0xff]
      %v243 = vld [vmem:[%s1 + $0x1d0] sm:$0xff]
      %v244 = vld [vmem:[%s1 + $0x1d8] sm:$0xff]
      %v245 = vld [vmem:[%s1 + $0x1e0] sm:$0xff]
      %v246 = vld [vmem:[%s1 + $0x1e8] sm:$0xff]
      %v247 = vld [vmem:[%s1 + $0x1f0] sm:$0xff]
      %v248 = vld [vmem:[%s1 + $0x1f8] sm:$0xff]
      %v249 = vld [vmem:[%s165] sm:$0xfe]
      %v250 = vld [vmem:[%s165 + $0x8] sm:$0xfe]
      %v251 = vld [vmem:[%s165 + $0x60] sm:$0xff]
      %v252 = vld [vmem:[%s165 + $0x68] sm:$0xff]
      %s253 = scalar_lea.vmem %s1, 512
      %v254 = vld [vmem:[%s253] sm:$0xff]
      %v255 = vld [vmem:[%s253 + $0x8] sm:$0xff]
      %v256 = vld [vmem:[%s253 + $0x10] sm:$0xff]
      %v257 = vld [vmem:[%s253 + $0x18] sm:$0xff]
      %v258 = vld [vmem:[%s253 + $0x20] sm:$0xff]
      %v259 = vld [vmem:[%s253 + $0x28] sm:$0xff]
      %v260 = vld [vmem:[%s253 + $0x30] sm:$0xff]
      %v261 = vld [vmem:[%s253 + $0x38] sm:$0xff]
      %v262 = vld [vmem:[%s253 + $0x40] sm:$0xff]
      %v263 = vld [vmem:[%s253 + $0x48] sm:$0xff]
      %v264 = vld [vmem:[%s253 + $0x50] sm:$0xff]
      %v265 = vld [vmem:[%s253 + $0x58] sm:$0xff]
      %v266 = vld [vmem:[%s253 + $0x60] sm:$0xff]
      %v267 = vld [vmem:[%s253 + $0x68] sm:$0xff]
      %v268 = vld [vmem:[%s253 + $0x70] sm:$0xff]
      %v269 = vld [vmem:[%s253 + $0x78] sm:$0xff]
      %v270 = vld [vmem:[%s253 + $0x80] sm:$0xff]
      %v271 = vld [vmem:[%s253 + $0x88] sm:$0xff]
      %v272 = vld [vmem:[%s253 + $0x90] sm:$0xff]
      %v273 = vld [vmem:[%s253 + $0x98] sm:$0xff]
      %v274 = vld [vmem:[%s253 + $0xa0] sm:$0xff]
      %v275 = vld [vmem:[%s253 + $0xa8] sm:$0xff]
      %v276 = vld [vmem:[%s253 + $0xb0] sm:$0xff]
      %v277 = vld [vmem:[%s253 + $0xb8] sm:$0xff]
      %v278 = vld [vmem:[%s253 + $0xc0] sm:$0xff]
      %v279 = vld [vmem:[%s253 + $0xc8] sm:$0xff]
      %v280 = vld [vmem:[%s253 + $0xd0] sm:$0xff]
      %v281 = vld [vmem:[%s253 + $0xd8] sm:$0xff]
      %v282 = vld [vmem:[%s253 + $0xe0] sm:$0xff]
      %v283 = vld [vmem:[%s253 + $0xe8] sm:$0xff]
      %v284 = vld [vmem:[%s253 + $0xf0] sm:$0xff]
      %v285 = vld [vmem:[%s253 + $0xf8] sm:$0xff]
      %v286 = vld [vmem:[%s253 + $0x100] sm:$0xff]
      %v287 = vld [vmem:[%s253 + $0x108] sm:$0xff]
      %v288 = vld [vmem:[%s253 + $0x110] sm:$0xff]
      %v289 = vld [vmem:[%s253 + $0x118] sm:$0xff]
      %v290 = vld [vmem:[%s253 + $0x120] sm:$0xff]
      %v291 = vld [vmem:[%s253 + $0x128] sm:$0xff]
      %v292 = vld [vmem:[%s253 + $0x130] sm:$0xff]
      %v293 = vld [vmem:[%s253 + $0x138] sm:$0xff]
      %v294 = vld [vmem:[%s253 + $0x140] sm:$0xff]
      %v295 = vld [vmem:[%s253 + $0x148] sm:$0xff]
      %v296 = vld [vmem:[%s253 + $0x150] sm:$0xff]
      %v297 = vld [vmem:[%s253 + $0x158] sm:$0xff]
      %v298 = vld [vmem:[%s253 + $0x160] sm:$0xff]
      %v299 = vld [vmem:[%s253 + $0x168] sm:$0xff]
      %v300 = vld [vmem:[%s253 + $0x170] sm:$0xff]
      %v301 = vld [vmem:[%s253 + $0x178] sm:$0xff]
      %v302 = vld [vmem:[%s253 + $0x180] sm:$0xff]
      %v303 = vld [vmem:[%s253 + $0x188] sm:$0xff]
      %v304 = vld [vmem:[%s253 + $0x190] sm:$0xff]
      %v305 = vld [vmem:[%s253 + $0x198] sm:$0xff]
      %v306 = vld [vmem:[%s253 + $0x1a0] sm:$0xff]
      %v307 = vld [vmem:[%s253 + $0x1a8] sm:$0xff]
      %v308 = vld [vmem:[%s253 + $0x1b0] sm:$0xff]
      %v309 = vld [vmem:[%s253 + $0x1b8] sm:$0xff]
      %v310 = vld [vmem:[%s253 + $0x1c0] sm:$0xff]
      %v311 = vld [vmem:[%s253 + $0x1c8] sm:$0xff]
      %v312 = vld [vmem:[%s253 + $0x1d0] sm:$0xff]
      %v313 = vld [vmem:[%s253 + $0x1d8] sm:$0xff]
      %v314 = vld [vmem:[%s253 + $0x1e0] sm:$0xff]
      %v315 = vld [vmem:[%s253 + $0x1e8] sm:$0xff]
      %v316 = vld [vmem:[%s253 + $0x1f0] sm:$0xff]
      %v317 = vld [vmem:[%s253 + $0x1f8] sm:$0xff]
      %vm332 = vcmask 1046528
      %v333 = vrot.slane %v249, 1
      %v334 = vrot.slane %v173, 1
      %v335 = vsel %vm332, %v333, %v334
      %v336 = vrot.slane %v250, 1
      %v337 = vrot.slane %v174, 1
      %v338 = vsel %vm332, %v336, %v337
      %v339 = vrot.slane %v175, 1
      %v340 = vsel %vm332, %v334, %v339
      %v341 = vrot.slane %v176, 1
      %v342 = vsel %vm332, %v337, %v341
      %v343 = vrot.slane %v177, 1
      %v344 = vsel %vm332, %v339, %v343
      %v345 = vrot.slane %v178, 1
      %v346 = vsel %vm332, %v341, %v345
      %v347 = vrot.slane %v179, 1
      %v348 = vsel %vm332, %v343, %v347
      %v349 = vrot.slane %v180, 1
      %v350 = vsel %vm332, %v345, %v349
      %v351 = vrot.slane %v181, 1
      %v352 = vsel %vm332, %v347, %v351
      %v353 = vrot.slane %v182, 1
      %v354 = vsel %vm332, %v349, %v353
      %v355 = vrot.slane %v251, 1
      %v356 = vsel %vm332, %v351, %v355
      %v357 = vrot.slane %v252, 1
      %v358 = vsel %vm332, %v353, %v357
      %373 = vmatprep.subr.mxu0 %v255
      %374 = vmatpush1.msra.mxu0 %v254
      %375 = vmatprep.subr.mxu0 %v257
      %376 = vmatpush1.msra.mxu0 %v256
      %377 = vmatprep.subr.mxu0 %v259
      %378 = vmatpush1.msra.mxu0 %v258
      %379 = vmatprep.subr.mxu0 %v261
      %380 = vmatpush1.msra.mxu0 %v260
      %381 = vmatprep.subr.mxu0 %v263
      %382 = vmatpush1.msra.mxu0 %v262
      %383 = vmatprep.subr.mxu0 %v265
      %384 = vmatpush1.msra.mxu0 %v264
      %385 = vmatprep.subr.mxu0 %v267
      %386 = vmatpush1.msra.mxu0 %v266
      %387 = vmatprep.subr.mxu0 %v269
      %388 = vmatpush1.msra.mxu0 %v268
      %389 = vmatprep.subr.mxu0 %v271
      %390 = vmatpush1.msra.mxu0 %v270
      %391 = vmatprep.subr.mxu0 %v273
      %392 = vmatpush1.msra.mxu0 %v272
      %393 = vmatprep.subr.mxu0 %v275
      %394 = vmatpush1.msra.mxu0 %v274
      %395 = vmatprep.subr.mxu0 %v277
      %396 = vmatpush1.msra.mxu0 %v276
      %397 = vmatprep.subr.mxu0 %v279
      %398 = vmatpush1.msra.mxu0 %v278
      %399 = vmatprep.subr.mxu0 %v281
      %400 = vmatpush1.msra.mxu0 %v280
      %401 = vmatprep.subr.mxu0 %v283
      %402 = vmatpush1.msra.mxu0 %v282
      %403 = vmatprep.subr.mxu0 %v285
      %404 = vmatpush1.msra.mxu0 %v284
      %405 = vmatprep.subr.mxu0 %v287
      %406 = vmatpush1.msra.mxu0 %v286
      %407 = vmatprep.subr.mxu0 %v289
      %408 = vmatpush1.msra.mxu0 %v288
      %409 = vmatprep.subr.mxu0 %v291
      %410 = vmatpush1.msra.mxu0 %v290
      %411 = vmatprep.subr.mxu0 %v293
      %412 = vmatpush1.msra.mxu0 %v292
      %413 = vmatprep.subr.mxu0 %v295
      %414 = vmatpush1.msra.mxu0 %v294
      %415 = vmatprep.subr.mxu0 %v297
      %416 = vmatpush1.msra.mxu0 %v296
      %417 = vmatprep.subr.mxu0 %v299
      %418 = vmatpush1.msra.mxu0 %v298
      %419 = vmatprep.subr.mxu0 %v301
      %420 = vmatpush1.msra.mxu0 %v300
      %421 = vmatprep.subr.mxu0 %v303
      %422 = vmatpush1.msra.mxu0 %v302
      %423 = vmatprep.subr.mxu0 %v305
      %424 = vmatpush1.msra.mxu0 %v304
      %425 = vmatprep.subr.mxu0 %v307
      %426 = vmatpush1.msra.mxu0 %v306
      %427 = vmatprep.subr.mxu0 %v309
      %428 = vmatpush1.msra.mxu0 %v308
      %429 = vmatprep.subr.mxu0 %v311
      %430 = vmatpush1.msra.mxu0 %v310
      %431 = vmatprep.subr.mxu0 %v313
      %432 = vmatpush1.msra.mxu0 %v312
      %433 = vmatprep.subr.mxu0 %v315
      %434 = vmatpush1.msra.mxu0 %v314
      %435 = vmatprep.subr.mxu0 %v317
      %436 = vmatpush1.msra.mxu0 %v316
      %437 = vmatprep.mubr.f32.mxu0 %v338
      %438 = vmatmul.mubr.f32.gmra.mrb[0].mxu0 %v335
      %v439 = vpop.f32.mrb[0].mxu0
      %v440 = vadd.f32 0.0, %v439
      %v441 = vpop.f32.mrb[0].mxu0
      %v442 = vadd.f32 0.0, %v441
      %443 = vmatprep.mubr.f32.mxu0 %v342
      %444 = vmatmul.mubr.f32.gmra.mrb[0].mxu0 %v340
      %v445 = vpop.f32.mrb[0].mxu0
      %v446 = vadd.f32 0.0, %v445
      %v447 = vpop.f32.mrb[0].mxu0
      %v448 = vadd.f32 0.0, %v447
      %449 = vmatprep.mubr.f32.mxu0 %v346
      %450 = vmatmul.mubr.f32.gmra.mrb[0].mxu0 %v344
      %v451 = vpop.f32.mrb[0].mxu0
      %v452 = vadd.f32 0.0, %v451
      %v453 = vpop.f32.mrb[0].mxu0
      %v454 = vadd.f32 0.0, %v453
      %455 = vmatprep.mubr.f32.mxu0 %v350
      %456 = vmatmul.mubr.f32.gmra.mrb[0].mxu0 %v348
      %v457 = vpop.f32.mrb[0].mxu0
      %v458 = vadd.f32 0.0, %v457
      %v459 = vpop.f32.mrb[0].mxu0
      %v460 = vadd.f32 0.0, %v459
      %461 = vmatprep.mubr.f32.mxu0 %v354
      %462 = vmatmul.mubr.f32.gmra.mrb[0].mxu0 %v352
      %v463 = vpop.f32.mrb[0].mxu0
      %v464 = vadd.f32 0.0, %v463
      %v465 = vpop.f32.mrb[0].mxu0
      %v466 = vadd.f32 0.0, %v465
      %467 = vmatprep.mubr.f32.mxu0 %v358
      %468 = vmatmul.mubr.f32.gmra.mrb[0].mxu0 %v356
      %v469 = vpop.f32.mrb[0].mxu0
      %v470 = vadd.f32 0.0, %v469
      %v471 = vpop.f32.mrb[0].mxu0
      %v472 = vadd.f32 0.0, %v471
      %473 = vmatprep.mubr.f32.mxu0 %v357
      %474 = vmatmul.mubr.f32.gmra.mrb[0].mxu0 %v355
      %v475 = vpop.f32.mrb[0].mxu0
      %v476 = vadd.f32 0.0, %v475
      %v477 = vpop.f32.mrb[0].mxu0
      %v478 = vadd.f32 0.0, %v477
      %479 = vdwg.mxu0
      %480 = vmatprep.subr.mxu0 %v186
      %481 = vmatpush1.msra.mxu0 %v185
      %482 = vmatprep.subr.mxu0 %v188
      %483 = vmatpush1.msra.mxu0 %v187
      %484 = vmatprep.subr.mxu0 %v190
      %485 = vmatpush1.msra.mxu0 %v189
      %486 = vmatprep.subr.mxu0 %v192
      %487 = vmatpush1.msra.mxu0 %v191
      %488 = vmatprep.subr.mxu0 %v194
      %489 = vmatpush1.msra.mxu0 %v193
      %490 = vmatprep.subr.mxu0 %v196
      %491 = vmatpush1.msra.mxu0 %v195
      %492 = vmatprep.subr.mxu0 %v198
      %493 = vmatpush1.msra.mxu0 %v197
      %494 = vmatprep.subr.mxu0 %v200
      %495 = vmatpush1.msra.mxu0 %v199
      %496 = vmatprep.subr.mxu0 %v202
      %497 = vmatpush1.msra.mxu0 %v201
      %498 = vmatprep.subr.mxu0 %v204
      %499 = vmatpush1.msra.mxu0 %v203
      %500 = vmatprep.subr.mxu0 %v206
      %501 = vmatpush1.msra.mxu0 %v205
      %502 = vmatprep.subr.mxu0 %v208
      %503 = vmatpush1.msra.mxu0 %v207
      %504 = vmatprep.subr.mxu0 %v210
      %505 = vmatpush1.msra.mxu0 %v209
      %506 = vmatprep.subr.mxu0 %v212
      %507 = vmatpush1.msra.mxu0 %v211
      %508 = vmatprep.subr.mxu0 %v214
      %509 = vmatpush1.msra.mxu0 %v213
      %510 = vmatprep.subr.mxu0 %v216
      %511 = vmatpush1.msra.mxu0 %v215
      %512 = vmatprep.subr.mxu0 %v218
      %513 = vmatpush1.msra.mxu0 %v217
      %514 = vmatprep.subr.mxu0 %v220
      %515 = vmatpush1.msra.mxu0 %v219
      %516 = vmatprep.subr.mxu0 %v222
      %517 = vmatpush1.msra.mxu0 %v221
      %518 = vmatprep.subr.mxu0 %v224
      %519 = vmatpush1.msra.mxu0 %v223
      %520 = vmatprep.subr.mxu0 %v226
      %521 = vmatpush1.msra.mxu0 %v225
      %522 = vmatprep.subr.mxu0 %v228
      %523 = vmatpush1.msra.mxu0 %v227
      %524 = vmatprep.subr.mxu0 %v230
      %525 = vmatpush1.msra.mxu0 %v229
      %526 = vmatprep.subr.mxu0 %v232
      %527 = vmatpush1.msra.mxu0 %v231
      %528 = vmatprep.subr.mxu0 %v234
      %529 = vmatpush1.msra.mxu0 %v233
      %530 = vmatprep.subr.mxu0 %v236
      %531 = vmatpush1.msra.mxu0 %v235
      %532 = vmatprep.subr.mxu0 %v238
      %533 = vmatpush1.msra.mxu0 %v237
      %534 = vmatprep.subr.mxu0 %v240
      %535 = vmatpush1.msra.mxu0 %v239
      %536 = vmatprep.subr.mxu0 %v242
      %537 = vmatpush1.msra.mxu0 %v241
      %538 = vmatprep.subr.mxu0 %v244
      %539 = vmatpush1.msra.mxu0 %v243
      %540 = vmatprep.subr.mxu0 %v246
      %541 = vmatpush1.msra.mxu0 %v245
      %542 = vmatprep.subr.mxu0 %v248
      %543 = vmatpush1.msra.mxu0 %v247
      %544 = vmatprep.mubr.f32.mxu0 %v172
      %545 = vmatmul.mubr.f32.gmra.mrb[0].mxu0 %v171
      %v546 = vpop.f32.mrb[0].mxu0
      %v547 = vadd.f32 %v440, %v546
      %v548 = vpop.f32.mrb[0].mxu0
      %v549 = vadd.f32 %v442, %v548
      %550 = vmatprep.mubr.f32.mxu0 %v174
      %551 = vmatmul.mubr.f32.gmra.mrb[0].mxu0 %v173
      %v552 = vpop.f32.mrb[0].mxu0
      %v553 = vadd.f32 %v446, %v552
      %v554 = vpop.f32.mrb[0].mxu0
      %v555 = vadd.f32 %v448, %v554
      %556 = vmatprep.mubr.f32.mxu0 %v176
      %557 = vmatmul.mubr.f32.gmra.mrb[0].mxu0 %v175
      %v558 = vpop.f32.mrb[0].mxu0
      %v559 = vadd.f32 %v452, %v558
      %v560 = vpop.f32.mrb[0].mxu0
      %v561 = vadd.f32 %v454, %v560
      %562 = vmatprep.mubr.f32.mxu0 %v178
      %563 = vmatmul.mubr.f32.gmra.mrb[0].mxu0 %v177
      %v564 = vpop.f32.mrb[0].mxu0
      %v565 = vadd.f32 %v458, %v564
      %v566 = vpop.f32.mrb[0].mxu0
      %v567 = vadd.f32 %v460, %v566
      %568 = vmatprep.mubr.f32.mxu0 %v180
      %569 = vmatmul.mubr.f32.gmra.mrb[0].mxu0 %v179
      %v570 = vpop.f32.mrb[0].mxu0
      %v571 = vadd.f32 %v464, %v570
      %v572 = vpop.f32.mrb[0].mxu0
      %v573 = vadd.f32 %v466, %v572
      %574 = vmatprep.mubr.f32.mxu0 %v182
      %575 = vmatmul.mubr.f32.gmra.mrb[0].mxu0 %v181
      %v576 = vpop.f32.mrb[0].mxu0
      %v577 = vadd.f32 %v470, %v576
      %v578 = vpop.f32.mrb[0].mxu0
      %v579 = vadd.f32 %v472, %v578
      %580 = vmatprep.mubr.f32.mxu0 %v184
      %581 = vmatmul.mubr.f32.gmra.mrb[0].mxu0 %v183
      %v582 = vpop.f32.mrb[0].mxu0
      %v583 = vadd.f32 %v476, %v582
      %v584 = vpop.f32.mrb[0].mxu0
      %v585 = vadd.f32 %v478, %v584
      %586 = vdwg.mxu0
      %v587 = vld [vmem:[%s165 + $0x10] sm:$0xff]
      %v588 = vld [vmem:[%s165 + $0x18] sm:$0xff]
      %v589 = vld [vmem:[%s165 + $0x20] sm:$0xff]
      %v590 = vld [vmem:[%s165 + $0x28] sm:$0xff]
      %v591 = vld [vmem:[%s165 + $0x30] sm:$0xff]
      %v592 = vld [vmem:[%s165 + $0x38] sm:$0xff]
      %v593 = vld [vmem:[%s165 + $0x40] sm:$0xff]
      %v594 = vld [vmem:[%s165 + $0x48] sm:$0xff]
      %v595 = vld [vmem:[%s165 + $0x50] sm:$0xff]
      %v596 = vld [vmem:[%s165 + $0x58] sm:$0xff]
      %v597 = vld [vmem:[%s165 + $0x60] sm:$0xff]
      %v598 = vld [vmem:[%s165 + $0x68] sm:$0xff]
      %v599 = vld [vmem:[%s165 + $0x70] sm:$0x7f]
      %v600 = vld [vmem:[%s165 + $0x78] sm:$0x7f]
      %s601 = scalar_lea.vmem %s1, 1024
      %v602 = vld [vmem:[%s601] sm:$0xff]
      %v603 = vld [vmem:[%s601 + $0x8] sm:$0xff]
      %v604 = vld [vmem:[%s601 + $0x10] sm:$0xff]
      %v605 = vld [vmem:[%s601 + $0x18] sm:$0xff]
      %v606 = vld [vmem:[%s601 + $0x20] sm:$0xff]
      %v607 = vld [vmem:[%s601 + $0x28] sm:$0xff]
      %v608 = vld [vmem:[%s601 + $0x30] sm:$0xff]
      %v609 = vld [vmem:[%s601 + $0x38] sm:$0xff]
      %v610 = vld [vmem:[%s601 + $0x40] sm:$0xff]
      %v611 = vld [vmem:[%s601 + $0x48] sm:$0xff]
      %v612 = vld [vmem:[%s601 + $0x50] sm:$0xff]
      %v613 = vld [vmem:[%s601 + $0x58] sm:$0xff]
      %v614 = vld [vmem:[%s601 + $0x60] sm:$0xff]
      %v615 = vld [vmem:[%s601 + $0x68] sm:$0xff]
      %v616 = vld [vmem:[%s601 + $0x70] sm:$0xff]
      %v617 = vld [vmem:[%s601 + $0x78] sm:$0xff]
      %v618 = vld [vmem:[%s601 + $0x80] sm:$0xff]
      %v619 = vld [vmem:[%s601 + $0x88] sm:$0xff]
      %v620 = vld [vmem:[%s601 + $0x90] sm:$0xff]
      %v621 = vld [vmem:[%s601 + $0x98] sm:$0xff]
      %v622 = vld [vmem:[%s601 + $0xa0] sm:$0xff]
      %v623 = vld [vmem:[%s601 + $0xa8] sm:$0xff]
      %v624 = vld [vmem:[%s601 + $0xb0] sm:$0xff]
      %v625 = vld [vmem:[%s601 + $0xb8] sm:$0xff]
      %v626 = vld [vmem:[%s601 + $0xc0] sm:$0xff]
      %v627 = vld [vmem:[%s601 + $0xc8] sm:$0xff]
      %v628 = vld [vmem:[%s601 + $0xd0] sm:$0xff]
      %v629 = vld [vmem:[%s601 + $0xd8] sm:$0xff]
      %v630 = vld [vmem:[%s601 + $0xe0] sm:$0xff]
      %v631 = vld [vmem:[%s601 + $0xe8] sm:$0xff]
      %v632 = vld [vmem:[%s601 + $0xf0] sm:$0xff]
      %v633 = vld [vmem:[%s601 + $0xf8] sm:$0xff]
      %v634 = vld [vmem:[%s601 + $0x100] sm:$0xff]
      %v635 = vld [vmem:[%s601 + $0x108] sm:$0xff]
      %v636 = vld [vmem:[%s601 + $0x110] sm:$0xff]
      %v637 = vld [vmem:[%s601 + $0x118] sm:$0xff]
      %v638 = vld [vmem:[%s601 + $0x120] sm:$0xff]
      %v639 = vld [vmem:[%s601 + $0x128] sm:$0xff]
      %v640 = vld [vmem:[%s601 + $0x130] sm:$0xff]
      %v641 = vld [vmem:[%s601 + $0x138] sm:$0xff]
      %v642 = vld [vmem:[%s601 + $0x140] sm:$0xff]
      %v643 = vld [vmem:[%s601 + $0x148] sm:$0xff]
      %v644 = vld [vmem:[%s601 + $0x150] sm:$0xff]
      %v645 = vld [vmem:[%s601 + $0x158] sm:$0xff]
      %v646 = vld [vmem:[%s601 + $0x160] sm:$0xff]
      %v647 = vld [vmem:[%s601 + $0x168] sm:$0xff]
      %v648 = vld [vmem:[%s601 + $0x170] sm:$0xff]
      %v649 = vld [vmem:[%s601 + $0x178] sm:$0xff]
      %v650 = vld [vmem:[%s601 + $0x180] sm:$0xff]
      %v651 = vld [vmem:[%s601 + $0x188] sm:$0xff]
      %v652 = vld [vmem:[%s601 + $0x190] sm:$0xff]
      %v653 = vld [vmem:[%s601 + $0x198] sm:$0xff]
      %v654 = vld [vmem:[%s601 + $0x1a0] sm:$0xff]
      %v655 = vld [vmem:[%s601 + $0x1a8] sm:$0xff]
      %v656 = vld [vmem:[%s601 + $0x1b0] sm:$0xff]
      %v657 = vld [vmem:[%s601 + $0x1b8] sm:$0xff]
      %v658 = vld [vmem:[%s601 + $0x1c0] sm:$0xff]
      %v659 = vld [vmem:[%s601 + $0x1c8] sm:$0xff]
      %v660 = vld [vmem:[%s601 + $0x1d0] sm:$0xff]
      %v661 = vld [vmem:[%s601 + $0x1d8] sm:$0xff]
      %v662 = vld [vmem:[%s601 + $0x1e0] sm:$0xff]
      %v663 = vld [vmem:[%s601 + $0x1e8] sm:$0xff]
      %v664 = vld [vmem:[%s601 + $0x1f0] sm:$0xff]
      %v665 = vld [vmem:[%s601 + $0x1f8] sm:$0xff]
      %666 = vmatprep.subr.mxu0 %v603
      %667 = vmatpush1.msra.mxu0 %v602
      %668 = vmatprep.subr.mxu0 %v605
      %669 = vmatpush1.msra.mxu0 %v604
      %670 = vmatprep.subr.mxu0 %v607
      %671 = vmatpush1.msra.mxu0 %v606
      %672 = vmatprep.subr.mxu0 %v609
      %673 = vmatpush1.msra.mxu0 %v608
      %674 = vmatprep.subr.mxu0 %v611
      %675 = vmatpush1.msra.mxu0 %v610
      %676 = vmatprep.subr.mxu0 %v613
      %677 = vmatpush1.msra.mxu0 %v612
      %678 = vmatprep.subr.mxu0 %v615
      %679 = vmatpush1.msra.mxu0 %v614
      %680 = vmatprep.subr.mxu0 %v617
      %681 = vmatpush1.msra.mxu0 %v616
      %682 = vmatprep.subr.mxu0 %v619
      %683 = vmatpush1.msra.mxu0 %v618
      %684 = vmatprep.subr.mxu0 %v621
      %685 = vmatpush1.msra.mxu0 %v620
      %686 = vmatprep.subr.mxu0 %v623
      %687 = vmatpush1.msra.mxu0 %v622
      %688 = vmatprep.subr.mxu0 %v625
      %689 = vmatpush1.msra.mxu0 %v624
      %690 = vmatprep.subr.mxu0 %v627
      %691 = vmatpush1.msra.mxu0 %v626
      %692 = vmatprep.subr.mxu0 %v629
      %693 = vmatpush1.msra.mxu0 %v628
      %694 = vmatprep.subr.mxu0 %v631
      %695 = vmatpush1.msra.mxu0 %v630
      %696 = vmatprep.subr.mxu0 %v633
      %697 = vmatpush1.msra.mxu0 %v632
      %698 = vmatprep.subr.mxu0 %v635
      %699 = vmatpush1.msra.mxu0 %v634
      %700 = vmatprep.subr.mxu0 %v637
      %701 = vmatpush1.msra.mxu0 %v636
      %702 = vmatprep.subr.mxu0 %v639
      %703 = vmatpush1.msra.mxu0 %v638
      %704 = vmatprep.subr.mxu0 %v641
      %705 = vmatpush1.msra.mxu0 %v640
      %706 = vmatprep.subr.mxu0 %v643
      %707 = vmatpush1.msra.mxu0 %v642
      %708 = vmatprep.subr.mxu0 %v645
      %709 = vmatpush1.msra.mxu0 %v644
      %710 = vmatprep.subr.mxu0 %v647
      %711 = vmatpush1.msra.mxu0 %v646
      %712 = vmatprep.subr.mxu0 %v649
      %713 = vmatpush1.msra.mxu0 %v648
      %714 = vmatprep.subr.mxu0 %v651
      %715 = vmatpush1.msra.mxu0 %v650
      %716 = vmatprep.subr.mxu0 %v653
      %717 = vmatpush1.msra.mxu0 %v652
      %718 = vmatprep.subr.mxu0 %v655
      %719 = vmatpush1.msra.mxu0 %v654
      %720 = vmatprep.subr.mxu0 %v657
      %721 = vmatpush1.msra.mxu0 %v656
      %722 = vmatprep.subr.mxu0 %v659
      %723 = vmatpush1.msra.mxu0 %v658
      %724 = vmatprep.subr.mxu0 %v661
      %725 = vmatpush1.msra.mxu0 %v660
      %726 = vmatprep.subr.mxu0 %v663
      %727 = vmatpush1.msra.mxu0 %v662
      %728 = vmatprep.subr.mxu0 %v665
      %729 = vmatpush1.msra.mxu0 %v664
      %730 = vmatprep.mubr.f32.mxu0 %v588
      %731 = vmatmul.mubr.f32.gmra.mrb[0].mxu0 %v587
      %v732 = vpop.f32.mrb[0].mxu0
      %v733 = vadd.f32 0.0, %v732
      %v734 = vpop.f32.mrb[0].mxu0
      %v735 = vadd.f32 0.0, %v734
      %736 = vmatprep.mubr.f32.mxu0 %v590
      %737 = vmatmul.mubr.f32.gmra.mrb[0].mxu0 %v589
      %v738 = vpop.f32.mrb[0].mxu0
      %v739 = vadd.f32 0.0, %v738
      %v740 = vpop.f32.mrb[0].mxu0
      %v741 = vadd.f32 0.0, %v740
      %742 = vmatprep.mubr.f32.mxu0 %v592
      %743 = vmatmul.mubr.f32.gmra.mrb[0].mxu0 %v591
      %v744 = vpop.f32.mrb[0].mxu0
      %v745 = vadd.f32 0.0, %v744
      %v746 = vpop.f32.mrb[0].mxu0
      %v747 = vadd.f32 0.0, %v746
      %748 = vmatprep.mubr.f32.mxu0 %v594
      %749 = vmatmul.mubr.f32.gmra.mrb[0].mxu0 %v593
      %v750 = vpop.f32.mrb[0].mxu0
      %v751 = vadd.f32 0.0, %v750
      %v752 = vpop.f32.mrb[0].mxu0
      %v753 = vadd.f32 0.0, %v752
      %754 = vmatprep.mubr.f32.mxu0 %v596
      %755 = vmatmul.mubr.f32.gmra.mrb[0].mxu0 %v595
      %v756 = vpop.f32.mrb[0].mxu0
      %v757 = vadd.f32 0.0, %v756
      %v758 = vpop.f32.mrb[0].mxu0
      %v759 = vadd.f32 0.0, %v758
      %760 = vmatprep.mubr.f32.mxu0 %v598
      %761 = vmatmul.mubr.f32.gmra.mrb[0].mxu0 %v597
      %v762 = vpop.f32.mrb[0].mxu0
      %v763 = vadd.f32 0.0, %v762
      %v764 = vpop.f32.mrb[0].mxu0
      %v765 = vadd.f32 0.0, %v764
      %766 = vmatprep.mubr.f32.mxu0 %v600
      %767 = vmatmul.mubr.f32.gmra.mrb[0].mxu0 %v599
      %v768 = vpop.f32.mrb[0].mxu0
      %v769 = vadd.f32 0.0, %v768
      %v770 = vpop.f32.mrb[0].mxu0
      %v771 = vadd.f32 0.0, %v770
      %772 = vdwg.mxu0
      %v773 = vadd.f32 %v547, %v733
      %v774 = vadd.f32 %v549, %v735
      %v775 = vadd.f32 %v553, %v739
      %v776 = vadd.f32 %v555, %v741
      %v777 = vadd.f32 %v559, %v745
      %v778 = vadd.f32 %v561, %v747
      %v779 = vadd.f32 %v565, %v751
      %v780 = vadd.f32 %v567, %v753
      %v781 = vadd.f32 %v571, %v757
      %v782 = vadd.f32 %v573, %v759
      %v783 = vadd.f32 %v577, %v763
      %v784 = vadd.f32 %v579, %v765
      %v785 = vadd.f32 %v583, %v769
      %v786 = vadd.f32 %v585, %v771
      %v787 = vld [vmem:[%s165 + $0x10] sm:$0xfe]
      %v788 = vld [vmem:[%s165 + $0x18] sm:$0xfe]
      %v789 = vld [vmem:[%s165 + $0x70] sm:$0xff]
      %v790 = vld [vmem:[%s165 + $0x78] sm:$0xff]
      %s791 = scalar_lea.vmem %s1, 1536
      %v792 = vld [vmem:[%s791] sm:$0xff]
      %v793 = vld [vmem:[%s791 + $0x8] sm:$0xff]
      %v794 = vld [vmem:[%s791 + $0x10] sm:$0xff]
      %v795 = vld [vmem:[%s791 + $0x18] sm:$0xff]
      %v796 = vld [vmem:[%s791 + $0x20] sm:$0xff]
      %v797 = vld [vmem:[%s791 + $0x28] sm:$0xff]
      %v798 = vld [vmem:[%s791 + $0x30] sm:$0xff]
      %v799 = vld [vmem:[%s791 + $0x38] sm:$0xff]
      %v800 = vld [vmem:[%s791 + $0x40] sm:$0xff]
      %v801 = vld [vmem:[%s791 + $0x48] sm:$0xff]
      %v802 = vld [vmem:[%s791 + $0x50] sm:$0xff]
      %v803 = vld [vmem:[%s791 + $0x58] sm:$0xff]
      %v804 = vld [vmem:[%s791 + $0x60] sm:$0xff]
      %v805 = vld [vmem:[%s791 + $0x68] sm:$0xff]
      %v806 = vld [vmem:[%s791 + $0x70] sm:$0xff]
      %v807 = vld [vmem:[%s791 + $0x78] sm:$0xff]
      %v808 = vld [vmem:[%s791 + $0x80] sm:$0xff]
      %v809 = vld [vmem:[%s791 + $0x88] sm:$0xff]
      %v810 = vld [vmem:[%s791 + $0x90] sm:$0xff]
      %v811 = vld [vmem:[%s791 + $0x98] sm:$0xff]
      %v812 = vld [vmem:[%s791 + $0xa0] sm:$0xff]
      %v813 = vld [vmem:[%s791 + $0xa8] sm:$0xff]
      %v814 = vld [vmem:[%s791 + $0xb0] sm:$0xff]
      %v815 = vld [vmem:[%s791 + $0xb8] sm:$0xff]
      %v816 = vld [vmem:[%s791 + $0xc0] sm:$0xff]
      %v817 = vld [vmem:[%s791 + $0xc8] sm:$0xff]
      %v818 = vld [vmem:[%s791 + $0xd0] sm:$0xff]
      %v819 = vld [vmem:[%s791 + $0xd8] sm:$0xff]
      %v820 = vld [vmem:[%s791 + $0xe0] sm:$0xff]
      %v821 = vld [vmem:[%s791 + $0xe8] sm:$0xff]
      %v822 = vld [vmem:[%s791 + $0xf0] sm:$0xff]
      %v823 = vld [vmem:[%s791 + $0xf8] sm:$0xff]
      %v824 = vld [vmem:[%s791 + $0x100] sm:$0xff]
      %v825 = vld [vmem:[%s791 + $0x108] sm:$0xff]
      %v826 = vld [vmem:[%s791 + $0x110] sm:$0xff]
      %v827 = vld [vmem:[%s791 + $0x118] sm:$0xff]
      %v828 = vld [vmem:[%s791 + $0x120] sm:$0xff]
      %v829 = vld [vmem:[%s791 + $0x128] sm:$0xff]
      %v830 = vld [vmem:[%s791 + $0x130] sm:$0xff]
      %v831 = vld [vmem:[%s791 + $0x138] sm:$0xff]
      %v832 = vld [vmem:[%s791 + $0x140] sm:$0xff]
      %v833 = vld [vmem:[%s791 + $0x148] sm:$0xff]
      %v834 = vld [vmem:[%s791 + $0x150] sm:$0xff]
      %v835 = vld [vmem:[%s791 + $0x158] sm:$0xff]
      %v836 = vld [vmem:[%s791 + $0x160] sm:$0xff]
      %v837 = vld [vmem:[%s791 + $0x168] sm:$0xff]
      %v838 = vld [vmem:[%s791 + $0x170] sm:$0xff]
      %v839 = vld [vmem:[%s791 + $0x178] sm:$0xff]
      %v840 = vld [vmem:[%s791 + $0x180] sm:$0xff]
      %v841 = vld [vmem:[%s791 + $0x188] sm:$0xff]
      %v842 = vld [vmem:[%s791 + $0x190] sm:$0xff]
      %v843 = vld [vmem:[%s791 + $0x198] sm:$0xff]
      %v844 = vld [vmem:[%s791 + $0x1a0] sm:$0xff]
      %v845 = vld [vmem:[%s791 + $0x1a8] sm:$0xff]
      %v846 = vld [vmem:[%s791 + $0x1b0] sm:$0xff]
      %v847 = vld [vmem:[%s791 + $0x1b8] sm:$0xff]
      %v848 = vld [vmem:[%s791 + $0x1c0] sm:$0xff]
      %v849 = vld [vmem:[%s791 + $0x1c8] sm:$0xff]
      %v850 = vld [vmem:[%s791 + $0x1d0] sm:$0xff]
      %v851 = vld [vmem:[%s791 + $0x1d8] sm:$0xff]
      %v852 = vld [vmem:[%s791 + $0x1e0] sm:$0xff]
      %v853 = vld [vmem:[%s791 + $0x1e8] sm:$0xff]
      %v854 = vld [vmem:[%s791 + $0x1f0] sm:$0xff]
      %v855 = vld [vmem:[%s791 + $0x1f8] sm:$0xff]
      %v870 = vrot.slane %v787, 1
      %v871 = vrot.slane %v589, 1
      %v872 = vsel %vm332, %v870, %v871
      %v873 = vrot.slane %v788, 1
      %v874 = vrot.slane %v590, 1
      %v875 = vsel %vm332, %v873, %v874
      %v876 = vrot.slane %v591, 1
      %v877 = vsel %vm332, %v871, %v876
      %v878 = vrot.slane %v592, 1
      %v879 = vsel %vm332, %v874, %v878
      %v880 = vrot.slane %v593, 1
      %v881 = vsel %vm332, %v876, %v880
      %v882 = vrot.slane %v594, 1
      %v883 = vsel %vm332, %v878, %v882
      %v884 = vrot.slane %v595, 1
      %v885 = vsel %vm332, %v880, %v884
      %v886 = vrot.slane %v596, 1
      %v887 = vsel %vm332, %v882, %v886
      %v888 = vrot.slane %v597, 1
      %v889 = vsel %vm332, %v884, %v888
      %v890 = vrot.slane %v598, 1
      %v891 = vsel %vm332, %v886, %v890
      %v892 = vrot.slane %v789, 1
      %v893 = vsel %vm332, %v888, %v892
      %v894 = vrot.slane %v790, 1
      %v895 = vsel %vm332, %v890, %v894
      %910 = vmatprep.subr.mxu0 %v793
      %911 = vmatpush1.msra.mxu0 %v792
      %912 = vmatprep.subr.mxu0 %v795
      %913 = vmatpush1.msra.mxu0 %v794
      %914 = vmatprep.subr.mxu0 %v797
      %915 = vmatpush1.msra.mxu0 %v796
      %916 = vmatprep.subr.mxu0 %v799
      %917 = vmatpush1.msra.mxu0 %v798
      %918 = vmatprep.subr.mxu0 %v801
      %919 = vmatpush1.msra.mxu0 %v800
      %920 = vmatprep.subr.mxu0 %v803
      %921 = vmatpush1.msra.mxu0 %v802
      %922 = vmatprep.subr.mxu0 %v805
      %923 = vmatpush1.msra.mxu0 %v804
      %924 = vmatprep.subr.mxu0 %v807
      %925 = vmatpush1.msra.mxu0 %v806
      %926 = vmatprep.subr.mxu0 %v809
      %927 = vmatpush1.msra.mxu0 %v808
      %928 = vmatprep.subr.mxu0 %v811
      %929 = vmatpush1.msra.mxu0 %v810
      %930 = vmatprep.subr.mxu0 %v813
      %931 = vmatpush1.msra.mxu0 %v812
      %932 = vmatprep.subr.mxu0 %v815
      %933 = vmatpush1.msra.mxu0 %v814
      %934 = vmatprep.subr.mxu0 %v817
      %935 = vmatpush1.msra.mxu0 %v816
      %936 = vmatprep.subr.mxu0 %v819
      %937 = vmatpush1.msra.mxu0 %v818
      %938 = vmatprep.subr.mxu0 %v821
      %939 = vmatpush1.msra.mxu0 %v820
      %940 = vmatprep.subr.mxu0 %v823
      %941 = vmatpush1.msra.mxu0 %v822
      %942 = vmatprep.subr.mxu0 %v825
      %943 = vmatpush1.msra.mxu0 %v824
      %944 = vmatprep.subr.mxu0 %v827
      %945 = vmatpush1.msra.mxu0 %v826
      %946 = vmatprep.subr.mxu0 %v829
      %947 = vmatpush1.msra.mxu0 %v828
      %948 = vmatprep.subr.mxu0 %v831
      %949 = vmatpush1.msra.mxu0 %v830
      %950 = vmatprep.subr.mxu0 %v833
      %951 = vmatpush1.msra.mxu0 %v832
      %952 = vmatprep.subr.mxu0 %v835
      %953 = vmatpush1.msra.mxu0 %v834
      %954 = vmatprep.subr.mxu0 %v837
      %955 = vmatpush1.msra.mxu0 %v836
      %956 = vmatprep.subr.mxu0 %v839
      %957 = vmatpush1.msra.mxu0 %v838
      %958 = vmatprep.subr.mxu0 %v841
      %959 = vmatpush1.msra.mxu0 %v840
      %960 = vmatprep.subr.mxu0 %v843
      %961 = vmatpush1.msra.mxu0 %v842
      %962 = vmatprep.subr.mxu0 %v845
      %963 = vmatpush1.msra.mxu0 %v844
      %964 = vmatprep.subr.mxu0 %v847
      %965 = vmatpush1.msra.mxu0 %v846
      %966 = vmatprep.subr.mxu0 %v849
      %967 = vmatpush1.msra.mxu0 %v848
      %968 = vmatprep.subr.mxu0 %v851
      %969 = vmatpush1.msra.mxu0 %v850
      %970 = vmatprep.subr.mxu0 %v853
      %971 = vmatpush1.msra.mxu0 %v852
      %972 = vmatprep.subr.mxu0 %v855
      %973 = vmatpush1.msra.mxu0 %v854
      %974 = vmatprep.mubr.f32.mxu0 %v875
      %975 = vmatmul.mubr.f32.gmra.mrb[0].mxu0 %v872
      %v976 = vpop.f32.mrb[0].mxu0
      %v977 = vadd.f32 0.0, %v976
      %v978 = vpop.f32.mrb[0].mxu0
      %v979 = vadd.f32 0.0, %v978
      %980 = vmatprep.mubr.f32.mxu0 %v879
      %981 = vmatmul.mubr.f32.gmra.mrb[0].mxu0 %v877
      %v982 = vpop.f32.mrb[0].mxu0
      %v983 = vadd.f32 0.0, %v982
      %v984 = vpop.f32.mrb[0].mxu0
      %v985 = vadd.f32 0.0, %v984
      %986 = vmatprep.mubr.f32.mxu0 %v883
      %987 = vmatmul.mubr.f32.gmra.mrb[0].mxu0 %v881
      %v988 = vpop.f32.mrb[0].mxu0
      %v989 = vadd.f32 0.0, %v988
      %v990 = vpop.f32.mrb[0].mxu0
      %v991 = vadd.f32 0.0, %v990
      %992 = vmatprep.mubr.f32.mxu0 %v887
      %993 = vmatmul.mubr.f32.gmra.mrb[0].mxu0 %v885
      %v994 = vpop.f32.mrb[0].mxu0
      %v995 = vadd.f32 0.0, %v994
      %v996 = vpop.f32.mrb[0].mxu0
      %v997 = vadd.f32 0.0, %v996
      %998 = vmatprep.mubr.f32.mxu0 %v891
      %999 = vmatmul.mubr.f32.gmra.mrb[0].mxu0 %v889
      %v1000 = vpop.f32.mrb[0].mxu0
      %v1001 = vadd.f32 0.0, %v1000
      %v1002 = vpop.f32.mrb[0].mxu0
      %v1003 = vadd.f32 0.0, %v1002
      %1004 = vmatprep.mubr.f32.mxu0 %v895
      %1005 = vmatmul.mubr.f32.gmra.mrb[0].mxu0 %v893
      %v1006 = vpop.f32.mrb[0].mxu0
      %v1007 = vadd.f32 0.0, %v1006
      %v1008 = vpop.f32.mrb[0].mxu0
      %v1009 = vadd.f32 0.0, %v1008
      %1010 = vmatprep.mubr.f32.mxu0 %v894
      %1011 = vmatmul.mubr.f32.gmra.mrb[0].mxu0 %v892
      %v1012 = vpop.f32.mrb[0].mxu0
      %v1013 = vadd.f32 0.0, %v1012
      %v1014 = vpop.f32.mrb[0].mxu0
      %v1015 = vadd.f32 0.0, %v1014
      %1016 = vdwg.mxu0
      %v1017 = vadd.f32 %v773, %v977
      %v1018 = vadd.f32 %v774, %v979
      %v1019 = vadd.f32 %v775, %v983
      %v1020 = vadd.f32 %v776, %v985
      %v1021 = vadd.f32 %v777, %v989
      %v1022 = vadd.f32 %v778, %v991
      %v1023 = vadd.f32 %v779, %v995
      %v1024 = vadd.f32 %v780, %v997
      %v1025 = vadd.f32 %v781, %v1001
      %v1026 = vadd.f32 %v782, %v1003
      %v1027 = vadd.f32 %v783, %v1007
      %v1028 = vadd.f32 %v784, %v1009
      %v1029 = vadd.f32 %v785, %v1013
      %v1030 = vadd.f32 %v786, %v1015
      %v1031 = vmax.f32 %v1017, %v1018
      %v1032 = vmax.f32 %v1019, %v1020
      %v1033 = vmax.f32 %v1021, %v1022
      %v1034 = vmax.f32 %v1023, %v1024
      %v1035 = vmax.f32 %v1025, %v1026
      %v1036 = vmax.f32 %v1027, %v1028
      %v1037 = vmax.f32 %v1029, %v1030
      %v1038 = vld [vmem:[%s2] sm:$0x1]
      %v1040 = vlaneseq
      %v1041 = vshrl.u32 %v1040, 7
      %v1042 = vsub.s32 0, %v1041
      %v1043 = vrot.slane %v1038, %v1042
      %v1045 = vadd.f32 %v1031, %v1043
      %v1046 = vadd.f32 %v1032, %v1043
      %v1047 = vadd.f32 %v1033, %v1043
      %v1048 = vadd.f32 %v1034, %v1043
      %v1049 = vadd.f32 %v1035, %v1043
      %v1050 = vadd.f32 %v1036, %v1043
      %v1051 = vadd.f32 %v1037, %v1043
      %v1052 = vmax.f32 %v1045, 0.0
      %v1053 = vmax.f32 %v1046, 0.0
      %v1054 = vmax.f32 %v1047, 0.0
      %v1055 = vmax.f32 %v1048, 0.0
      %v1056 = vmax.f32 %v1049, 0.0
      %v1057 = vmax.f32 %v1050, 0.0
      %v1058 = vmax.f32 %v1051, 0.0
      %1059 = vst [vmem:[%s170] sm:$0xff] %v1052
      %1060 = vst [vmem:[%s170 + $0x8] sm:$0xff] %v1053
      %1061 = vst [vmem:[%s170 + $0x10] sm:$0xff] %v1054
      %1062 = vst [vmem:[%s170 + $0x18] sm:$0xff] %v1055
      %1063 = vst [vmem:[%s170 + $0x20] sm:$0xff] %v1056
      %1064 = vst [vmem:[%s170 + $0x28] sm:$0xff] %v1057
      %1065 = vst [vmem:[%s170 + $0x30] sm:$0x7f] %v1058
      %p1066 = scmp.lt.s32.totalorder %s14, 1
      %s1067 = scalar_select %p1066, %s14, 1
      %s1068 = smul.addr %s1067, 7
      %s1069 = smul.addr %s1068, 8
      %s1070 = scalar_lea.vmem %s3, %s1069
      // Predicated region
      $region33: #{embed_net_forward.5} parent=31 // pred_check
        %p1071 = pneg %p100
      $region34: #{embed_net_forward.5} parent=31 // pred_check_branch
        %1073 = sbr.rel (%p1071) target = $region36
      $region35: #{embed_net_forward.5} parent=31 // pred_region
        _
      $region36: #{embed_net_forward.5} parent=31 // pred_fallthru
        _
    $region32: #{embed_net_forward.5} parent=5 // pred_fallthru
      _
    %p1074 = scmp.le.s32.totalorder 2, %s9
    // Predicated region
    $region37: #{embed_net_forward.5} parent=5 // pred_check
      %p1075 = pneg %p1074
    $region38: #{embed_net_forward.5} parent=5 // pred_check_branch
      %1077 = sbr.rel (%p1075) target = $region40
    $region39: #{embed_net_forward.5} parent=5 // pred_region
      %s1078 = ssub.s32 %s9, 2
      // Predicated region
      $region41: #{embed_net_forward.5} parent=39 // pred_check
        %p1079 = pneg %p106
      $region42: #{embed_net_forward.5} parent=39 // pred_check_branch
        %1081 = sbr.rel (%p1079) target = $region44
      $region43: #{embed_net_forward.5} parent=39 // pred_region
        %p1082 = scmp.lt.s32.totalorder %s15, 1
        %s1083 = scalar_select %p1082, %s15, 1
        %s1084 = smul.addr %s1083, 7
        %s1085 = smul.addr %s1084, 8
        %s1086 = scalar_lea.vmem %s3, %s1085
      $region44: #{embed_net_forward.5} parent=39 // pred_fallthru
        _
    $region40: #{embed_net_forward.5} parent=5 // pred_fallthru
      _
  $region6: #{embed_net_forward.5} parent=0 // loop_footer
    %s13 = sadd.s32 1, %s9
  $region7: #{embed_net_forward.5} parent=0 // loop_footer_branch
    %8 = sbr.rel target = $region3
  $region8: #{embed_net_forward.5} parent=0 // loop_exit
    _

// kernel: embed_net_forward.6
$region0: #{embed_net_forward.6}
  #allocation0 [shape = 'u32[]', space=smem, size = 0x4, offset = 0x4, fixed_abs, tag = 'smem constant byte address 0x4 - core index']
  #allocation1 [shape = 'u32[144,128]{1,0:T(1,128)}', space=vmem, size = 0x12000, scoped, tag = 'internal scratch']
  %s0 = inlined_call_operand.vmem [shape: f32[2,25,256], index: 0, kind: input, shape index: {}]
  %s1 = inlined_call_operand.vmem [shape: f32[4,256,256], index: 1, kind: input, shape index: {}]
  %s2 = inlined_call_operand.vmem [shape: f32[1,128], index: 2, kind: input, shape index: {}]
  %s3 = inlined_call_operand.vmem [shape: f32[2,19,128], index: 3, kind: output, shape index: {}]
  %s4 = sld [smem:[#allocation0]]
  $region45: #{embed_net_forward.6} parent=0
    _
  %s6 = ssub.s32 1, %s4
  %s7 = scalar_select 0, %s6, %s4
  loop: start=0, step=1, limit=4
  $region2: #{embed_net_forward.6} parent=0 // loop_pre_header
    _
  $region3: #{embed_net_forward.6} parent=0 // loop_header
    %s9 = sphi 0, %s13
    %p10 = scmp.ge.s32.totalorder %s9, 4
    %s19 = sphi 0, %s21
    %s22 = sphi 0, %s19
    %s23 = sphi 0, %s22
    %s39 = sphi 0, %s23
    %s43 = sphi 0, %s43
    %s45 = sphi 0, %s43
    %s46 = sphi 0, %s45
    %s60 = sphi 0, %s46
    %s64 = sphi 0, %s64
    %s66 = sphi 0, %s64
    %s67 = sphi 0, %s66
    %s81 = sphi 0, %s67
    %s87 = sphi 0, %s89
    %s90 = sphi 0, %s87
    %s91 = sphi 0, %s90
    %s107 = sphi 0, %s91
  $region4: #{embed_net_forward.6} parent=0 // loop_header_branch
    %12 = sbr.rel (%p10) target = $region8
  $region5: #{embed_net_forward.6} parent=0 // loop_body
    %s14 = ssub.s32 %s9, 1
    %s15 = ssub.s32 %s9, 2
    %s16 = sadd.s32 %s9, 1
    %s17 = ssub.s32 %s9, %s16
    %p18 = scmp.eq.s32.totalorder %s17, 0
    %s20 = sadd.s32 %s19, 1
    %s21 = scalar_select %p18, %s19, %s20
    %p24 = pneg %p18
    %p25 = scmp.eq.s32.totalorder %s9, 1
    %p26 = por %p24, %p25
    %p27 = scmp.ne.s32.totalorder %s19, %s22
    %p28 = scmp.eq.s32.totalorder %s9, 0
    %p29 = por %p27, %p28
    %p30 = scmp.ne.s32.totalorder %s19, %s22
    %p31 = scmp.eq.s32.totalorder %s14, 1
    %p32 = por %p30, %p31
    %p33 = scmp.ne.s32.totalorder %s22, %s23
    %p34 = scmp.eq.s32.totalorder %s14, 0
    %p35 = por %p33, %p34
    %p36 = scmp.ne.s32.totalorder %s22, %s23
    %p37 = scmp.eq.s32.totalorder %s15, 1
    %p38 = por %p36, %p37
    %p40 = scmp.ne.s32.totalorder %s23, %s39
    %p41 = scmp.eq.s32.totalorder %s15, 0
    %p42 = por %p40, %p41
    %s44 = sadd.s32 %s43, 1
    %p47 = scmp.eq.s32.totalorder %s9, 1
    %p48 = scmp.ne.s32.totalorder %s43, %s45
    %p49 = scmp.eq.s32.totalorder %s9, 0
    %p50 = por %p48, %p49
    %p51 = scmp.ne.s32.totalorder %s43, %s45
    %p52 = scmp.eq.s32.totalorder %s14, 1
    %p53 = por %p51, %p52
    %p54 = scmp.ne.s32.totalorder %s45, %s46
    %p55 = scmp.eq.s32.totalorder %s14, 0
    %p56 = por %p54, %p55
    %p57 = scmp.ne.s32.totalorder %s45, %s46
    %p58 = scmp.eq.s32.totalorder %s15, 1
    %p59 = por %p57, %p58
    %p61 = scmp.ne.s32.totalorder %s46, %s60
    %p62 = scmp.eq.s32.totalorder %s15, 0
    %p63 = por %p61, %p62
    %s65 = sadd.s32 %s64, 1
    %p68 = scmp.eq.s32.totalorder %s9, 1
    %p69 = scmp.ne.s32.totalorder %s64, %s66
    %p70 = scmp.eq.s32.totalorder %s9, 0
    %p71 = por %p69, %p70
    %p72 = scmp.ne.s32.totalorder %s64, %s66
    %p73 = scmp.eq.s32.totalorder %s14, 1
    %p74 = por %p72, %p73
    %p75 = scmp.ne.s32.totalorder %s66, %s67
    %p76 = scmp.eq.s32.totalorder %s14, 0
    %p77 = por %p75, %p76
    %p78 = scmp.ne.s32.totalorder %s66, %s67
    %p79 = scmp.eq.s32.totalorder %s15, 1
    %p80 = por %p78, %p79
    %p82 = scmp.ne.s32.totalorder %s67, %s81
    %p83 = scmp.eq.s32.totalorder %s15, 0
    %p84 = por %p82, %p83
    %s85 = ssub.s32 %s9, %s16
    %p86 = scmp.eq.s32.totalorder %s85, 0
    %s88 = sadd.s32 %s87, 1
    %s89 = scalar_select %p86, %s87, %s88
    %p92 = pneg %p86
    %p93 = scmp.eq.s32.totalorder %s9, 1
    %p94 = por %p92, %p93
    %p95 = scmp.ne.s32.totalorder %s87, %s90
    %p96 = scmp.eq.s32.totalorder %s9, 0
    %p97 = por %p95, %p96
    %p98 = scmp.ne.s32.totalorder %s87, %s90
    %p99 = scmp.eq.s32.totalorder %s14, 1
    %p100 = por %p98, %p99
    %p101 = scmp.ne.s32.totalorder %s90, %s91
    %p102 = scmp.eq.s32.totalorder %s14, 0
    %p103 = por %p101, %p102
    %p104 = scmp.ne.s32.totalorder %s90, %s91
    %p105 = scmp.eq.s32.totalorder %s15, 1
    %p106 = por %p104, %p105
    %p108 = scmp.ne.s32.totalorder %s91, %s107
    %p109 = scmp.eq.s32.totalorder %s15, 0
    %p110 = por %p108, %p109
    %p111 = scmp.le.s32.totalorder 1, %s9
    %p112 = scmp.lt.s32.totalorder %s9, 3
    %p113 = pnand %p111, %p112
    %p114 = pneg %p113
    // Predicated region
    $region9: #{embed_net_forward.6} parent=5 // pred_check
      _
    $region10: #{embed_net_forward.6} parent=5 // pred_check_branch
      %116 = sbr.rel (%p113) target = $region12
    $region11: #{embed_net_forward.6} parent=5 // pred_region
      %s117 = ssub.s32 %s9, 1
      // Predicated region
      $region13: #{embed_net_forward.6} parent=11 // pred_check
        %p118 = pneg %p56
      $region14: #{embed_net_forward.6} parent=11 // pred_check_branch
        %120 = sbr.rel (%p118) target = $region16
      $region15: #{embed_net_forward.6} parent=11 // pred_region
        _
      $region16: #{embed_net_forward.6} parent=11 // pred_fallthru
        _
      // Predicated region
      $region17: #{embed_net_forward.6} parent=11 // pred_check
        %p121 = pneg %p77
      $region18: #{embed_net_forward.6} parent=11 // pred_check_branch
        %123 = sbr.rel (%p121) target = $region20
      $region19: #{embed_net_forward.6} parent=11 // pred_region
        _
      $region20: #{embed_net_forward.6} parent=11 // pred_fallthru
        _
    $region12: #{embed_net_forward.6} parent=5 // pred_fallthru
      _
    %p124 = scmp.lt.s32.totalorder %s9, 2
    // Predicated region
    $region21: #{embed_net_forward.6} parent=5 // pred_check
      %p125 = pneg %p124
    $region22: #{embed_net_forward.6} parent=5 // pred_check_branch
      %127 = sbr.rel (%p125) target = $region24
    $region23: #{embed_net_forward.6} parent=5 // pred_region
      // Predicated region
      $region25: #{embed_net_forward.6} parent=23 // pred_check
        %p128 = pneg %p29
      $region26: #{embed_net_forward.6} parent=23 // pred_check_branch
        %130 = sbr.rel (%p128) target = $region28
      $region27: #{embed_net_forward.6} parent=23 // pred_region
        %p131 = scmp.lt.s32.totalorder %s9, 1
        %s132 = scalar_select %p131, %s9, 1
        %s133 = smul.addr %s132, 8
        %s134 = smul.addr %s133, 8
        %s135 = scalar_lea.vmem %s0, %s134
      $region28: #{embed_net_forward.6} parent=23 // pred_fallthru
        _
    $region24: #{embed_net_forward.6} parent=5 // pred_fallthru
      _
    %p136 = scmp.le.s32.totalorder 1, %s9
    %p137 = scmp.lt.s32.totalorder %s9, 3
    %p138 = pnand %p136, %p137
    %p139 = pneg %p138
    // Predicated region
    $region29: #{embed_net_forward.6} parent=5 // pred_check
      _
    $region30: #{embed_net_forward.6} parent=5 // pred_check_branch
      %141 = sbr.rel (%p138) target = $region32
    $region31: #{embed_net_forward.6} parent=5 // pred_region
      %s142 = ssub.s32 %s9, 1
      %p143 = scmp.lt.s32.totalorder %s14, 1
      %s144 = scalar_select %p143, %s14, 1
      %s145 = smul.addr %s144, 8
      %s146 = smul.addr %s145, 8
      %s147 = scalar_lea.vmem %s0, %s146
      %p148 = pneg %p35
      %p149 = pneg %p32
      %p150 = pneg %p56
      %p151 = pneg %p53
      %p152 = pneg %p77
      %p153 = pneg %p74
      %p154 = pneg %p103
      %p155 = pneg %p100
      %p156 = scmp.lt.s32.totalorder %s14, 1
      %s157 = scalar_select %p156, %s14, 1
      %s158 = smul.addr %s157, 3
      %s159 = smul.addr %s158, 8
      %s160 = scalar_lea.vmem %s3, %s159
      %p161 = scmp.lt.s32.totalorder %s14, 1
      %s162 = scalar_select %p161, %s14, 1
      %s163 = smul.addr %s162, 8
      %s164 = smul.addr %s163, 8
      %s165 = scalar_lea.vmem %s0, %s164
      %p166 = scmp.lt.s32.totalorder %s14, 1
      %s167 = scalar_select %p166, %s14, 1
      %s168 = smul.addr %s167, 3
      %s169 = smul.addr %s168, 8
      %s170 = scalar_lea.vmem %s3, %s169
      %v171 = vld [vmem:[%s165] sm:$0xff]
      %v172 = vld [vmem:[%s165 + $0x8] sm:$0xff]
      %v173 = vld [vmem:[%s165 + $0x10] sm:$0xff]
      %v174 = vld [vmem:[%s165 + $0x18] sm:$0xff]
      %v175 = vld [vmem:[%s165 + $0x20] sm:$0x7]
      %v176 = vld [vmem:[%s165 + $0x28] sm:$0x7]
      %v177 = vld [vmem:[%s1] sm:$0xff]
      %v178 = vld [vmem:[%s1 + $0x8] sm:$0xff]
      %v179 = vld [vmem:[%s1 + $0x10] sm:$0xff]
      %v180 = vld [vmem:[%s1 + $0x18] sm:$0xff]
      %v181 = vld [vmem:[%s1 + $0x20] sm:$0xff]
      %v182 = vld [vmem:[%s1 + $0x28] sm:$0xff]
      %v183 = vld [vmem:[%s1 + $0x30] sm:$0xff]
      %v184 = vld [vmem:[%s1 + $0x38] sm:$0xff]
      %v185 = vld [vmem:[%s1 + $0x40] sm:$0xff]
      %v186 = vld [vmem:[%s1 + $0x48] sm:$0xff]
      %v187 = vld [vmem:[%s1 + $0x50] sm:$0xff]
      %v188 = vld [vmem:[%s1 + $0x58] sm:$0xff]
      %v189 = vld [vmem:[%s1 + $0x60] sm:$0xff]
      %v190 = vld [vmem:[%s1 + $0x68] sm:$0xff]
      %v191 = vld [vmem:[%s1 + $0x70] sm:$0xff]
      %v192 = vld [vmem:[%s1 + $0x78] sm:$0xff]
      %v193 = vld [vmem:[%s1 + $0x80] sm:$0xff]
      %v194 = vld [vmem:[%s1 + $0x88] sm:$0xff]
      %v195 = vld [vmem:[%s1 + $0x90] sm:$0xff]
      %v196 = vld [vmem:[%s1 + $0x98] sm:$0xff]
      %v197 = vld [vmem:[%s1 + $0xa0] sm:$0xff]
      %v198 = vld [vmem:[%s1 + $0xa8] sm:$0xff]
      %v199 = vld [vmem:[%s1 + $0xb0] sm:$0xff]
      %v200 = vld [vmem:[%s1 + $0xb8] sm:$0xff]
      %v201 = vld [vmem:[%s1 + $0xc0] sm:$0xff]
      %v202 = vld [vmem:[%s1 + $0xc8] sm:$0xff]
      %v203 = vld [vmem:[%s1 + $0xd0] sm:$0xff]
      %v204 = vld [vmem:[%s1 + $0xd8] sm:$0xff]
      %v205 = vld [vmem:[%s1 + $0xe0] sm:$0xff]
      %v206 = vld [vmem:[%s1 + $0xe8] sm:$0xff]
      %v207 = vld [vmem:[%s1 + $0xf0] sm:$0xff]
      %v208 = vld [vmem:[%s1 + $0xf8] sm:$0xff]
      %v209 = vld [vmem:[%s1 + $0x100] sm:$0xff]
      %v210 = vld [vmem:[%s1 + $0x108] sm:$0xff]
      %v211 = vld [vmem:[%s1 + $0x110] sm:$0xff]
      %v212 = vld [vmem:[%s1 + $0x118] sm:$0xff]
      %v213 = vld [vmem:[%s1 + $0x120] sm:$0xff]
      %v214 = vld [vmem:[%s1 + $0x128] sm:$0xff]
      %v215 = vld [vmem:[%s1 + $0x130] sm:$0xff]
      %v216 = vld [vmem:[%s1 + $0x138] sm:$0xff]
      %v217 = vld [vmem:[%s1 + $0x140] sm:$0xff]
      %v218 = vld [vmem:[%s1 + $0x148] sm:$0xff]
      %v219 = vld [vmem:[%s1 + $0x150] sm:$0xff]
      %v220 = vld [vmem:[%s1 + $0x158] sm:$0xff]
      %v221 = vld [vmem:[%s1 + $0x160] sm:$0xff]
      %v222 = vld [vmem:[%s1 + $0x168] sm:$0xff]
      %v223 = vld [vmem:[%s1 + $0x170] sm:$0xff]
      %v224 = vld [vmem:[%s1 + $0x178] sm:$0xff]
      %v225 = vld [vmem:[%s1 + $0x180] sm:$0xff]
      %v226 = vld [vmem:[%s1 + $0x188] sm:$0xff]
      %v227 = vld [vmem:[%s1 + $0x190] sm:$0xff]
      %v228 = vld [vmem:[%s1 + $0x198] sm:$0xff]
      %v229 = vld [vmem:[%s1 + $0x1a0] sm:$0xff]
      %v230 = vld [vmem:[%s1 + $0x1a8] sm:$0xff]
      %v231 = vld [vmem:[%s1 + $0x1b0] sm:$0xff]
      %v232 = vld [vmem:[%s1 + $0x1b8] sm:$0xff]
      %v233 = vld [vmem:[%s1 + $0x1c0] sm:$0xff]
      %v234 = vld [vmem:[%s1 + $0x1c8] sm:$0xff]
      %v235 = vld [vmem:[%s1 + $0x1d0] sm:$0xff]
      %v236 = vld [vmem:[%s1 + $0x1d8] sm:$0xff]
      %v237 = vld [vmem:[%s1 + $0x1e0] sm:$0xff]
      %v238 = vld [vmem:[%s1 + $0x1e8] sm:$0xff]
      %v239 = vld [vmem:[%s1 + $0x1f0] sm:$0xff]
      %v240 = vld [vmem:[%s1 + $0x1f8] sm:$0xff]
      %v241 = vld [vmem:[%s165] sm:$0xfe]
      %v242 = vld [vmem:[%s165 + $0x8] sm:$0xfe]
      %v243 = vld [vmem:[%s165 + $0x20] sm:$0xf]
      %v244 = vld [vmem:[%s165 + $0x28] sm:$0xf]
      %s245 = scalar_lea.vmem %s1, 512
      %v246 = vld [vmem:[%s245] sm:$0xff]
      %v247 = vld [vmem:[%s245 + $0x8] sm:$0xff]
      %v248 = vld [vmem:[%s245 + $0x10] sm:$0xff]
      %v249 = vld [vmem:[%s245 + $0x18] sm:$0xff]
      %v250 = vld [vmem:[%s245 + $0x20] sm:$0xff]
      %v251 = vld [vmem:[%s245 + $0x28] sm:$0xff]
      %v252 = vld [vmem:[%s245 + $0x30] sm:$0xff]
      %v253 = vld [vmem:[%s245 + $0x38] sm:$0xff]
      %v254 = vld [vmem:[%s245 + $0x40] sm:$0xff]
      %v255 = vld [vmem:[%s245 + $0x48] sm:$0xff]
      %v256 = vld [vmem:[%s245 + $0x50] sm:$0xff]
      %v257 = vld [vmem:[%s245 + $0x58] sm:$0xff]
      %v258 = vld [vmem:[%s245 + $0x60] sm:$0xff]
      %v259 = vld [vmem:[%s245 + $0x68] sm:$0xff]
      %v260 = vld [vmem:[%s245 + $0x70] sm:$0xff]
      %v261 = vld [vmem:[%s245 + $0x78] sm:$0xff]
      %v262 = vld [vmem:[%s245 + $0x80] sm:$0xff]
      %v263 = vld [vmem:[%s245 + $0x88] sm:$0xff]
      %v264 = vld [vmem:[%s245 + $0x90] sm:$0xff]
      %v265 = vld [vmem:[%s245 + $0x98] sm:$0xff]
      %v266 = vld [vmem:[%s245 + $0xa0] sm:$0xff]
      %v267 = vld [vmem:[%s245 + $0xa8] sm:$0xff]
      %v268 = vld [vmem:[%s245 + $0xb0] sm:$0xff]
      %v269 = vld [vmem:[%s245 + $0xb8] sm:$0xff]
      %v270 = vld [vmem:[%s245 + $0xc0] sm:$0xff]
      %v271 = vld [vmem:[%s245 + $0xc8] sm:$0xff]
      %v272 = vld [vmem:[%s245 + $0xd0] sm:$0xff]
      %v273 = vld [vmem:[%s245 + $0xd8] sm:$0xff]
      %v274 = vld [vmem:[%s245 + $0xe0] sm:$0xff]
      %v275 = vld [vmem:[%s245 + $0xe8] sm:$0xff]
      %v276 = vld [vmem:[%s245 + $0xf0] sm:$0xff]
      %v277 = vld [vmem:[%s245 + $0xf8] sm:$0xff]
      %v278 = vld [vmem:[%s245 + $0x100] sm:$0xff]
      %v279 = vld [vmem:[%s245 + $0x108] sm:$0xff]
      %v280 = vld [vmem:[%s245 + $0x110] sm:$0xff]
      %v281 = vld [vmem:[%s245 + $0x118] sm:$0xff]
      %v282 = vld [vmem:[%s245 + $0x120] sm:$0xff]
      %v283 = vld [vmem:[%s245 + $0x128] sm:$0xff]
      %v284 = vld [vmem:[%s245 + $0x130] sm:$0xff]
      %v285 = vld [vmem:[%s245 + $0x138] sm:$0xff]
      %v286 = vld [vmem:[%s245 + $0x140] sm:$0xff]
      %v287 = vld [vmem:[%s245 + $0x148] sm:$0xff]
      %v288 = vld [vmem:[%s245 + $0x150] sm:$0xff]
      %v289 = vld [vmem:[%s245 + $0x158] sm:$0xff]
      %v290 = vld [vmem:[%s245 + $0x160] sm:$0xff]
      %v291 = vld [vmem:[%s245 + $0x168] sm:$0xff]
      %v292 = vld [vmem:[%s245 + $0x170] sm:$0xff]
      %v293 = vld [vmem:[%s245 + $0x178] sm:$0xff]
      %v294 = vld [vmem:[%s245 + $0x180] sm:$0xff]
      %v295 = vld [vmem:[%s245 + $0x188] sm:$0xff]
      %v296 = vld [vmem:[%s245 + $0x190] sm:$0xff]
      %v297 = vld [vmem:[%s245 + $0x198] sm:$0xff]
      %v298 = vld [vmem:[%s245 + $0x1a0] sm:$0xff]
      %v299 = vld [vmem:[%s245 + $0x1a8] sm:$0xff]
      %v300 = vld [vmem:[%s245 + $0x1b0] sm:$0xff]
      %v301 = vld [vmem:[%s245 + $0x1b8] sm:$0xff]
      %v302 = vld [vmem:[%s245 + $0x1c0] sm:$0xff]
      %v303 = vld [vmem:[%s245 + $0x1c8] sm:$0xff]
      %v304 = vld [vmem:[%s245 + $0x1d0] sm:$0xff]
      %v305 = vld [vmem:[%s245 + $0x1d8] sm:$0xff]
      %v306 = vld [vmem:[%s245 + $0x1e0] sm:$0xff]
      %v307 = vld [vmem:[%s245 + $0x1e8] sm:$0xff]
      %v308 = vld [vmem:[%s245 + $0x1f0] sm:$0xff]
      %v309 = vld [vmem:[%s245 + $0x1f8] sm:$0xff]
      %vm316 = vcmask 1046528
      %v317 = vrot.slane %v241, 1
      %v318 = vrot.slane %v173, 1
      %v319 = vsel %vm316, %v317, %v318
      %v320 = vrot.slane %v242, 1
      %v321 = vrot.slane %v174, 1
      %v322 = vsel %vm316, %v320, %v321
      %v323 = vrot.slane %v243, 1
      %v324 = vsel %vm316, %v318, %v323
      %v325 = vrot.slane %v244, 1
      %v326 = vsel %vm316, %v321, %v325
      %333 = vmatprep.subr.mxu0 %v247
      %334 = vmatpush1.msra.mxu0 %v246
      %335 = vmatprep.subr.mxu0 %v249
      %336 = vmatpush1.msra.mxu0 %v248
      %337 = vmatprep.subr.mxu0 %v251
      %338 = vmatpush1.msra.mxu0 %v250
      %339 = vmatprep.subr.mxu0 %v253
      %340 = vmatpush1.msra.mxu0 %v252
      %341 = vmatprep.subr.mxu0 %v255
      %342 = vmatpush1.msra.mxu0 %v254
      %343 = vmatprep.subr.mxu0 %v257
      %344 = vmatpush1.msra.mxu0 %v256
      %345 = vmatprep.subr.mxu0 %v259
      %346 = vmatpush1.msra.mxu0 %v258
      %347 = vmatprep.subr.mxu0 %v261
      %348 = vmatpush1.msra.mxu0 %v260
      %349 = vmatprep.subr.mxu0 %v263
      %350 = vmatpush1.msra.mxu0 %v262
      %351 = vmatprep.subr.mxu0 %v265
      %352 = vmatpush1.msra.mxu0 %v264
      %353 = vmatprep.subr.mxu0 %v267
      %354 = vmatpush1.msra.mxu0 %v266
      %355 = vmatprep.subr.mxu0 %v269
      %356 = vmatpush1.msra.mxu0 %v268
      %357 = vmatprep.subr.mxu0 %v271
      %358 = vmatpush1.msra.mxu0 %v270
      %359 = vmatprep.subr.mxu0 %v273
      %360 = vmatpush1.msra.mxu0 %v272
      %361 = vmatprep.subr.mxu0 %v275
      %362 = vmatpush1.msra.mxu0 %v274
      %363 = vmatprep.subr.mxu0 %v277
      %364 = vmatpush1.msra.mxu0 %v276
      %365 = vmatprep.subr.mxu0 %v279
      %366 = vmatpush1.msra.mxu0 %v278
      %367 = vmatprep.subr.mxu0 %v281
      %368 = vmatpush1.msra.mxu0 %v280
      %369 = vmatprep.subr.mxu0 %v283
      %370 = vmatpush1.msra.mxu0 %v282
      %371 = vmatprep.subr.mxu0 %v285
      %372 = vmatpush1.msra.mxu0 %v284
      %373 = vmatprep.subr.mxu0 %v287
      %374 = vmatpush1.msra.mxu0 %v286
      %375 = vmatprep.subr.mxu0 %v289
      %376 = vmatpush1.msra.mxu0 %v288
      %377 = vmatprep.subr.mxu0 %v291
      %378 = vmatpush1.msra.mxu0 %v290
      %379 = vmatprep.subr.mxu0 %v293
      %380 = vmatpush1.msra.mxu0 %v292
      %381 = vmatprep.subr.mxu0 %v295
      %382 = vmatpush1.msra.mxu0 %v294
      %383 = vmatprep.subr.mxu0 %v297
      %384 = vmatpush1.msra.mxu0 %v296
      %385 = vmatprep.subr.mxu0 %v299
      %386 = vmatpush1.msra.mxu0 %v298
      %387 = vmatprep.subr.mxu0 %v301
      %388 = vmatpush1.msra.mxu0 %v300
      %389 = vmatprep.subr.mxu0 %v303
      %390 = vmatpush1.msra.mxu0 %v302
      %391 = vmatprep.subr.mxu0 %v305
      %392 = vmatpush1.msra.mxu0 %v304
      %393 = vmatprep.subr.mxu0 %v307
      %394 = vmatpush1.msra.mxu0 %v306
      %395 = vmatprep.subr.mxu0 %v309
      %396 = vmatpush1.msra.mxu0 %v308
      %397 = vmatprep.mubr.f32.mxu0 %v322
      %398 = vmatmul.mubr.f32.gmra.mrb[0].mxu0 %v319
      %v399 = vpop.f32.mrb[0].mxu0
      %v400 = vadd.f32 0.0, %v399
      %v401 = vpop.f32.mrb[0].mxu0
      %v402 = vadd.f32 0.0, %v401
      %403 = vmatprep.mubr.f32.mxu0 %v326
      %404 = vmatmul.mubr.f32.gmra.mrb[0].mxu0 %v324
      %v405 = vpop.f32.mrb[0].mxu0
      %v406 = vadd.f32 0.0, %v405
      %v407 = vpop.f32.mrb[0].mxu0
      %v408 = vadd.f32 0.0, %v407
      %409 = vmatprep.mubr.f32.mxu0 %v325
      %410 = vmatmul.mubr.f32.gmra.mrb[0].mxu0 %v323
      %v411 = vpop.f32.mrb[0].mxu0
      %v412 = vadd.f32 0.0, %v411
      %v413 = vpop.f32.mrb[0].mxu0
      %v414 = vadd.f32 0.0, %v413
      %415 = vdwg.mxu0
      %416 = vmatprep.subr.mxu0 %v178
      %417 = vmatpush1.msra.mxu0 %v177
      %418 = vmatprep.subr.mxu0 %v180
      %419 = vmatpush1.msra.mxu0 %v179
      %420 = vmatprep.subr.mxu0 %v182
      %421 = vmatpush1.msra.mxu0 %v181
      %422 = vmatprep.subr.mxu0 %v184
      %423 = vmatpush1.msra.mxu0 %v183
      %424 = vmatprep.subr.mxu0 %v186
      %425 = vmatpush1.msra.mxu0 %v185
      %426 = vmatprep.subr.mxu0 %v188
      %427 = vmatpush1.msra.mxu0 %v187
      %428 = vmatprep.subr.mxu0 %v190
      %429 = vmatpush1.msra.mxu0 %v189
      %430 = vmatprep.subr.mxu0 %v192
      %431 = vmatpush1.msra.mxu0 %v191
      %432 = vmatprep.subr.mxu0 %v194
      %433 = vmatpush1.msra.mxu0 %v193
      %434 = vmatprep.subr.mxu0 %v196
      %435 = vmatpush1.msra.mxu0 %v195
      %436 = vmatprep.subr.mxu0 %v198
      %437 = vmatpush1.msra.mxu0 %v197
      %438 = vmatprep.subr.mxu0 %v200
      %439 = vmatpush1.msra.mxu0 %v199
      %440 = vmatprep.subr.mxu0 %v202
      %441 = vmatpush1.msra.mxu0 %v201
      %442 = vmatprep.subr.mxu0 %v204
      %443 = vmatpush1.msra.mxu0 %v203
      %444 = vmatprep.subr.mxu0 %v206
      %445 = vmatpush1.msra.mxu0 %v205
      %446 = vmatprep.subr.mxu0 %v208
      %447 = vmatpush1.msra.mxu0 %v207
      %448 = vmatprep.subr.mxu0 %v210
      %449 = vmatpush1.msra.mxu0 %v209
      %450 = vmatprep.subr.mxu0 %v212
      %451 = vmatpush1.msra.mxu0 %v211
      %452 = vmatprep.subr.mxu0 %v214
      %453 = vmatpush1.msra.mxu0 %v213
      %454 = vmatprep.subr.mxu0 %v216
      %455 = vmatpush1.msra.mxu0 %v215
      %456 = vmatprep.subr.mxu0 %v218
      %457 = vmatpush1.msra.mxu0 %v217
      %458 = vmatprep.subr.mxu0 %v220
      %459 = vmatpush1.msra.mxu0 %v219
      %460 = vmatprep.subr.mxu0 %v222
      %461 = vmatpush1.msra.mxu0 %v221
      %462 = vmatprep.subr.mxu0 %v224
      %463 = vmatpush1.msra.mxu0 %v223
      %464 = vmatprep.subr.mxu0 %v226
      %465 = vmatpush1.msra.mxu0 %v225
      %466 = vmatprep.subr.mxu0 %v228
      %467 = vmatpush1.msra.mxu0 %v227
      %468 = vmatprep.subr.mxu0 %v230
      %469 = vmatpush1.msra.mxu0 %v229
      %470 = vmatprep.subr.mxu0 %v232
      %471 = vmatpush1.msra.mxu0 %v231
      %472 = vmatprep.subr.mxu0 %v234
      %473 = vmatpush1.msra.mxu0 %v233
      %474 = vmatprep.subr.mxu0 %v236
      %475 = vmatpush1.msra.mxu0 %v235
      %476 = vmatprep.subr.mxu0 %v238
      %477 = vmatpush1.msra.mxu0 %v237
      %478 = vmatprep.subr.mxu0 %v240
      %479 = vmatpush1.msra.mxu0 %v239
      %480 = vmatprep.mubr.f32.mxu0 %v172
      %481 = vmatmul.mubr.f32.gmra.mrb[0].mxu0 %v171
      %v482 = vpop.f32.mrb[0].mxu0
      %v483 = vadd.f32 %v400, %v482
      %v484 = vpop.f32.mrb[0].mxu0
      %v485 = vadd.f32 %v402, %v484
      %486 = vmatprep.mubr.f32.mxu0 %v174
      %487 = vmatmul.mubr.f32.gmra.mrb[0].mxu0 %v173
      %v488 = vpop.f32.mrb[0].mxu0
      %v489 = vadd.f32 %v406, %v488
      %v490 = vpop.f32.mrb[0].mxu0
      %v491 = vadd.f32 %v408, %v490
      %492 = vmatprep.mubr.f32.mxu0 %v176
      %493 = vmatmul.mubr.f32.gmra.mrb[0].mxu0 %v175
      %v494 = vpop.f32.mrb[0].mxu0
      %v495 = vadd.f32 %v412, %v494
      %v496 = vpop.f32.mrb[0].mxu0
      %v497 = vadd.f32 %v414, %v496
      %498 = vdwg.mxu0
      %v499 = vld [vmem:[%s165] sm:$0xe0]
      %v500 = vld [vmem:[%s165 + $0x8] sm:$0xe0]
      %v501 = vld [vmem:[%s165 + $0x20] sm:$0xff]
      %v502 = vld [vmem:[%s165 + $0x28] sm:$0xff]
      %s503 = scalar_lea.vmem %s1, 1024
      %v504 = vld [vmem:[%s503] sm:$0xff]
      %v505 = vld [vmem:[%s503 + $0x8] sm:$0xff]
      %v506 = vld [vmem:[%s503 + $0x10] sm:$0xff]
      %v507 = vld [vmem:[%s503 + $0x18] sm:$0xff]
      %v508 = vld [vmem:[%s503 + $0x20] sm:$0xff]
      %v509 = vld [vmem:[%s503 + $0x28] sm:$0xff]
      %v510 = vld [vmem:[%s503 + $0x30] sm:$0xff]
      %v511 = vld [vmem:[%s503 + $0x38] sm:$0xff]
      %v512 = vld [vmem:[%s503 + $0x40] sm:$0xff]
      %v513 = vld [vmem:[%s503 + $0x48] sm:$0xff]
      %v514 = vld [vmem:[%s503 + $0x50] sm:$0xff]
      %v515 = vld [vmem:[%s503 + $0x58] sm:$0xff]
      %v516 = vld [vmem:[%s503 + $0x60] sm:$0xff]
      %v517 = vld [vmem:[%s503 + $0x68] sm:$0xff]
      %v518 = vld [vmem:[%s503 + $0x70] sm:$0xff]
      %v519 = vld [vmem:[%s503 + $0x78] sm:$0xff]
      %v520 = vld [vmem:[%s503 + $0x80] sm:$0xff]
      %v521 = vld [vmem:[%s503 + $0x88] sm:$0xff]
      %v522 = vld [vmem:[%s503 + $0x90] sm:$0xff]
      %v523 = vld [vmem:[%s503 + $0x98] sm:$0xff]
      %v524 = vld [vmem:[%s503 + $0xa0] sm:$0xff]
      %v525 = vld [vmem:[%s503 + $0xa8] sm:$0xff]
      %v526 = vld [vmem:[%s503 + $0xb0] sm:$0xff]
      %v527 = vld [vmem:[%s503 + $0xb8] sm:$0xff]
      %v528 = vld [vmem:[%s503 + $0xc0] sm:$0xff]
      %v529 = vld [vmem:[%s503 + $0xc8] sm:$0xff]
      %v530 = vld [vmem:[%s503 + $0xd0] sm:$0xff]
      %v531 = vld [vmem:[%s503 + $0xd8] sm:$0xff]
      %v532 = vld [vmem:[%s503 + $0xe0] sm:$0xff]
      %v533 = vld [vmem:[%s503 + $0xe8] sm:$0xff]
      %v534 = vld [vmem:[%s503 + $0xf0] sm:$0xff]
      %v535 = vld [vmem:[%s503 + $0xf8] sm:$0xff]
      %v536 = vld [vmem:[%s503 + $0x100] sm:$0xff]
      %v537 = vld [vmem:[%s503 + $0x108] sm:$0xff]
      %v538 = vld [vmem:[%s503 + $0x110] sm:$0xff]
      %v539 = vld [vmem:[%s503 + $0x118] sm:$0xff]
      %v540 = vld [vmem:[%s503 + $0x120] sm:$0xff]
      %v541 = vld [vmem:[%s503 + $0x128] sm:$0xff]
      %v542 = vld [vmem:[%s503 + $0x130] sm:$0xff]
      %v543 = vld [vmem:[%s503 + $0x138] sm:$0xff]
      %v544 = vld [vmem:[%s503 + $0x140] sm:$0xff]
      %v545 = vld [vmem:[%s503 + $0x148] sm:$0xff]
      %v546 = vld [vmem:[%s503 + $0x150] sm:$0xff]
      %v547 = vld [vmem:[%s503 + $0x158] sm:$0xff]
      %v548 = vld [vmem:[%s503 + $0x160] sm:$0xff]
      %v549 = vld [vmem:[%s503 + $0x168] sm:$0xff]
      %v550 = vld [vmem:[%s503 + $0x170] sm:$0xff]
      %v551 = vld [vmem:[%s503 + $0x178] sm:$0xff]
      %v552 = vld [vmem:[%s503 + $0x180] sm:$0xff]
      %v553 = vld [vmem:[%s503 + $0x188] sm:$0xff]
      %v554 = vld [vmem:[%s503 + $0x190] sm:$0xff]
      %v555 = vld [vmem:[%s503 + $0x198] sm:$0xff]
      %v556 = vld [vmem:[%s503 + $0x1a0] sm:$0xff]
      %v557 = vld [vmem:[%s503 + $0x1a8] sm:$0xff]
      %v558 = vld [vmem:[%s503 + $0x1b0] sm:$0xff]
      %v559 = vld [vmem:[%s503 + $0x1b8] sm:$0xff]
      %v560 = vld [vmem:[%s503 + $0x1c0] sm:$0xff]
      %v561 = vld [vmem:[%s503 + $0x1c8] sm:$0xff]
      %v562 = vld [vmem:[%s503 + $0x1d0] sm:$0xff]
      %v563 = vld [vmem:[%s503 + $0x1d8] sm:$0xff]
      %v564 = vld [vmem:[%s503 + $0x1e0] sm:$0xff]
      %v565 = vld [vmem:[%s503 + $0x1e8] sm:$0xff]
      %v566 = vld [vmem:[%s503 + $0x1f0] sm:$0xff]
      %v567 = vld [vmem:[%s503 + $0x1f8] sm:$0xff]
      %vm572 = vcmask 1042432
      %v573 = vrot.slane %v499, 5
      %v574 = vrot.slane %v173, 5
      %v575 = vsel %vm572, %v573, %v574
      %v576 = vrot.slane %v500, 5
      %v577 = vrot.slane %v174, 5
      %v578 = vsel %vm572, %v576, %v577
      %v579 = vrot.slane %v501, 5
      %v580 = vsel %vm572, %v574, %v579
      %v581 = vrot.slane %v502, 5
      %v582 = vsel %vm572, %v577, %v581
      %589 = vmatprep.subr.mxu0 %v505
      %590 = vmatpush1.msra.mxu0 %v504
      %591 = vmatprep.subr.mxu0 %v507
      %592 = vmatpush1.msra.mxu0 %v506
      %593 = vmatprep.subr.mxu0 %v509
      %594 = vmatpush1.msra.mxu0 %v508
      %595 = vmatprep.subr.mxu0 %v511
      %596 = vmatpush1.msra.mxu0 %v510
      %597 = vmatprep.subr.mxu0 %v513
      %598 = vmatpush1.msra.mxu0 %v512
      %599 = vmatprep.subr.mxu0 %v515
      %600 = vmatpush1.msra.mxu0 %v514
      %601 = vmatprep.subr.mxu0 %v517
      %602 = vmatpush1.msra.mxu0 %v516
      %603 = vmatprep.subr.mxu0 %v519
      %604 = vmatpush1.msra.mxu0 %v518
      %605 = vmatprep.subr.mxu0 %v521
      %606 = vmatpush1.msra.mxu0 %v520
      %607 = vmatprep.subr.mxu0 %v523
      %608 = vmatpush1.msra.mxu0 %v522
      %609 = vmatprep.subr.mxu0 %v525
      %610 = vmatpush1.msra.mxu0 %v524
      %611 = vmatprep.subr.mxu0 %v527
      %612 = vmatpush1.msra.mxu0 %v526
      %613 = vmatprep.subr.mxu0 %v529
      %614 = vmatpush1.msra.mxu0 %v528
      %615 = vmatprep.subr.mxu0 %v531
      %616 = vmatpush1.msra.mxu0 %v530
      %617 = vmatprep.subr.mxu0 %v533
      %618 = vmatpush1.msra.mxu0 %v532
      %619 = vmatprep.subr.mxu0 %v535
      %620 = vmatpush1.msra.mxu0 %v534
      %621 = vmatprep.subr.mxu0 %v537
      %622 = vmatpush1.msra.mxu0 %v536
      %623 = vmatprep.subr.mxu0 %v539
      %624 = vmatpush1.msra.mxu0 %v538
      %625 = vmatprep.subr.mxu0 %v541
      %626 = vmatpush1.msra.mxu0 %v540
      %627 = vmatprep.subr.mxu0 %v543
      %628 = vmatpush1.msra.mxu0 %v542
      %629 = vmatprep.subr.mxu0 %v545
      %630 = vmatpush1.msra.mxu0 %v544
      %631 = vmatprep.subr.mxu0 %v547
      %632 = vmatpush1.msra.mxu0 %v546
      %633 = vmatprep.subr.mxu0 %v549
      %634 = vmatpush1.msra.mxu0 %v548
      %635 = vmatprep.subr.mxu0 %v551
      %636 = vmatpush1.msra.mxu0 %v550
      %637 = vmatprep.subr.mxu0 %v553
      %638 = vmatpush1.msra.mxu0 %v552
      %639 = vmatprep.subr.mxu0 %v555
      %640 = vmatpush1.msra.mxu0 %v554
      %641 = vmatprep.subr.mxu0 %v557
      %642 = vmatpush1.msra.mxu0 %v556
      %643 = vmatprep.subr.mxu0 %v559
      %644 = vmatpush1.msra.mxu0 %v558
      %645 = vmatprep.subr.mxu0 %v561
      %646 = vmatpush1.msra.mxu0 %v560
      %647 = vmatprep.subr.mxu0 %v563
      %648 = vmatpush1.msra.mxu0 %v562
      %649 = vmatprep.subr.mxu0 %v565
      %650 = vmatpush1.msra.mxu0 %v564
      %651 = vmatprep.subr.mxu0 %v567
      %652 = vmatpush1.msra.mxu0 %v566
      %653 = vmatprep.mubr.f32.mxu0 %v578
      %654 = vmatmul.mubr.f32.gmra.mrb[0].mxu0 %v575
      %v655 = vpop.f32.mrb[0].mxu0
      %v656 = vadd.f32 0.0, %v655
      %v657 = vpop.f32.mrb[0].mxu0
      %v658 = vadd.f32 0.0, %v657
      %659 = vmatprep.mubr.f32.mxu0 %v582
      %660 = vmatmul.mubr.f32.gmra.mrb[0].mxu0 %v580
      %v661 = vpop.f32.mrb[0].mxu0
      %v662 = vadd.f32 0.0, %v661
      %v663 = vpop.f32.mrb[0].mxu0
      %v664 = vadd.f32 0.0, %v663
      %665 = vmatprep.mubr.f32.mxu0 %v581
      %666 = vmatmul.mubr.f32.gmra.mrb[0].mxu0 %v579
      %v667 = vpop.f32.mrb[0].mxu0
      %v668 = vadd.f32 0.0, %v667
      %v669 = vpop.f32.mrb[0].mxu0
      %v670 = vadd.f32 0.0, %v669
      %671 = vdwg.mxu0
      %v672 = vadd.f32 %v483, %v656
      %v673 = vadd.f32 %v485, %v658
      %v674 = vadd.f32 %v489, %v662
      %v675 = vadd.f32 %v491, %v664
      %v676 = vadd.f32 %v495, %v668
      %v677 = vadd.f32 %v497, %v670
      %v678 = vld [vmem:[%s165] sm:$0xc0]
      %v679 = vld [vmem:[%s165 + $0x8] sm:$0xc0]
      %v680 = vld [vmem:[%s165 + $0x10] sm:$0xff]
      %v681 = vld [vmem:[%s165 + $0x18] sm:$0xff]
      %v682 = vld [vmem:[%s165 + $0x20] sm:$0xff]
      %v683 = vld [vmem:[%s165 + $0x28] sm:$0xff]
      %v684 = vld [vmem:[%s165 + $0x30] sm:$0x1]
      %v685 = vld [vmem:[%s165 + $0x38] sm:$0x1]
      %s686 = scalar_lea.vmem %s1, 1536
      %v687 = vld [vmem:[%s686] sm:$0xff]
      %v688 = vld [vmem:[%s686 + $0x8] sm:$0xff]
      %v689 = vld [vmem:[%s686 + $0x10] sm:$0xff]
      %v690 = vld [vmem:[%s686 + $0x18] sm:$0xff]
      %v691 = vld [vmem:[%s686 + $0x20] sm:$0xff]
      %v692 = vld [vmem:[%s686 + $0x28] sm:$0xff]
      %v693 = vld [vmem:[%s686 + $0x30] sm:$0xff]
      %v694 = vld [vmem:[%s686 + $0x38] sm:$0xff]
      %v695 = vld [vmem:[%s686 + $0x40] sm:$0xff]
      %v696 = vld [vmem:[%s686 + $0x48] sm:$0xff]
      %v697 = vld [vmem:[%s686 + $0x50] sm:$0xff]
      %v698 = vld [vmem:[%s686 + $0x58] sm:$0xff]
      %v699 = vld [vmem:[%s686 + $0x60] sm:$0xff]
      %v700 = vld [vmem:[%s686 + $0x68] sm:$0xff]
      %v701 = vld [vmem:[%s686 + $0x70] sm:$0xff]
      %v702 = vld [vmem:[%s686 + $0x78] sm:$0xff]
      %v703 = vld [vmem:[%s686 + $0x80] sm:$0xff]
      %v704 = vld [vmem:[%s686 + $0x88] sm:$0xff]
      %v705 = vld [vmem:[%s686 + $0x90] sm:$0xff]
      %v706 = vld [vmem:[%s686 + $0x98] sm:$0xff]
      %v707 = vld [vmem:[%s686 + $0xa0] sm:$0xff]
      %v708 = vld [vmem:[%s686 + $0xa8] sm:$0xff]
      %v709 = vld [vmem:[%s686 + $0xb0] sm:$0xff]
      %v710 = vld [vmem:[%s686 + $0xb8] sm:$0xff]
      %v711 = vld [vmem:[%s686 + $0xc0] sm:$0xff]
      %v712 = vld [vmem:[%s686 + $0xc8] sm:$0xff]
      %v713 = vld [vmem:[%s686 + $0xd0] sm:$0xff]
      %v714 = vld [vmem:[%s686 + $0xd8] sm:$0xff]
      %v715 = vld [vmem:[%s686 + $0xe0] sm:$0xff]
      %v716 = vld [vmem:[%s686 + $0xe8] sm:$0xff]
      %v717 = vld [vmem:[%s686 + $0xf0] sm:$0xff]
      %v718 = vld [vmem:[%s686 + $0xf8] sm:$0xff]
      %v719 = vld [vmem:[%s686 + $0x100] sm:$0xff]
      %v720 = vld [vmem:[%s686 + $0x108] sm:$0xff]
      %v721 = vld [vmem:[%s686 + $0x110] sm:$0xff]
      %v722 = vld [vmem:[%s686 + $0x118] sm:$0xff]
      %v723 = vld [vmem:[%s686 + $0x120] sm:$0xff]
      %v724 = vld [vmem:[%s686 + $0x128] sm:$0xff]
      %v725 = vld [vmem:[%s686 + $0x130] sm:$0xff]
      %v726 = vld [vmem:[%s686 + $0x138] sm:$0xff]
      %v727 = vld [vmem:[%s686 + $0x140] sm:$0xff]
      %v728 = vld [vmem:[%s686 + $0x148] sm:$0xff]
      %v729 = vld [vmem:[%s686 + $0x150] sm:$0xff]
      %v730 = vld [vmem:[%s686 + $0x158] sm:$0xff]
      %v731 = vld [vmem:[%s686 + $0x160] sm:$0xff]
      %v732 = vld [vmem:[%s686 + $0x168] sm:$0xff]
      %v733 = vld [vmem:[%s686 + $0x170] sm:$0xff]
      %v734 = vld [vmem:[%s686 + $0x178] sm:$0xff]
      %v735 = vld [vmem:[%s686 + $0x180] sm:$0xff]
      %v736 = vld [vmem:[%s686 + $0x188] sm:$0xff]
      %v737 = vld [vmem:[%s686 + $0x190] sm:$0xff]
      %v738 = vld [vmem:[%s686 + $0x198] sm:$0xff]
      %v739 = vld [vmem:[%s686 + $0x1a0] sm:$0xff]
      %v740 = vld [vmem:[%s686 + $0x1a8] sm:$0xff]
      %v741 = vld [vmem:[%s686 + $0x1b0] sm:$0xff]
      %v742 = vld [vmem:[%s686 + $0x1b8] sm:$0xff]
      %v743 = vld [vmem:[%s686 + $0x1c0] sm:$0xff]
      %v744 = vld [vmem:[%s686 + $0x1c8] sm:$0xff]
      %v745 = vld [vmem:[%s686 + $0x1d0] sm:$0xff]
      %v746 = vld [vmem:[%s686 + $0x1d8] sm:$0xff]
      %v747 = vld [vmem:[%s686 + $0x1e0] sm:$0xff]
      %v748 = vld [vmem:[%s686 + $0x1e8] sm:$0xff]
      %v749 = vld [vmem:[%s686 + $0x1f0] sm:$0xff]
      %v750 = vld [vmem:[%s686 + $0x1f8] sm:$0xff]
      %vm759 = vcmask 1041408
      %v760 = vrot.slane %v678, 6
      %v761 = vrot.slane %v680, 6
      %v762 = vsel %vm759, %v760, %v761
      %v763 = vrot.slane %v679, 6
      %v764 = vrot.slane %v681, 6
      %v765 = vsel %vm759, %v763, %v764
      %v766 = vrot.slane %v682, 6
      %v767 = vsel %vm759, %v761, %v766
      %v768 = vrot.slane %v683, 6
      %v769 = vsel %vm759, %v764, %v768
      %v770 = vrot.slane %v684, 6
      %v771 = vsel %vm759, %v766, %v770
      %v772 = vrot.slane %v685, 6
      %v773 = vsel %vm759, %v768, %v772
      %780 = vmatprep.subr.mxu0 %v688
      %781 = vmatpush1.msra.mxu0 %v687
      %782 = vmatprep.subr.mxu0 %v690
      %783 = vmatpush1.msra.mxu0 %v689
      %784 = vmatprep.subr.mxu0 %v692
      %785 = vmatpush1.msra.mxu0 %v691
      %786 = vmatprep.subr.mxu0 %v694
      %787 = vmatpush1.msra.mxu0 %v693
      %788 = vmatprep.subr.mxu0 %v696
      %789 = vmatpush1.msra.mxu0 %v695
      %790 = vmatprep.subr.mxu0 %v698
      %791 = vmatpush1.msra.mxu0 %v697
      %792 = vmatprep.subr.mxu0 %v700
      %793 = vmatpush1.msra.mxu0 %v699
      %794 = vmatprep.subr.mxu0 %v702
      %795 = vmatpush1.msra.mxu0 %v701
      %796 = vmatprep.subr.mxu0 %v704
      %797 = vmatpush1.msra.mxu0 %v703
      %798 = vmatprep.subr.mxu0 %v706
      %799 = vmatpush1.msra.mxu0 %v705
      %800 = vmatprep.subr.mxu0 %v708
      %801 = vmatpush1.msra.mxu0 %v707
      %802 = vmatprep.subr.mxu0 %v710
      %803 = vmatpush1.msra.mxu0 %v709
      %804 = vmatprep.subr.mxu0 %v712
      %805 = vmatpush1.msra.mxu0 %v711
      %806 = vmatprep.subr.mxu0 %v714
      %807 = vmatpush1.msra.mxu0 %v713
      %808 = vmatprep.subr.mxu0 %v716
      %809 = vmatpush1.msra.mxu0 %v715
      %810 = vmatprep.subr.mxu0 %v718
      %811 = vmatpush1.msra.mxu0 %v717
      %812 = vmatprep.subr.mxu0 %v720
      %813 = vmatpush1.msra.mxu0 %v719
      %814 = vmatprep.subr.mxu0 %v722
      %815 = vmatpush1.msra.mxu0 %v721
      %816 = vmatprep.subr.mxu0 %v724
      %817 = vmatpush1.msra.mxu0 %v723
      %818 = vmatprep.subr.mxu0 %v726
      %819 = vmatpush1.msra.mxu0 %v725
      %820 = vmatprep.subr.mxu0 %v728
      %821 = vmatpush1.msra.mxu0 %v727
      %822 = vmatprep.subr.mxu0 %v730
      %823 = vmatpush1.msra.mxu0 %v729
      %824 = vmatprep.subr.mxu0 %v732
      %825 = vmatpush1.msra.mxu0 %v731
      %826 = vmatprep.subr.mxu0 %v734
      %827 = vmatpush1.msra.mxu0 %v733
      %828 = vmatprep.subr.mxu0 %v736
      %829 = vmatpush1.msra.mxu0 %v735
      %830 = vmatprep.subr.mxu0 %v738
      %831 = vmatpush1.msra.mxu0 %v737
      %832 = vmatprep.subr.mxu0 %v740
      %833 = vmatpush1.msra.mxu0 %v739
      %834 = vmatprep.subr.mxu0 %v742
      %835 = vmatpush1.msra.mxu0 %v741
      %836 = vmatprep.subr.mxu0 %v744
      %837 = vmatpush1.msra.mxu0 %v743
      %838 = vmatprep.subr.mxu0 %v746
      %839 = vmatpush1.msra.mxu0 %v745
      %840 = vmatprep.subr.mxu0 %v748
      %841 = vmatpush1.msra.mxu0 %v747
      %842 = vmatprep.subr.mxu0 %v750
      %843 = vmatpush1.msra.mxu0 %v749
      %844 = vmatprep.mubr.f32.mxu0 %v765
      %845 = vmatmul.mubr.f32.gmra.mrb[0].mxu0 %v762
      %v846 = vpop.f32.mrb[0].mxu0
      %v847 = vadd.f32 0.0, %v846
      %v848 = vpop.f32.mrb[0].mxu0
      %v849 = vadd.f32 0.0, %v848
      %850 = vmatprep.mubr.f32.mxu0 %v769
      %851 = vmatmul.mubr.f32.gmra.mrb[0].mxu0 %v767
      %v852 = vpop.f32.mrb[0].mxu0
      %v853 = vadd.f32 0.0, %v852
      %v854 = vpop.f32.mrb[0].mxu0
      %v855 = vadd.f32 0.0, %v854
      %856 = vmatprep.mubr.f32.mxu0 %v773
      %857 = vmatmul.mubr.f32.gmra.mrb[0].mxu0 %v771
      %v858 = vpop.f32.mrb[0].mxu0
      %v859 = vadd.f32 0.0, %v858
      %v860 = vpop.f32.mrb[0].mxu0
      %v861 = vadd.f32 0.0, %v860
      %862 = vdwg.mxu0
      %v863 = vadd.f32 %v672, %v847
      %v864 = vadd.f32 %v673, %v849
      %v865 = vadd.f32 %v674, %v853
      %v866 = vadd.f32 %v675, %v855
      %v867 = vadd.f32 %v676, %v859
      %v868 = vadd.f32 %v677, %v861
      %v869 = vmax.f32 %v863, %v864
      %v870 = vmax.f32 %v865, %v866
      %v871 = vmax.f32 %v867, %v868
      %v872 = vld [vmem:[%s2] sm:$0x1]
      %v874 = vlaneseq
      %v875 = vshrl.u32 %v874, 7
      %v876 = vsub.s32 0, %v875
      %v877 = vrot.slane %v872, %v876
      %v879 = vadd.f32 %v869, %v877
      %v880 = vadd.f32 %v870, %v877
      %v881 = vadd.f32 %v871, %v877
      %v882 = vmax.f32 %v879, 0.0
      %v883 = vmax.f32 %v880, 0.0
      %v884 = vmax.f32 %v881, 0.0
      %885 = vst [vmem:[%s170] sm:$0xff] %v882
      %886 = vst [vmem:[%s170 + $0x8] sm:$0xff] %v883
      %887 = vst [vmem:[%s170 + $0x10] sm:$0x7] %v884
      %p888 = scmp.lt.s32.totalorder %s14, 1
      %s889 = scalar_select %p888, %s14, 1
      %s890 = smul.addr %s889, 3
      %s891 = smul.addr %s890, 8
      %s892 = scalar_lea.vmem %s3, %s891
      // Predicated region
      $region33: #{embed_net_forward.6} parent=31 // pred_check
        %p893 = pneg %p100
      $region34: #{embed_net_forward.6} parent=31 // pred_check_branch
        %895 = sbr.rel (%p893) target = $region36
      $region35: #{embed_net_forward.6} parent=31 // pred_region
        _
      $region36: #{embed_net_forward.6} parent=31 // pred_fallthru
        _
    $region32: #{embed_net_forward.6} parent=5 // pred_fallthru
      _
    %p896 = scmp.le.s32.totalorder 2, %s9
    // Predicated region
    $region37: #{embed_net_forward.6} parent=5 // pred_check
      %p897 = pneg %p896
    $region38: #{embed_net_forward.6} parent=5 // pred_check_branch
      %899 = sbr.rel (%p897) target = $region40
    $region39: #{embed_net_forward.6} parent=5 // pred_region
      %s900 = ssub.s32 %s9, 2
      // Predicated region
      $region41: #{embed_net_forward.6} parent=39 // pred_check
        %p901 = pneg %p106
      $region42: #{embed_net_forward.6} parent=39 // pred_check_branch
        %903 = sbr.rel (%p901) target = $region44
      $region43: #{embed_net_forward.6} parent=39 // pred_region
        %p904 = scmp.lt.s32.totalorder %s15, 1
        %s905 = scalar_select %p904, %s15, 1
        %s906 = smul.addr %s905, 3
        %s907 = smul.addr %s906, 8
        %s908 = scalar_lea.vmem %s3, %s907
      $region44: #{embed_net_forward.6} parent=39 // pred_fallthru
        _
    $region40: #{embed_net_forward.6} parent=5 // pred_fallthru
      _
  $region6: #{embed_net_forward.6} parent=0 // loop_footer
    %s13 = sadd.s32 1, %s9
  $region7: #{embed_net_forward.6} parent=0 // loop_footer_branch
    %8 = sbr.rel target = $region3
  $region8: #{embed_net_forward.6} parent=0 // loop_exit
    _

// kernel: embed_net_forward.7
$region0: #{embed_net_forward.7}
  #allocation0 [shape = 'u32[]', space=smem, size = 0x4, offset = 0x4, fixed_abs, tag = 'smem constant byte address 0x4 - core index']
  #allocation1 [shape = 'u32[144,128]{1,0:T(1,128)}', space=vmem, size = 0x12000, scoped, tag = 'internal scratch']
  %s0 = inlined_call_operand.vmem [shape: f32[2,9,256], index: 0, kind: input, shape index: {}]
  %s1 = inlined_call_operand.vmem [shape: f32[4,256,256], index: 1, kind: input, shape index: {}]
  %s2 = inlined_call_operand.vmem [shape: f32[1,128], index: 2, kind: input, shape index: {}]
  %s3 = inlined_call_operand.vmem [shape: f32[2,5,128], index: 3, kind: output, shape index: {}]
  %s4 = sld [smem:[#allocation0]]
  $region45: #{embed_net_forward.7} parent=0
    _
  %s6 = ssub.s32 1, %s4
  %s7 = scalar_select 0, %s6, %s4
  loop: start=0, step=1, limit=4
  $region2: #{embed_net_forward.7} parent=0 // loop_pre_header
    _
  $region3: #{embed_net_forward.7} parent=0 // loop_header
    %s9 = sphi 0, %s13
    %p10 = scmp.ge.s32.totalorder %s9, 4
    %s19 = sphi 0, %s21
    %s22 = sphi 0, %s19
    %s23 = sphi 0, %s22
    %s39 = sphi 0, %s23
    %s43 = sphi 0, %s43
    %s45 = sphi 0, %s43
    %s46 = sphi 0, %s45
    %s60 = sphi 0, %s46
    %s64 = sphi 0, %s64
    %s66 = sphi 0, %s64
    %s67 = sphi 0, %s66
    %s81 = sphi 0, %s67
    %s87 = sphi 0, %s89
    %s90 = sphi 0, %s87
    %s91 = sphi 0, %s90
    %s107 = sphi 0, %s91
  $region4: #{embed_net_forward.7} parent=0 // loop_header_branch
    %12 = sbr.rel (%p10) target = $region8
  $region5: #{embed_net_forward.7} parent=0 // loop_body
    %s14 = ssub.s32 %s9, 1
    %s15 = ssub.s32 %s9, 2
    %s16 = sadd.s32 %s9, 1
    %s17 = ssub.s32 %s9, %s16
    %p18 = scmp.eq.s32.totalorder %s17, 0
    %s20 = sadd.s32 %s19, 1
    %s21 = scalar_select %p18, %s19, %s20
    %p24 = pneg %p18
    %p25 = scmp.eq.s32.totalorder %s9, 1
    %p26 = por %p24, %p25
    %p27 = scmp.ne.s32.totalorder %s19, %s22
    %p28 = scmp.eq.s32.totalorder %s9, 0
    %p29 = por %p27, %p28
    %p30 = scmp.ne.s32.totalorder %s19, %s22
    %p31 = scmp.eq.s32.totalorder %s14, 1
    %p32 = por %p30, %p31
    %p33 = scmp.ne.s32.totalorder %s22, %s23
    %p34 = scmp.eq.s32.totalorder %s14, 0
    %p35 = por %p33, %p34
    %p36 = scmp.ne.s32.totalorder %s22, %s23
    %p37 = scmp.eq.s32.totalorder %s15, 1
    %p38 = por %p36, %p37
    %p40 = scmp.ne.s32.totalorder %s23, %s39
    %p41 = scmp.eq.s32.totalorder %s15, 0
    %p42 = por %p40, %p41
    %s44 = sadd.s32 %s43, 1
    %p47 = scmp.eq.s32.totalorder %s9, 1
    %p48 = scmp.ne.s32.totalorder %s43, %s45
    %p49 = scmp.eq.s32.totalorder %s9, 0
    %p50 = por %p48, %p49
    %p51 = scmp.ne.s32.totalorder %s43, %s45
    %p52 = scmp.eq.s32.totalorder %s14, 1
    %p53 = por %p51, %p52
    %p54 = scmp.ne.s32.totalorder %s45, %s46
    %p55 = scmp.eq.s32.totalorder %s14, 0
    %p56 = por %p54, %p55
    %p57 = scmp.ne.s32.totalorder %s45, %s46
    %p58 = scmp.eq.s32.totalorder %s15, 1
    %p59 = por %p57, %p58
    %p61 = scmp.ne.s32.totalorder %s46, %s60
    %p62 = scmp.eq.s32.totalorder %s15, 0
    %p63 = por %p61, %p62
    %s65 = sadd.s32 %s64, 1
    %p68 = scmp.eq.s32.totalorder %s9, 1
    %p69 = scmp.ne.s32.totalorder %s64, %s66
    %p70 = scmp.eq.s32.totalorder %s9, 0
    %p71 = por %p69, %p70
    %p72 = scmp.ne.s32.totalorder %s64, %s66
    %p73 = scmp.eq.s32.totalorder %s14, 1
    %p74 = por %p72, %p73
    %p75 = scmp.ne.s32.totalorder %s66, %s67
    %p76 = scmp.eq.s32.totalorder %s14, 0
    %p77 = por %p75, %p76
    %p78 = scmp.ne.s32.totalorder %s66, %s67
    %p79 = scmp.eq.s32.totalorder %s15, 1
    %p80 = por %p78, %p79
    %p82 = scmp.ne.s32.totalorder %s67, %s81
    %p83 = scmp.eq.s32.totalorder %s15, 0
    %p84 = por %p82, %p83
    %s85 = ssub.s32 %s9, %s16
    %p86 = scmp.eq.s32.totalorder %s85, 0
    %s88 = sadd.s32 %s87, 1
    %s89 = scalar_select %p86, %s87, %s88
    %p92 = pneg %p86
    %p93 = scmp.eq.s32.totalorder %s9, 1
    %p94 = por %p92, %p93
    %p95 = scmp.ne.s32.totalorder %s87, %s90
    %p96 = scmp.eq.s32.totalorder %s9, 0
    %p97 = por %p95, %p96
    %p98 = scmp.ne.s32.totalorder %s87, %s90
    %p99 = scmp.eq.s32.totalorder %s14, 1
    %p100 = por %p98, %p99
    %p101 = scmp.ne.s32.totalorder %s90, %s91
    %p102 = scmp.eq.s32.totalorder %s14, 0
    %p103 = por %p101, %p102
    %p104 = scmp.ne.s32.totalorder %s90, %s91
    %p105 = scmp.eq.s32.totalorder %s15, 1
    %p106 = por %p104, %p105
    %p108 = scmp.ne.s32.totalorder %s91, %s107
    %p109 = scmp.eq.s32.totalorder %s15, 0
    %p110 = por %p108, %p109
    %p111 = scmp.le.s32.totalorder 1, %s9
    %p112 = scmp.lt.s32.totalorder %s9, 3
    %p113 = pnand %p111, %p112
    %p114 = pneg %p113
    // Predicated region
    $region9: #{embed_net_forward.7} parent=5 // pred_check
      _
    $region10: #{embed_net_forward.7} parent=5 // pred_check_branch
      %116 = sbr.rel (%p113) target = $region12
    $region11: #{embed_net_forward.7} parent=5 // pred_region
      %s117 = ssub.s32 %s9, 1
      // Predicated region
      $region13: #{embed_net_forward.7} parent=11 // pred_check
        %p118 = pneg %p56
      $region14: #{embed_net_forward.7} parent=11 // pred_check_branch
        %120 = sbr.rel (%p118) target = $region16
      $region15: #{embed_net_forward.7} parent=11 // pred_region
        _
      $region16: #{embed_net_forward.7} parent=11 // pred_fallthru
        _
      // Predicated region
      $region17: #{embed_net_forward.7} parent=11 // pred_check
        %p121 = pneg %p77
      $region18: #{embed_net_forward.7} parent=11 // pred_check_branch
        %123 = sbr.rel (%p121) target = $region20
      $region19: #{embed_net_forward.7} parent=11 // pred_region
        _
      $region20: #{embed_net_forward.7} parent=11 // pred_fallthru
        _
    $region12: #{embed_net_forward.7} parent=5 // pred_fallthru
      _
    %p124 = scmp.lt.s32.totalorder %s9, 2
    // Predicated region
    $region21: #{embed_net_forward.7} parent=5 // pred_check
      %p125 = pneg %p124
    $region22: #{embed_net_forward.7} parent=5 // pred_check_branch
      %127 = sbr.rel (%p125) target = $region24
    $region23: #{embed_net_forward.7} parent=5 // pred_region
      // Predicated region
      $region25: #{embed_net_forward.7} parent=23 // pred_check
        %p128 = pneg %p29
      $region26: #{embed_net_forward.7} parent=23 // pred_check_branch
        %130 = sbr.rel (%p128) target = $region28
      $region27: #{embed_net_forward.7} parent=23 // pred_region
        %p131 = scmp.lt.s32.totalorder %s9, 1
        %s132 = scalar_select %p131, %s9, 1
        %s133 = smul.addr %s132, 4
        %s134 = smul.addr %s133, 8
        %s135 = scalar_lea.vmem %s0, %s134
      $region28: #{embed_net_forward.7} parent=23 // pred_fallthru
        _
    $region24: #{embed_net_forward.7} parent=5 // pred_fallthru
      _
    %p136 = scmp.le.s32.totalorder 1, %s9
    %p137 = scmp.lt.s32.totalorder %s9, 3
    %p138 = pnand %p136, %p137
    %p139 = pneg %p138
    // Predicated region
    $region29: #{embed_net_forward.7} parent=5 // pred_check
      _
    $region30: #{embed_net_forward.7} parent=5 // pred_check_branch
      %141 = sbr.rel (%p138) target = $region32
    $region31: #{embed_net_forward.7} parent=5 // pred_region
      %s142 = ssub.s32 %s9, 1
      %p143 = scmp.lt.s32.totalorder %s14, 1
      %s144 = scalar_select %p143, %s14, 1
      %s145 = smul.addr %s144, 4
      %s146 = smul.addr %s145, 8
      %s147 = scalar_lea.vmem %s0, %s146
      %p148 = pneg %p35
      %p149 = pneg %p32
      %p150 = pneg %p56
      %p151 = pneg %p53
      %p152 = pneg %p77
      %p153 = pneg %p74
      %p154 = pneg %p103
      %p155 = pneg %p100
      %p156 = scmp.lt.s32.totalorder %s14, 1
      %s157 = scalar_select %p156, %s14, 1
      %s158 = smul.addr %s157, 8
      %s159 = scalar_lea.vmem %s3, %s158
      %p160 = scmp.lt.s32.totalorder %s14, 1
      %s161 = scalar_select %p160, %s14, 1
      %s162 = smul.addr %s161, 4
      %s163 = smul.addr %s162, 8
      %s164 = scalar_lea.vmem %s0, %s163
      %p165 = scmp.lt.s32.totalorder %s14, 1
      %s166 = scalar_select %p165, %s14, 1
      %s167 = smul.addr %s166, 8
      %s168 = scalar_lea.vmem %s3, %s167
      %v169 = vld [vmem:[%s164] sm:$0x1f]
      %v170 = vld [vmem:[%s164 + $0x8] sm:$0x1f]
      %v171 = vld [vmem:[%s1] sm:$0xff]
      %v172 = vld [vmem:[%s1 + $0x8] sm:$0xff]
      %v173 = vld [vmem:[%s1 + $0x10] sm:$0xff]
      %v174 = vld [vmem:[%s1 + $0x18] sm:$0xff]
      %v175 = vld [vmem:[%s1 + $0x20] sm:$0xff]
      %v176 = vld [vmem:[%s1 + $0x28] sm:$0xff]
      %v177 = vld [vmem:[%s1 + $0x30] sm:$0xff]
      %v178 = vld [vmem:[%s1 + $0x38] sm:$0xff]
      %v179 = vld [vmem:[%s1 + $0x40] sm:$0xff]
      %v180 = vld [vmem:[%s1 + $0x48] sm:$0xff]
      %v181 = vld [vmem:[%s1 + $0x50] sm:$0xff]
      %v182 = vld [vmem:[%s1 + $0x58] sm:$0xff]
      %v183 = vld [vmem:[%s1 + $0x60] sm:$0xff]
      %v184 = vld [vmem:[%s1 + $0x68] sm:$0xff]
      %v185 = vld [vmem:[%s1 + $0x70] sm:$0xff]
      %v186 = vld [vmem:[%s1 + $0x78] sm:$0xff]
      %v187 = vld [vmem:[%s1 + $0x80] sm:$0xff]
      %v188 = vld [vmem:[%s1 + $0x88] sm:$0xff]
      %v189 = vld [vmem:[%s1 + $0x90] sm:$0xff]
      %v190 = vld [vmem:[%s1 + $0x98] sm:$0xff]
      %v191 = vld [vmem:[%s1 + $0xa0] sm:$0xff]
      %v192 = vld [vmem:[%s1 + $0xa8] sm:$0xff]
      %v193 = vld [vmem:[%s1 + $0xb0] sm:$0xff]
      %v194 = vld [vmem:[%s1 + $0xb8] sm:$0xff]
      %v195 = vld [vmem:[%s1 + $0xc0] sm:$0xff]
      %v196 = vld [vmem:[%s1 + $0xc8] sm:$0xff]
      %v197 = vld [vmem:[%s1 + $0xd0] sm:$0xff]
      %v198 = vld [vmem:[%s1 + $0xd8] sm:$0xff]
      %v199 = vld [vmem:[%s1 + $0xe0] sm:$0xff]
      %v200 = vld [vmem:[%s1 + $0xe8] sm:$0xff]
      %v201 = vld [vmem:[%s1 + $0xf0] sm:$0xff]
      %v202 = vld [vmem:[%s1 + $0xf8] sm:$0xff]
      %v203 = vld [vmem:[%s1 + $0x100] sm:$0xff]
      %v204 = vld [vmem:[%s1 + $0x108] sm:$0xff]
      %v205 = vld [vmem:[%s1 + $0x110] sm:$0xff]
      %v206 = vld [vmem:[%s1 + $0x118] sm:$0xff]
      %v207 = vld [vmem:[%s1 + $0x120] sm:$0xff]
      %v208 = vld [vmem:[%s1 + $0x128] sm:$0xff]
      %v209 = vld [vmem:[%s1 + $0x130] sm:$0xff]
      %v210 = vld [vmem:[%s1 + $0x138] sm:$0xff]
      %v211 = vld [vmem:[%s1 + $0x140] sm:$0xff]
      %v212 = vld [vmem:[%s1 + $0x148] sm:$0xff]
      %v213 = vld [vmem:[%s1 + $0x150] sm:$0xff]
      %v214 = vld [vmem:[%s1 + $0x158] sm:$0xff]
      %v215 = vld [vmem:[%s1 + $0x160] sm:$0xff]
      %v216 = vld [vmem:[%s1 + $0x168] sm:$0xff]
      %v217 = vld [vmem:[%s1 + $0x170] sm:$0xff]
      %v218 = vld [vmem:[%s1 + $0x178] sm:$0xff]
      %v219 = vld [vmem:[%s1 + $0x180] sm:$0xff]
      %v220 = vld [vmem:[%s1 + $0x188] sm:$0xff]
      %v221 = vld [vmem:[%s1 + $0x190] sm:$0xff]
      %v222 = vld [vmem:[%s1 + $0x198] sm:$0xff]
      %v223 = vld [vmem:[%s1 + $0x1a0] sm:$0xff]
      %v224 = vld [vmem:[%s1 + $0x1a8] sm:$0xff]
      %v225 = vld [vmem:[%s1 + $0x1b0] sm:$0xff]
      %v226 = vld [vmem:[%s1 + $0x1b8] sm:$0xff]
      %v227 = vld [vmem:[%s1 + $0x1c0] sm:$0xff]
      %v228 = vld [vmem:[%s1 + $0x1c8] sm:$0xff]
      %v229 = vld [vmem:[%s1 + $0x1d0] sm:$0xff]
      %v230 = vld [vmem:[%s1 + $0x1d8] sm:$0xff]
      %v231 = vld [vmem:[%s1 + $0x1e0] sm:$0xff]
      %v232 = vld [vmem:[%s1 + $0x1e8] sm:$0xff]
      %v233 = vld [vmem:[%s1 + $0x1f0] sm:$0xff]
      %v234 = vld [vmem:[%s1 + $0x1f8] sm:$0xff]
      %v235 = vld [vmem:[%s164] sm:$0x3e]
      %v236 = vld [vmem:[%s164 + $0x8] sm:$0x3e]
      %s237 = scalar_lea.vmem %s1, 512
      %v238 = vld [vmem:[%s237] sm:$0xff]
      %v239 = vld [vmem:[%s237 + $0x8] sm:$0xff]
      %v240 = vld [vmem:[%s237 + $0x10] sm:$0xff]
      %v241 = vld [vmem:[%s237 + $0x18] sm:$0xff]
      %v242 = vld [vmem:[%s237 + $0x20] sm:$0xff]
      %v243 = vld [vmem:[%s237 + $0x28] sm:$0xff]
      %v244 = vld [vmem:[%s237 + $0x30] sm:$0xff]
      %v245 = vld [vmem:[%s237 + $0x38] sm:$0xff]
      %v246 = vld [vmem:[%s237 + $0x40] sm:$0xff]
      %v247 = vld [vmem:[%s237 + $0x48] sm:$0xff]
      %v248 = vld [vmem:[%s237 + $0x50] sm:$0xff]
      %v249 = vld [vmem:[%s237 + $0x58] sm:$0xff]
      %v250 = vld [vmem:[%s237 + $0x60] sm:$0xff]
      %v251 = vld [vmem:[%s237 + $0x68] sm:$0xff]
      %v252 = vld [vmem:[%s237 + $0x70] sm:$0xff]
      %v253 = vld [vmem:[%s237 + $0x78] sm:$0xff]
      %v254 = vld [vmem:[%s237 + $0x80] sm:$0xff]
      %v255 = vld [vmem:[%s237 + $0x88] sm:$0xff]
      %v256 = vld [vmem:[%s237 + $0x90] sm:$0xff]
      %v257 = vld [vmem:[%s237 + $0x98] sm:$0xff]
      %v258 = vld [vmem:[%s237 + $0xa0] sm:$0xff]
      %v259 = vld [vmem:[%s237 + $0xa8] sm:$0xff]
      %v260 = vld [vmem:[%s237 + $0xb0] sm:$0xff]
      %v261 = vld [vmem:[%s237 + $0xb8] sm:$0xff]
      %v262 = vld [vmem:[%s237 + $0xc0] sm:$0xff]
      %v263 = vld [vmem:[%s237 + $0xc8] sm:$0xff]
      %v264 = vld [vmem:[%s237 + $0xd0] sm:$0xff]
      %v265 = vld [vmem:[%s237 + $0xd8] sm:$0xff]
      %v266 = vld [vmem:[%s237 + $0xe0] sm:$0xff]
      %v267 = vld [vmem:[%s237 + $0xe8] sm:$0xff]
      %v268 = vld [vmem:[%s237 + $0xf0] sm:$0xff]
      %v269 = vld [vmem:[%s237 + $0xf8] sm:$0xff]
      %v270 = vld [vmem:[%s237 + $0x100] sm:$0xff]
      %v271 = vld [vmem:[%s237 + $0x108] sm:$0xff]
      %v272 = vld [vmem:[%s237 + $0x110] sm:$0xff]
      %v273 = vld [vmem:[%s237 + $0x118] sm:$0xff]
      %v274 = vld [vmem:[%s237 + $0x120] sm:$0xff]
      %v275 = vld [vmem:[%s237 + $0x128] sm:$0xff]
      %v276 = vld [vmem:[%s237 + $0x130] sm:$0xff]
      %v277 = vld [vmem:[%s237 + $0x138] sm:$0xff]
      %v278 = vld [vmem:[%s237 + $0x140] sm:$0xff]
      %v279 = vld [vmem:[%s237 + $0x148] sm:$0xff]
      %v280 = vld [vmem:[%s237 + $0x150] sm:$0xff]
      %v281 = vld [vmem:[%s237 + $0x158] sm:$0xff]
      %v282 = vld [vmem:[%s237 + $0x160] sm:$0xff]
      %v283 = vld [vmem:[%s237 + $0x168] sm:$0xff]
      %v284 = vld [vmem:[%s237 + $0x170] sm:$0xff]
      %v285 = vld [vmem:[%s237 + $0x178] sm:$0xff]
      %v286 = vld [vmem:[%s237 + $0x180] sm:$0xff]
      %v287 = vld [vmem:[%s237 + $0x188] sm:$0xff]
      %v288 = vld [vmem:[%s237 + $0x190] sm:$0xff]
      %v289 = vld [vmem:[%s237 + $0x198] sm:$0xff]
      %v290 = vld [vmem:[%s237 + $0x1a0] sm:$0xff]
      %v291 = vld [vmem:[%s237 + $0x1a8] sm:$0xff]
      %v292 = vld [vmem:[%s237 + $0x1b0] sm:$0xff]
      %v293 = vld [vmem:[%s237 + $0x1b8] sm:$0xff]
      %v294 = vld [vmem:[%s237 + $0x1c0] sm:$0xff]
      %v295 = vld [vmem:[%s237 + $0x1c8] sm:$0xff]
      %v296 = vld [vmem:[%s237 + $0x1d0] sm:$0xff]
      %v297 = vld [vmem:[%s237 + $0x1d8] sm:$0xff]
      %v298 = vld [vmem:[%s237 + $0x1e0] sm:$0xff]
      %v299 = vld [vmem:[%s237 + $0x1e8] sm:$0xff]
      %v300 = vld [vmem:[%s237 + $0x1f0] sm:$0xff]
      %v301 = vld [vmem:[%s237 + $0x1f8] sm:$0xff]
      %v304 = vrot.slane %v235, 1
      %v305 = vrot.slane %v236, 1
      %308 = vmatprep.subr.mxu0 %v239
      %309 = vmatpush1.msra.mxu0 %v238
      %310 = vmatprep.subr.mxu0 %v241
      %311 = vmatpush1.msra.mxu0 %v240
      %312 = vmatprep.subr.mxu0 %v243
      %313 = vmatpush1.msra.mxu0 %v242
      %314 = vmatprep.subr.mxu0 %v245
      %315 = vmatpush1.msra.mxu0 %v244
      %316 = vmatprep.subr.mxu0 %v247
      %317 = vmatpush1.msra.mxu0 %v246
      %318 = vmatprep.subr.mxu0 %v249
      %319 = vmatpush1.msra.mxu0 %v248
      %320 = vmatprep.subr.mxu0 %v251
      %321 = vmatpush1.msra.mxu0 %v250
      %322 = vmatprep.subr.mxu0 %v253
      %323 = vmatpush1.msra.mxu0 %v252
      %324 = vmatprep.subr.mxu0 %v255
      %325 = vmatpush1.msra.mxu0 %v254
      %326 = vmatprep.subr.mxu0 %v257
      %327 = vmatpush1.msra.mxu0 %v256
      %328 = vmatprep.subr.mxu0 %v259
      %329 = vmatpush1.msra.mxu0 %v258
      %330 = vmatprep.subr.mxu0 %v261
      %331 = vmatpush1.msra.mxu0 %v260
      %332 = vmatprep.subr.mxu0 %v263
      %333 = vmatpush1.msra.mxu0 %v262
      %334 = vmatprep.subr.mxu0 %v265
      %335 = vmatpush1.msra.mxu0 %v264
      %336 = vmatprep.subr.mxu0 %v267
      %337 = vmatpush1.msra.mxu0 %v266
      %338 = vmatprep.subr.mxu0 %v269
      %339 = vmatpush1.msra.mxu0 %v268
      %340 = vmatprep.subr.mxu0 %v271
      %341 = vmatpush1.msra.mxu0 %v270
      %342 = vmatprep.subr.mxu0 %v273
      %343 = vmatpush1.msra.mxu0 %v272
      %344 = vmatprep.subr.mxu0 %v275
      %345 = vmatpush1.msra.mxu0 %v274
      %346 = vmatprep.subr.mxu0 %v277
      %347 = vmatpush1.msra.mxu0 %v276
      %348 = vmatprep.subr.mxu0 %v279
      %349 = vmatpush1.msra.mxu0 %v278
      %350 = vmatprep.subr.mxu0 %v281
      %351 = vmatpush1.msra.mxu0 %v280
      %352 = vmatprep.subr.mxu0 %v283
      %353 = vmatpush1.msra.mxu0 %v282
      %354 = vmatprep.subr.mxu0 %v285
      %355 = vmatpush1.msra.mxu0 %v284
      %356 = vmatprep.subr.mxu0 %v287
      %357 = vmatpush1.msra.mxu0 %v286
      %358 = vmatprep.subr.mxu0 %v289
      %359 = vmatpush1.msra.mxu0 %v288
      %360 = vmatprep.subr.mxu0 %v291
      %361 = vmatpush1.msra.mxu0 %v290
      %362 = vmatprep.subr.mxu0 %v293
      %363 = vmatpush1.msra.mxu0 %v292
      %364 = vmatprep.subr.mxu0 %v295
      %365 = vmatpush1.msra.mxu0 %v294
      %366 = vmatprep.subr.mxu0 %v297
      %367 = vmatpush1.msra.mxu0 %v296
      %368 = vmatprep.subr.mxu0 %v299
      %369 = vmatpush1.msra.mxu0 %v298
      %370 = vmatprep.subr.mxu0 %v301
      %371 = vmatpush1.msra.mxu0 %v300
      %372 = vmatprep.mubr.f32.mxu0 %v305
      %373 = vmatmul.mubr.f32.gmra.mrb[0].mxu0 %v304
      %v374 = vpop.f32.mrb[0].mxu0
      %v375 = vadd.f32 0.0, %v374
      %v376 = vpop.f32.mrb[0].mxu0
      %v377 = vadd.f32 0.0, %v376
      %378 = vdwg.mxu0
      %379 = vmatprep.subr.mxu0 %v172
      %380 = vmatpush1.msra.mxu0 %v171
      %381 = vmatprep.subr.mxu0 %v174
      %382 = vmatpush1.msra.mxu0 %v173
      %383 = vmatprep.subr.mxu0 %v176
      %384 = vmatpush1.msra.mxu0 %v175
      %385 = vmatprep.subr.mxu0 %v178
      %386 = vmatpush1.msra.mxu0 %v177
      %387 = vmatprep.subr.mxu0 %v180
      %388 = vmatpush1.msra.mxu0 %v179
      %389 = vmatprep.subr.mxu0 %v182
      %390 = vmatpush1.msra.mxu0 %v181
      %391 = vmatprep.subr.mxu0 %v184
      %392 = vmatpush1.msra.mxu0 %v183
      %393 = vmatprep.subr.mxu0 %v186
      %394 = vmatpush1.msra.mxu0 %v185
      %395 = vmatprep.subr.mxu0 %v188
      %396 = vmatpush1.msra.mxu0 %v187
      %397 = vmatprep.subr.mxu0 %v190
      %398 = vmatpush1.msra.mxu0 %v189
      %399 = vmatprep.subr.mxu0 %v192
      %400 = vmatpush1.msra.mxu0 %v191
      %401 = vmatprep.subr.mxu0 %v194
      %402 = vmatpush1.msra.mxu0 %v193
      %403 = vmatprep.subr.mxu0 %v196
      %404 = vmatpush1.msra.mxu0 %v195
      %405 = vmatprep.subr.mxu0 %v198
      %406 = vmatpush1.msra.mxu0 %v197
      %407 = vmatprep.subr.mxu0 %v200
      %408 = vmatpush1.msra.mxu0 %v199
      %409 = vmatprep.subr.mxu0 %v202
      %410 = vmatpush1.msra.mxu0 %v201
      %411 = vmatprep.subr.mxu0 %v204
      %412 = vmatpush1.msra.mxu0 %v203
      %413 = vmatprep.subr.mxu0 %v206
      %414 = vmatpush1.msra.mxu0 %v205
      %415 = vmatprep.subr.mxu0 %v208
      %416 = vmatpush1.msra.mxu0 %v207
      %417 = vmatprep.subr.mxu0 %v210
      %418 = vmatpush1.msra.mxu0 %v209
      %419 = vmatprep.subr.mxu0 %v212
      %420 = vmatpush1.msra.mxu0 %v211
      %421 = vmatprep.subr.mxu0 %v214
      %422 = vmatpush1.msra.mxu0 %v213
      %423 = vmatprep.subr.mxu0 %v216
      %424 = vmatpush1.msra.mxu0 %v215
      %425 = vmatprep.subr.mxu0 %v218
      %426 = vmatpush1.msra.mxu0 %v217
      %427 = vmatprep.subr.mxu0 %v220
      %428 = vmatpush1.msra.mxu0 %v219
      %429 = vmatprep.subr.mxu0 %v222
      %430 = vmatpush1.msra.mxu0 %v221
      %431 = vmatprep.subr.mxu0 %v224
      %432 = vmatpush1.msra.mxu0 %v223
      %433 = vmatprep.subr.mxu0 %v226
      %434 = vmatpush1.msra.mxu0 %v225
      %435 = vmatprep.subr.mxu0 %v228
      %436 = vmatpush1.msra.mxu0 %v227
      %437 = vmatprep.subr.mxu0 %v230
      %438 = vmatpush1.msra.mxu0 %v229
      %439 = vmatprep.subr.mxu0 %v232
      %440 = vmatpush1.msra.mxu0 %v231
      %441 = vmatprep.subr.mxu0 %v234
      %442 = vmatpush1.msra.mxu0 %v233
      %443 = vmatprep.mubr.f32.mxu0 %v170
      %444 = vmatmul.mubr.f32.gmra.mrb[0].mxu0 %v169
      %v445 = vpop.f32.mrb[0].mxu0
      %v446 = vadd.f32 %v375, %v445
      %v447 = vpop.f32.mrb[0].mxu0
      %v448 = vadd.f32 %v377, %v447
      %449 = vdwg.mxu0
      %v450 = vld [vmem:[%s164] sm:$0xf8]
      %v451 = vld [vmem:[%s164 + $0x8] sm:$0xf8]
      %s452 = scalar_lea.vmem %s1, 1024
      %v453 = vld [vmem:[%s452] sm:$0xff]
      %v454 = vld [vmem:[%s452 + $0x8] sm:$0xff]
      %v455 = vld [vmem:[%s452 + $0x10] sm:$0xff]
      %v456 = vld [vmem:[%s452 + $0x18] sm:$0xff]
      %v457 = vld [vmem:[%s452 + $0x20] sm:$0xff]
      %v458 = vld [vmem:[%s452 + $0x28] sm:$0xff]
      %v459 = vld [vmem:[%s452 + $0x30] sm:$0xff]
      %v460 = vld [vmem:[%s452 + $0x38] sm:$0xff]
      %v461 = vld [vmem:[%s452 + $0x40] sm:$0xff]
      %v462 = vld [vmem:[%s452 + $0x48] sm:$0xff]
      %v463 = vld [vmem:[%s452 + $0x50] sm:$0xff]
      %v464 = vld [vmem:[%s452 + $0x58] sm:$0xff]
      %v465 = vld [vmem:[%s452 + $0x60] sm:$0xff]
      %v466 = vld [vmem:[%s452 + $0x68] sm:$0xff]
      %v467 = vld [vmem:[%s452 + $0x70] sm:$0xff]
      %v468 = vld [vmem:[%s452 + $0x78] sm:$0xff]
      %v469 = vld [vmem:[%s452 + $0x80] sm:$0xff]
      %v470 = vld [vmem:[%s452 + $0x88] sm:$0xff]
      %v471 = vld [vmem:[%s452 + $0x90] sm:$0xff]
      %v472 = vld [vmem:[%s452 + $0x98] sm:$0xff]
      %v473 = vld [vmem:[%s452 + $0xa0] sm:$0xff]
      %v474 = vld [vmem:[%s452 + $0xa8] sm:$0xff]
      %v475 = vld [vmem:[%s452 + $0xb0] sm:$0xff]
      %v476 = vld [vmem:[%s452 + $0xb8] sm:$0xff]
      %v477 = vld [vmem:[%s452 + $0xc0] sm:$0xff]
      %v478 = vld [vmem:[%s452 + $0xc8] sm:$0xff]
      %v479 = vld [vmem:[%s452 + $0xd0] sm:$0xff]
      %v480 = vld [vmem:[%s452 + $0xd8] sm:$0xff]
      %v481 = vld [vmem:[%s452 + $0xe0] sm:$0xff]
      %v482 = vld [vmem:[%s452 + $0xe8] sm:$0xff]
      %v483 = vld [vmem:[%s452 + $0xf0] sm:$0xff]
      %v484 = vld [vmem:[%s452 + $0xf8] sm:$0xff]
      %v485 = vld [vmem:[%s452 + $0x100] sm:$0xff]
      %v486 = vld [vmem:[%s452 + $0x108] sm:$0xff]
      %v487 = vld [vmem:[%s452 + $0x110] sm:$0xff]
      %v488 = vld [vmem:[%s452 + $0x118] sm:$0xff]
      %v489 = vld [vmem:[%s452 + $0x120] sm:$0xff]
      %v490 = vld [vmem:[%s452 + $0x128] sm:$0xff]
      %v491 = vld [vmem:[%s452 + $0x130] sm:$0xff]
      %v492 = vld [vmem:[%s452 + $0x138] sm:$0xff]
      %v493 = vld [vmem:[%s452 + $0x140] sm:$0xff]
      %v494 = vld [vmem:[%s452 + $0x148] sm:$0xff]
      %v495 = vld [vmem:[%s452 + $0x150] sm:$0xff]
      %v496 = vld [vmem:[%s452 + $0x158] sm:$0xff]
      %v497 = vld [vmem:[%s452 + $0x160] sm:$0xff]
      %v498 = vld [vmem:[%s452 + $0x168] sm:$0xff]
      %v499 = vld [vmem:[%s452 + $0x170] sm:$0xff]
      %v500 = vld [vmem:[%s452 + $0x178] sm:$0xff]
      %v501 = vld [vmem:[%s452 + $0x180] sm:$0xff]
      %v502 = vld [vmem:[%s452 + $0x188] sm:$0xff]
      %v503 = vld [vmem:[%s452 + $0x190] sm:$0xff]
      %v504 = vld [vmem:[%s452 + $0x198] sm:$0xff]
      %v505 = vld [vmem:[%s452 + $0x1a0] sm:$0xff]
      %v506 = vld [vmem:[%s452 + $0x1a8] sm:$0xff]
      %v507 = vld [vmem:[%s452 + $0x1b0] sm:$0xff]
      %v508 = vld [vmem:[%s452 + $0x1b8] sm:$0xff]
      %v509 = vld [vmem:[%s452 + $0x1c0] sm:$0xff]
      %v510 = vld [vmem:[%s452 + $0x1c8] sm:$0xff]
      %v511 = vld [vmem:[%s452 + $0x1d0] sm:$0xff]
      %v512 = vld [vmem:[%s452 + $0x1d8] sm:$0xff]
      %v513 = vld [vmem:[%s452 + $0x1e0] sm:$0xff]
      %v514 = vld [vmem:[%s452 + $0x1e8] sm:$0xff]
      %v515 = vld [vmem:[%s452 + $0x1f0] sm:$0xff]
      %v516 = vld [vmem:[%s452 + $0x1f8] sm:$0xff]
      %v519 = vrot.slane %v450, 3
      %v520 = vrot.slane %v451, 3
      %523 = vmatprep.subr.mxu0 %v454
      %524 = vmatpush1.msra.mxu0 %v453
      %525 = vmatprep.subr.mxu0 %v456
      %526 = vmatpush1.msra.mxu0 %v455
      %527 = vmatprep.subr.mxu0 %v458
      %528 = vmatpush1.msra.mxu0 %v457
      %529 = vmatprep.subr.mxu0 %v460
      %530 = vmatpush1.msra.mxu0 %v459
      %531 = vmatprep.subr.mxu0 %v462
      %532 = vmatpush1.msra.mxu0 %v461
      %533 = vmatprep.subr.mxu0 %v464
      %534 = vmatpush1.msra.mxu0 %v463
      %535 = vmatprep.subr.mxu0 %v466
      %536 = vmatpush1.msra.mxu0 %v465
      %537 = vmatprep.subr.mxu0 %v468
      %538 = vmatpush1.msra.mxu0 %v467
      %539 = vmatprep.subr.mxu0 %v470
      %540 = vmatpush1.msra.mxu0 %v469
      %541 = vmatprep.subr.mxu0 %v472
      %542 = vmatpush1.msra.mxu0 %v471
      %543 = vmatprep.subr.mxu0 %v474
      %544 = vmatpush1.msra.mxu0 %v473
      %545 = vmatprep.subr.mxu0 %v476
      %546 = vmatpush1.msra.mxu0 %v475
      %547 = vmatprep.subr.mxu0 %v478
      %548 = vmatpush1.msra.mxu0 %v477
      %549 = vmatprep.subr.mxu0 %v480
      %550 = vmatpush1.msra.mxu0 %v479
      %551 = vmatprep.subr.mxu0 %v482
      %552 = vmatpush1.msra.mxu0 %v481
      %553 = vmatprep.subr.mxu0 %v484
      %554 = vmatpush1.msra.mxu0 %v483
      %555 = vmatprep.subr.mxu0 %v486
      %556 = vmatpush1.msra.mxu0 %v485
      %557 = vmatprep.subr.mxu0 %v488
      %558 = vmatpush1.msra.mxu0 %v487
      %559 = vmatprep.subr.mxu0 %v490
      %560 = vmatpush1.msra.mxu0 %v489
      %561 = vmatprep.subr.mxu0 %v492
      %562 = vmatpush1.msra.mxu0 %v491
      %563 = vmatprep.subr.mxu0 %v494
      %564 = vmatpush1.msra.mxu0 %v493
      %565 = vmatprep.subr.mxu0 %v496
      %566 = vmatpush1.msra.mxu0 %v495
      %567 = vmatprep.subr.mxu0 %v498
      %568 = vmatpush1.msra.mxu0 %v497
      %569 = vmatprep.subr.mxu0 %v500
      %570 = vmatpush1.msra.mxu0 %v499
      %571 = vmatprep.subr.mxu0 %v502
      %572 = vmatpush1.msra.mxu0 %v501
      %573 = vmatprep.subr.mxu0 %v504
      %574 = vmatpush1.msra.mxu0 %v503
      %575 = vmatprep.subr.mxu0 %v506
      %576 = vmatpush1.msra.mxu0 %v505
      %577 = vmatprep.subr.mxu0 %v508
      %578 = vmatpush1.msra.mxu0 %v507
      %579 = vmatprep.subr.mxu0 %v510
      %580 = vmatpush1.msra.mxu0 %v509
      %581 = vmatprep.subr.mxu0 %v512
      %582 = vmatpush1.msra.mxu0 %v511
      %583 = vmatprep.subr.mxu0 %v514
      %584 = vmatpush1.msra.mxu0 %v513
      %585 = vmatprep.subr.mxu0 %v516
      %586 = vmatpush1.msra.mxu0 %v515
      %587 = vmatprep.mubr.f32.mxu0 %v520
      %588 = vmatmul.mubr.f32.gmra.mrb[0].mxu0 %v519
      %v589 = vpop.f32.mrb[0].mxu0
      %v590 = vadd.f32 0.0, %v589
      %v591 = vpop.f32.mrb[0].mxu0
      %v592 = vadd.f32 0.0, %v591
      %593 = vdwg.mxu0
      %v594 = vadd.f32 %v446, %v590
      %v595 = vadd.f32 %v448, %v592
      %v596 = vld [vmem:[%s164] sm:$0xf0]
      %v597 = vld [vmem:[%s164 + $0x8] sm:$0xf0]
      %v598 = vld [vmem:[%s164 + $0x10] sm:$0x1]
      %v599 = vld [vmem:[%s164 + $0x18] sm:$0x1]
      %s600 = scalar_lea.vmem %s1, 1536
      %v601 = vld [vmem:[%s600] sm:$0xff]
      %v602 = vld [vmem:[%s600 + $0x8] sm:$0xff]
      %v603 = vld [vmem:[%s600 + $0x10] sm:$0xff]
      %v604 = vld [vmem:[%s600 + $0x18] sm:$0xff]
      %v605 = vld [vmem:[%s600 + $0x20] sm:$0xff]
      %v606 = vld [vmem:[%s600 + $0x28] sm:$0xff]
      %v607 = vld [vmem:[%s600 + $0x30] sm:$0xff]
      %v608 = vld [vmem:[%s600 + $0x38] sm:$0xff]
      %v609 = vld [vmem:[%s600 + $0x40] sm:$0xff]
      %v610 = vld [vmem:[%s600 + $0x48] sm:$0xff]
      %v611 = vld [vmem:[%s600 + $0x50] sm:$0xff]
      %v612 = vld [vmem:[%s600 + $0x58] sm:$0xff]
      %v613 = vld [vmem:[%s600 + $0x60] sm:$0xff]
      %v614 = vld [vmem:[%s600 + $0x68] sm:$0xff]
      %v615 = vld [vmem:[%s600 + $0x70] sm:$0xff]
      %v616 = vld [vmem:[%s600 + $0x78] sm:$0xff]
      %v617 = vld [vmem:[%s600 + $0x80] sm:$0xff]
      %v618 = vld [vmem:[%s600 + $0x88] sm:$0xff]
      %v619 = vld [vmem:[%s600 + $0x90] sm:$0xff]
      %v620 = vld [vmem:[%s600 + $0x98] sm:$0xff]
      %v621 = vld [vmem:[%s600 + $0xa0] sm:$0xff]
      %v622 = vld [vmem:[%s600 + $0xa8] sm:$0xff]
      %v623 = vld [vmem:[%s600 + $0xb0] sm:$0xff]
      %v624 = vld [vmem:[%s600 + $0xb8] sm:$0xff]
      %v625 = vld [vmem:[%s600 + $0xc0] sm:$0xff]
      %v626 = vld [vmem:[%s600 + $0xc8] sm:$0xff]
      %v627 = vld [vmem:[%s600 + $0xd0] sm:$0xff]
      %v628 = vld [vmem:[%s600 + $0xd8] sm:$0xff]
      %v629 = vld [vmem:[%s600 + $0xe0] sm:$0xff]
      %v630 = vld [vmem:[%s600 + $0xe8] sm:$0xff]
      %v631 = vld [vmem:[%s600 + $0xf0] sm:$0xff]
      %v632 = vld [vmem:[%s600 + $0xf8] sm:$0xff]
      %v633 = vld [vmem:[%s600 + $0x100] sm:$0xff]
      %v634 = vld [vmem:[%s600 + $0x108] sm:$0xff]
      %v635 = vld [vmem:[%s600 + $0x110] sm:$0xff]
      %v636 = vld [vmem:[%s600 + $0x118] sm:$0xff]
      %v637 = vld [vmem:[%s600 + $0x120] sm:$0xff]
      %v638 = vld [vmem:[%s600 + $0x128] sm:$0xff]
      %v639 = vld [vmem:[%s600 + $0x130] sm:$0xff]
      %v640 = vld [vmem:[%s600 + $0x138] sm:$0xff]
      %v641 = vld [vmem:[%s600 + $0x140] sm:$0xff]
      %v642 = vld [vmem:[%s600 + $0x148] sm:$0xff]
      %v643 = vld [vmem:[%s600 + $0x150] sm:$0xff]
      %v644 = vld [vmem:[%s600 + $0x158] sm:$0xff]
      %v645 = vld [vmem:[%s600 + $0x160] sm:$0xff]
      %v646 = vld [vmem:[%s600 + $0x168] sm:$0xff]
      %v647 = vld [vmem:[%s600 + $0x170] sm:$0xff]
      %v648 = vld [vmem:[%s600 + $0x178] sm:$0xff]
      %v649 = vld [vmem:[%s600 + $0x180] sm:$0xff]
      %v650 = vld [vmem:[%s600 + $0x188] sm:$0xff]
      %v651 = vld [vmem:[%s600 + $0x190] sm:$0xff]
      %v652 = vld [vmem:[%s600 + $0x198] sm:$0xff]
      %v653 = vld [vmem:[%s600 + $0x1a0] sm:$0xff]
      %v654 = vld [vmem:[%s600 + $0x1a8] sm:$0xff]
      %v655 = vld [vmem:[%s600 + $0x1b0] sm:$0xff]
      %v656 = vld [vmem:[%s600 + $0x1b8] sm:$0xff]
      %v657 = vld [vmem:[%s600 + $0x1c0] sm:$0xff]
      %v658 = vld [vmem:[%s600 + $0x1c8] sm:$0xff]
      %v659 = vld [vmem:[%s600 + $0x1d0] sm:$0xff]
      %v660 = vld [vmem:[%s600 + $0x1d8] sm:$0xff]
      %v661 = vld [vmem:[%s600 + $0x1e0] sm:$0xff]
      %v662 = vld [vmem:[%s600 + $0x1e8] sm:$0xff]
      %v663 = vld [vmem:[%s600 + $0x1f0] sm:$0xff]
      %v664 = vld [vmem:[%s600 + $0x1f8] sm:$0xff]
      %vm669 = vcmask 1043456
      %v670 = vrot.slane %v596, 4
      %v671 = vrot.slane %v598, 4
      %v672 = vsel %vm669, %v670, %v671
      %v673 = vrot.slane %v597, 4
      %v674 = vrot.slane %v599, 4
      %v675 = vsel %vm669, %v673, %v674
      %678 = vmatprep.subr.mxu0 %v602
      %679 = vmatpush1.msra.mxu0 %v601
      %680 = vmatprep.subr.mxu0 %v604
      %681 = vmatpush1.msra.mxu0 %v603
      %682 = vmatprep.subr.mxu0 %v606
      %683 = vmatpush1.msra.mxu0 %v605
      %684 = vmatprep.subr.mxu0 %v608
      %685 = vmatpush1.msra.mxu0 %v607
      %686 = vmatprep.subr.mxu0 %v610
      %687 = vmatpush1.msra.mxu0 %v609
      %688 = vmatprep.subr.mxu0 %v612
      %689 = vmatpush1.msra.mxu0 %v611
      %690 = vmatprep.subr.mxu0 %v614
      %691 = vmatpush1.msra.mxu0 %v613
      %692 = vmatprep.subr.mxu0 %v616
      %693 = vmatpush1.msra.mxu0 %v615
      %694 = vmatprep.subr.mxu0 %v618
      %695 = vmatpush1.msra.mxu0 %v617
      %696 = vmatprep.subr.mxu0 %v620
      %697 = vmatpush1.msra.mxu0 %v619
      %698 = vmatprep.subr.mxu0 %v622
      %699 = vmatpush1.msra.mxu0 %v621
      %700 = vmatprep.subr.mxu0 %v624
      %701 = vmatpush1.msra.mxu0 %v623
      %702 = vmatprep.subr.mxu0 %v626
      %703 = vmatpush1.msra.mxu0 %v625
      %704 = vmatprep.subr.mxu0 %v628
      %705 = vmatpush1.msra.mxu0 %v627
      %706 = vmatprep.subr.mxu0 %v630
      %707 = vmatpush1.msra.mxu0 %v629
      %708 = vmatprep.subr.mxu0 %v632
      %709 = vmatpush1.msra.mxu0 %v631
      %710 = vmatprep.subr.mxu0 %v634
      %711 = vmatpush1.msra.mxu0 %v633
      %712 = vmatprep.subr.mxu0 %v636
      %713 = vmatpush1.msra.mxu0 %v635
      %714 = vmatprep.subr.mxu0 %v638
      %715 = vmatpush1.msra.mxu0 %v637
      %716 = vmatprep.subr.mxu0 %v640
      %717 = vmatpush1.msra.mxu0 %v639
      %718 = vmatprep.subr.mxu0 %v642
      %719 = vmatpush1.msra.mxu0 %v641
      %720 = vmatprep.subr.mxu0 %v644
      %721 = vmatpush1.msra.mxu0 %v643
      %722 = vmatprep.subr.mxu0 %v646
      %723 = vmatpush1.msra.mxu0 %v645
      %724 = vmatprep.subr.mxu0 %v648
      %725 = vmatpush1.msra.mxu0 %v647
      %726 = vmatprep.subr.mxu0 %v650
      %727 = vmatpush1.msra.mxu0 %v649
      %728 = vmatprep.subr.mxu0 %v652
      %729 = vmatpush1.msra.mxu0 %v651
      %730 = vmatprep.subr.mxu0 %v654
      %731 = vmatpush1.msra.mxu0 %v653
      %732 = vmatprep.subr.mxu0 %v656
      %733 = vmatpush1.msra.mxu0 %v655
      %734 = vmatprep.subr.mxu0 %v658
      %735 = vmatpush1.msra.mxu0 %v657
      %736 = vmatprep.subr.mxu0 %v660
      %737 = vmatpush1.msra.mxu0 %v659
      %738 = vmatprep.subr.mxu0 %v662
      %739 = vmatpush1.msra.mxu0 %v661
      %740 = vmatprep.subr.mxu0 %v664
      %741 = vmatpush1.msra.mxu0 %v663
      %742 = vmatprep.mubr.f32.mxu0 %v675
      %743 = vmatmul.mubr.f32.gmra.mrb[0].mxu0 %v672
      %v744 = vpop.f32.mrb[0].mxu0
      %v745 = vadd.f32 0.0, %v744
      %v746 = vpop.f32.mrb[0].mxu0
      %v747 = vadd.f32 0.0, %v746
      %748 = vdwg.mxu0
      %v749 = vadd.f32 %v594, %v745
      %v750 = vadd.f32 %v595, %v747
      %v751 = vmax.f32 %v749, %v750
      %v752 = vld [vmem:[%s2] sm:$0x1]
      %v754 = vlaneseq
      %v755 = vshrl.u32 %v754, 7
      %v756 = vsub.s32 0, %v755
      %v757 = vrot.slane %v752, %v756
      %v759 = vadd.f32 %v751, %v757
      %v760 = vmax.f32 %v759, 0.0
      %761 = vst [vmem:[%s168] sm:$0x1f] %v760
      %p762 = scmp.lt.s32.totalorder %s14, 1
      %s763 = scalar_select %p762, %s14, 1
      %s764 = smul.addr %s763, 8
      %s765 = scalar_lea.vmem %s3, %s764
      // Predicated region
      $region33: #{embed_net_forward.7} parent=31 // pred_check
        %p766 = pneg %p100
      $region34: #{embed_net_forward.7} parent=31 // pred_check_branch
        %768 = sbr.rel (%p766) target = $region36
      $region35: #{embed_net_forward.7} parent=31 // pred_region
        _
      $region36: #{embed_net_forward.7} parent=31 // pred_fallthru
        _
    $region32: #{embed_net_forward.7} parent=5 // pred_fallthru
      _
    %p769 = scmp.le.s32.totalorder 2, %s9
    // Predicated region
    $region37: #{embed_net_forward.7} parent=5 // pred_check
      %p770 = pneg %p769
    $region38: #{embed_net_forward.7} parent=5 // pred_check_branch
      %772 = sbr.rel (%p770) target = $region40
    $region39: #{embed_net_forward.7} parent=5 // pred_region
      %s773 = ssub.s32 %s9, 2
      // Predicated region
      $region41: #{embed_net_forward.7} parent=39 // pred_check
        %p774 = pneg %p106
      $region42: #{embed_net_forward.7} parent=39 // pred_check_branch
        %776 = sbr.rel (%p774) target = $region44
      $region43: #{embed_net_forward.7} parent=39 // pred_region
        %p777 = scmp.lt.s32.totalorder %s15, 1
        %s778 = scalar_select %p777, %s15, 1
        %s779 = smul.addr %s778, 8
        %s780 = scalar_lea.vmem %s3, %s779
      $region44: #{embed_net_forward.7} parent=39 // pred_fallthru
        _
    $region40: #{embed_net_forward.7} parent=5 // pred_fallthru
      _
  $region6: #{embed_net_forward.7} parent=0 // loop_footer
    %s13 = sadd.s32 1, %s9
  $region7: #{embed_net_forward.7} parent=0 // loop_footer_branch
    %8 = sbr.rel target = $region3
  $region8: #{embed_net_forward.7} parent=0 // loop_exit
    _

</llo_original>
